<compile_context>
chip_gen: v7x
topology: tpu7x:2x2x1
jax: 0.10.0
libtpu: 0.0.40
codegen_flags: <defaults>
</compile_context>

<pallas_src>
import jax
import jax.numpy as jnp
import numpy as np
from jax.experimental import pallas as pl
from jax.experimental.pallas import tpu as pltpu

# ----------------------------------------------------------------------------- config
OBS_DIM, ACTION_DIM = 16, 8
HIDDEN, LATENT = 32, 32        # xu_enc/x_dec hidden dim ; rec_latent_dim (LSTM H)
NUM_LAYERS = 2                 # rec_num_layers (LSTM); slab layout assumes exactly 2
B, T = 8, 8                    # batch, unroll length (us.size(0))

H = LATENT
HID = HIDDEN

# ----------------------------------------------------------------------------- slab layout
# All folded weights live in ONE f32 (ROWS, 128) slab -> a single ~144 KB input DMA.
# Every block starts at lane 0 and at a sublane offset that is a multiple of 8.
R_E0X = 0                                   # e0x                (OBS, HID)
R_E0U = R_E0X + OBS_DIM                     # e0u                (A,   HID)
R_E1 = R_E0U + ((ACTION_DIM + 7) // 8) * 8  # e1                 (HID, HID)
R_D0 = R_E1 + HIDDEN                        # d0                 (H,   HID)
R_D1 = R_D0 + LATENT                        # d1                 (HID, HID)
R_D2 = R_D1 + HIDDEN                        # [d2 | d2@e0x]      (HID, OBS+HID)
R_L0 = R_D2 + HIDDEN                        # [e2@wih0 ; whh0]   (HID+H, 4H) gates [i,f,o,g]
R_L1 = R_L0 + (HIDDEN + LATENT)             # [wih1 ; whh1]      (2H,    4H) gates [i,f,o,g]
R_BIAS = R_L1 + 2 * LATENT                  # 8 bias rows (see prepare_params)
ROWS = R_BIAS + 8
assert all(r % 8 == 0 for r in (R_E0X, R_E0U, R_E1, R_D0, R_D1, R_D2, R_L0, R_L1, R_BIAS))
assert 4 * LATENT <= 128 and OBS_DIM + HIDDEN <= 128


# ----------------------------------------------------------------------------- kernel
def seqnn_kernel(x_ref, us_ref, slab_ref, out_ref):
    f32, bf16 = jnp.float32, jnp.bfloat16
    B_, OBS = x_ref.shape
    T_ = us_ref.shape[0] // B_

    # ---- weights: loaded + cast to bf16 ONCE (MXU operands), prologue only
    e0x = slab_ref[R_E0X:R_E0X + OBS, :HID].astype(bf16)
    e0u = slab_ref[R_E0U:R_E0U + ACTION_DIM, :HID].astype(bf16)
    e1 = slab_ref[R_E1:R_E1 + HID, :HID].astype(bf16)
    d0 = slab_ref[R_D0:R_D0 + H, :HID].astype(bf16)
    d1 = slab_ref[R_D1:R_D1 + HID, :HID].astype(bf16)
    d2c = slab_ref[R_D2:R_D2 + HID, :OBS + HID].astype(bf16)
    lcat = [slab_ref[R_L0:R_L0 + HID + H, :4 * H].astype(bf16),
            slab_ref[R_L1:R_L1 + 2 * H, :4 * H].astype(bf16)]

    # ---- biases stay f32; broadcasts hoisted out of the time loop (no CSE inside)
    def brow(r, n, rows=B_):
        return jnp.broadcast_to(slab_ref[r:r + 1, :n], (rows, n))

    eb0 = brow(R_BIAS + 0, HID, rows=T_ * B_)
    eb1 = brow(R_BIAS + 1, HID)
    db0 = brow(R_BIAS + 2, HID)
    db1 = brow(R_BIAS + 3, HID)
    db2 = brow(R_BIAS + 4, OBS)
    db2e = brow(R_BIAS + 5, HID)
    bl = [brow(R_BIAS + 6, 4 * H), brow(R_BIAS + 7, 4 * H)]

    # ---- prologue: action projection for ALL steps in ONE MXU call (off the serial
    #      chain) + initial carried projection xe0 = x @ e0x (f32 state thereafter).
    u_proj = jnp.dot(us_ref[...].astype(bf16), e0u, preferred_element_type=f32) + eb0
    xt = x_ref[...].astype(f32)
    xe = jnp.dot(xt.astype(bf16), e0x, preferred_element_type=f32)

    h = [jnp.zeros((B_, H), f32) for _ in range(NUM_LAYERS)]   # init_hidden_state: zeros
    c = [jnp.zeros((B_, H), f32) for _ in range(NUM_LAYERS)]

    # ---- sequential rollout, fully unrolled (T small & static); 6 chained matmuls/step
    for t in range(T_):
        # xu_enc layer 0 needs NO matmul: xe (= xt @ e0x) is carried, action path is
        # precomputed; encoder output layer (e2/eb2) is folded into the LSTM weights.
        z = jnp.maximum(xe + u_proj[t * B_:(t + 1) * B_, :], 0.0)
        z = jnp.maximum(jnp.dot(z.astype(bf16), e1, preferred_element_type=f32) + eb1, 0.0)

        # stacked LSTM: fused [input ; hidden] matmul per layer, gate order [i, f, o, g]
        inp = z
        for l in range(NUM_LAYERS):
            cat = jnp.concatenate([inp.astype(bf16), h[l].astype(bf16)], axis=-1)
            gates = jnp.dot(cat, lcat[l], preferred_element_type=f32) + bl[l]
            sg = jax.nn.sigmoid(gates[:, :3 * H])      # one EUP pass over i|f|o lanes
            gg = jnp.tanh(gates[:, 3 * H:])
            c[l] = sg[:, H:2 * H] * c[l] + sg[:, :H] * gg
            h[l] = sg[:, 2 * H:3 * H] * jnp.tanh(c[l])
            inp = h[l]

        # x_dec MLP; final layer widened to [d2 | d2@e0x] so one matmul yields both
        # dx (residual/output) and dxe (the xe increment).
        d = jnp.maximum(jnp.dot(inp.astype(bf16), d0, preferred_element_type=f32) + db0, 0.0)
        d = jnp.maximum(jnp.dot(d.astype(bf16), d1, preferred_element_type=f32) + db1, 0.0)
        dd = jnp.dot(d.astype(bf16), d2c, preferred_element_type=f32)       # (B, OBS+HID)
        xt = xt + dd[:, :OBS] + db2
        xe = xe + dd[:, OBS:] + db2e

        # lane-dense per-step store into the resident (B, T*OBS) output tile
        out_ref[:, t * OBS:(t + 1) * OBS] = xt.astype(out_ref.dtype)


# ----------------------------------------------------------------------------- wrapper
@jax.jit
def seqnn_forward(x, us, slab):
    """x: (B, obs) f32; us: (T, B, act) f32; slab: packed weights -> (T, B, obs) f32."""
    B_, OBS = x.shape
    T_, _, A = us.shape
    us2d = us.reshape(T_ * B_, A)                 # time-major flatten (contiguous)

    out = pl.pallas_call(                         # no grid: single invocation
        seqnn_kernel,
        out_shape=jax.ShapeDtypeStruct((B_, T_ * OBS), jnp.float32),
        in_specs=[pl.BlockSpec(memory_space=pltpu.MemorySpace.VMEM) for _ in range(3)],
        out_specs=pl.BlockSpec(memory_space=pltpu.MemorySpace.VMEM),
    )(x, us2d, slab)

    # lane-dense (B, T*OBS) slab -> (T, B, OBS); tiny layout plumbing outside the kernel
    return jnp.transpose(out.reshape(B_, T_, OBS), (1, 0, 2))


# ----------------------------------------------------------------------------- param prep
def prepare_params(p):
    """One-time wrapper-side folds + packing (pure numpy, hoisted off the per-call path).

    Folds: gate columns [i,f,g,o]->[i,f,o,g]; e2/eb2 folded into LSTM layer-0
    weights/bias; per-layer [wih ; whh] K-stacked; decoder last layer widened to
    [d2 | d2@e0x]; LSTM input/hidden biases pre-summed; all packed into one slab.
    """
    assert NUM_LAYERS == 2  # TODO(synk): generalise slab layout for rec_num_layers != 2
    p = {k: np.asarray(v, np.float32) for k, v in p.items()}
    Hh = LATENT
    perm = np.concatenate([np.arange(0, Hh), np.arange(Hh, 2 * Hh),
                           np.arange(3 * Hh, 4 * Hh), np.arange(2 * Hh, 3 * Hh)])
    wih_r = p["wih"][:, :, perm]                       # (L, H, 4H)
    whh_r = p["whh"][:, :, perm]                       # (L, H, 4H)
    b_r = (p["bih"] + p["bhh"])[:, :, perm]            # (L, 1, 4H)

    w0 = p["e2"] @ wih_r[0]                            # (HID, 4H) encoder-out folded
    b0 = p["eb2"] @ wih_r[0] + b_r[0]                  # (1, 4H)
    l0 = np.concatenate([w0, whh_r[0]], axis=0)        # (HID+H, 4H)
    l1 = np.concatenate([wih_r[1], whh_r[1]], axis=0)  # (2H, 4H)

    d2c = np.concatenate([p["d2"], p["d2"] @ p["e0x"]], axis=1)   # (HID, OBS+HID)
    db2e = p["db2"] @ p["e0x"]                                    # (1, HID)

    slab = np.zeros((ROWS, 128), np.float32)

    def put(r, a):
        slab[r:r + a.shape[0], :a.shape[1]] = a

    put(R_E0X, p["e0x"]); put(R_E0U, p["e0u"]); put(R_E1, p["e1"])
    put(R_D0, p["d0"]);   put(R_D1, p["d1"]);   put(R_D2, d2c)
    put(R_L0, l0);        put(R_L1, l1)
    put(R_BIAS + 0, p["eb0"]); put(R_BIAS + 1, p["eb1"])
    put(R_BIAS + 2, p["db0"]); put(R_BIAS + 3, p["db1"])
    put(R_BIAS + 4, p["db2"]); put(R_BIAS + 5, db2e)
    put(R_BIAS + 6, b0);       put(R_BIAS + 7, b_r[1])
    return jnp.asarray(slab)


def make_params(key, obs_dim, action_dim, hidden, latent, num_layers):
    ks = iter(jax.random.split(key, 32))
    s = 0.1

    def w(shape):
        return (s * jax.random.normal(next(ks), shape)).astype(jnp.float32)

    p = {}
    # xu_enc: Linear(obs+act, hidden) ReLU Linear(hidden, hidden) ReLU Linear(hidden, latent)
    p["e0x"], p["e0u"], p["eb0"] = w((obs_dim, hidden)), w((action_dim, hidden)), w((1, hidden))
    p["e1"], p["eb1"] = w((hidden, hidden)), w((1, hidden))
    p["e2"], p["eb2"] = w((hidden, latent)), w((1, latent))
    # LSTM(latent, latent, num_layers): pre-transposed (in, 4H), PyTorch gate order [i,f,g,o]
    p["wih"], p["whh"] = w((num_layers, latent, 4 * latent)), w((num_layers, latent, 4 * latent))
    p["bih"], p["bhh"] = w((num_layers, 1, 4 * latent)), w((num_layers, 1, 4 * latent))
    # x_dec: Linear(latent, hidden) ReLU Linear(hidden, hidden) ReLU Linear(hidden, obs)
    p["d0"], p["db0"] = w((latent, hidden)), w((1, hidden))
    p["d1"], p["db1"] = w((hidden, hidden)), w((1, hidden))
    p["d2"], p["db2"] = w((hidden, obs_dim)), w((1, obs_dim))
    return p


# ----------------------------------------------------------------------------- reference
def reference_forward(x, us, p):
    """Pure-JAX mirror of SeqNN.unroll (LSTM, PyTorch i/f/g/o gate order, unfolded weights)."""
    Tn = us.shape[0]
    L, Hh = p["whh"].shape[0], p["whh"].shape[1]
    h = jnp.zeros((L, x.shape[0], Hh), jnp.float32)
    c = jnp.zeros_like(h)
    xt = x
    outs = []
    for t in range(Tn):
        ut = us[t]
        z = jax.nn.relu(xt @ p["e0x"] + ut @ p["e0u"] + p["eb0"])
        z = jax.nn.relu(z @ p["e1"] + p["eb1"])
        inp = z @ p["e2"] + p["eb2"]
        hs, cs = [], []
        for l in range(L):
            gates = inp @ p["wih"][l] + p["bih"][l] + h[l] @ p["whh"][l] + p["bhh"][l]
            i = jax.nn.sigmoid(gates[:, :Hh])
            f = jax.nn.sigmoid(gates[:, Hh:2 * Hh])
            g = jnp.tanh(gates[:, 2 * Hh:3 * Hh])
            o = jax.nn.sigmoid(gates[:, 3 * Hh:])
            cn = f * c[l] + i * g
            hn = o * jnp.tanh(cn)
            hs.append(hn); cs.append(cn)
            inp = hn
        h, c = jnp.stack(hs), jnp.stack(cs)
        d = jax.nn.relu(inp @ p["d0"] + p["db0"])
        d = jax.nn.relu(d @ p["d1"] + p["db1"])
        xt = xt + d @ p["d2"] + p["db2"]
        outs.append(xt)
    return jnp.stack(outs)


# ----------------------------------------------------------------------------- main
if __name__ == "__main__":
    key = jax.random.PRNGKey(0)
    kp, kx, ku = jax.random.split(key, 3)
    params = make_params(kp, OBS_DIM, ACTION_DIM, HIDDEN, LATENT, NUM_LAYERS)
    slab = prepare_params(params)          # one-time folds + packing (off the hot path)

    x = jax.random.normal(kx, (B, OBS_DIM), jnp.float32)
    us = jax.random.normal(ku, (T, B, ACTION_DIM), jnp.float32)

    pred_xs = jax.block_until_ready(seqnn_forward(x, us, slab))

    ref = jax.block_until_ready(reference_forward(x, us, params))
    np.testing.assert_allclose(np.asarray(pred_xs), np.asarray(ref), rtol=2e-2, atol=2e-2)
    assert pred_xs.shape == (T, B, OBS_DIM)

    # TODO(synk): freeze_dims (petsReacher/petsPusher), detach_xt and the GRU rec_type
    # are config/training-only paths not exercised by this generic-env LSTM forward.
    print("KERNEL_OK")
</pallas_src>

<mosaic_0001>
module attributes {stable_mosaic.version = 11 : i64} {
  func.func @seqnn_kernel(%arg0: memref<8x16xf32, #tpu.memory_space<vmem>>, %arg1: memref<64x8xf32, #tpu.memory_space<vmem>>, %arg2: memref<288x128xf32, #tpu.memory_space<vmem>>, %arg3: memref<8x128xf32, #tpu.memory_space<vmem>>) attributes {dimension_semantics = [], scalar_prefetch = 0 : i64, scratch_operands = 0 : i64, tpu.core_type = #tpu.core_type<tc>} {
    %c0 = arith.constant 0 : index
    %c0_0 = arith.constant 0 : index
    %0 = vector.load %arg2[%c0, %c0_0] : memref<288x128xf32, #tpu.memory_space<vmem>>, vector<16x32xf32>
    %1 = arith.truncf %0 : vector<16x32xf32> to vector<16x32xbf16>
    %c16 = arith.constant 16 : index
    %c0_1 = arith.constant 0 : index
    %2 = vector.load %arg2[%c16, %c0_1] : memref<288x128xf32, #tpu.memory_space<vmem>>, vector<8x32xf32>
    %3 = arith.truncf %2 : vector<8x32xf32> to vector<8x32xbf16>
    %c24 = arith.constant 24 : index
    %c0_2 = arith.constant 0 : index
    %4 = vector.load %arg2[%c24, %c0_2] : memref<288x128xf32, #tpu.memory_space<vmem>>, vector<32x32xf32>
    %5 = arith.truncf %4 : vector<32x32xf32> to vector<32x32xbf16>
    %c56 = arith.constant 56 : index
    %c0_3 = arith.constant 0 : index
    %6 = vector.load %arg2[%c56, %c0_3] : memref<288x128xf32, #tpu.memory_space<vmem>>, vector<32x32xf32>
    %7 = arith.truncf %6 : vector<32x32xf32> to vector<32x32xbf16>
    %c88 = arith.constant 88 : index
    %c0_4 = arith.constant 0 : index
    %8 = vector.load %arg2[%c88, %c0_4] : memref<288x128xf32, #tpu.memory_space<vmem>>, vector<32x32xf32>
    %9 = arith.truncf %8 : vector<32x32xf32> to vector<32x32xbf16>
    %c120 = arith.constant 120 : index
    %c0_5 = arith.constant 0 : index
    %10 = vector.load %arg2[%c120, %c0_5] : memref<288x128xf32, #tpu.memory_space<vmem>>, vector<32x48xf32>
    %11 = arith.truncf %10 : vector<32x48xf32> to vector<32x48xbf16>
    %c152 = arith.constant 152 : index
    %c0_6 = arith.constant 0 : index
    %12 = vector.load %arg2[%c152, %c0_6] : memref<288x128xf32, #tpu.memory_space<vmem>>, vector<64x128xf32>
    %13 = arith.truncf %12 : vector<64x128xf32> to vector<64x128xbf16>
    %c216 = arith.constant 216 : index
    %c0_7 = arith.constant 0 : index
    %14 = vector.load %arg2[%c216, %c0_7] : memref<288x128xf32, #tpu.memory_space<vmem>>, vector<64x128xf32>
    %15 = arith.truncf %14 : vector<64x128xf32> to vector<64x128xbf16>
    %c280 = arith.constant 280 : index
    %c0_8 = arith.constant 0 : index
    %16 = vector.load %arg2[%c280, %c0_8] : memref<288x128xf32, #tpu.memory_space<vmem>>, vector<1x32xf32>
    %17 = vector.shape_cast %16 : vector<1x32xf32> to vector<1x32xf32>
    %18 = vector.broadcast %17 : vector<1x32xf32> to vector<64x32xf32>
    %c281 = arith.constant 281 : index
    %c0_9 = arith.constant 0 : index
    %19 = vector.load %arg2[%c281, %c0_9] : memref<288x128xf32, #tpu.memory_space<vmem>>, vector<1x32xf32>
    %20 = vector.shape_cast %19 : vector<1x32xf32> to vector<1x32xf32>
    %21 = vector.broadcast %20 : vector<1x32xf32> to vector<8x32xf32>
    %c282 = arith.constant 282 : index
    %c0_10 = arith.constant 0 : index
    %22 = vector.load %arg2[%c282, %c0_10] : memref<288x128xf32, #tpu.memory_space<vmem>>, vector<1x32xf32>
    %23 = vector.shape_cast %22 : vector<1x32xf32> to vector<1x32xf32>
    %24 = vector.broadcast %23 : vector<1x32xf32> to vector<8x32xf32>
    %c283 = arith.constant 283 : index
    %c0_11 = arith.constant 0 : index
    %25 = vector.load %arg2[%c283, %c0_11] : memref<288x128xf32, #tpu.memory_space<vmem>>, vector<1x32xf32>
    %26 = vector.shape_cast %25 : vector<1x32xf32> to vector<1x32xf32>
    %27 = vector.broadcast %26 : vector<1x32xf32> to vector<8x32xf32>
    %c284 = arith.constant 284 : index
    %c0_12 = arith.constant 0 : index
    %28 = vector.load %arg2[%c284, %c0_12] : memref<288x128xf32, #tpu.memory_space<vmem>>, vector<1x16xf32>
    %29 = vector.shape_cast %28 : vector<1x16xf32> to vector<1x16xf32>
    %30 = vector.broadcast %29 : vector<1x16xf32> to vector<8x16xf32>
    %c285 = arith.constant 285 : index
    %c0_13 = arith.constant 0 : index
    %31 = vector.load %arg2[%c285, %c0_13] : memref<288x128xf32, #tpu.memory_space<vmem>>, vector<1x32xf32>
    %32 = vector.shape_cast %31 : vector<1x32xf32> to vector<1x32xf32>
    %33 = vector.broadcast %32 : vector<1x32xf32> to vector<8x32xf32>
    %c286 = arith.constant 286 : index
    %c0_14 = arith.constant 0 : index
    %34 = vector.load %arg2[%c286, %c0_14] : memref<288x128xf32, #tpu.memory_space<vmem>>, vector<1x128xf32>
    %35 = vector.shape_cast %34 : vector<1x128xf32> to vector<1x128xf32>
    %36 = vector.broadcast %35 : vector<1x128xf32> to vector<8x128xf32>
    %c287 = arith.constant 287 : index
    %c0_15 = arith.constant 0 : index
    %37 = vector.load %arg2[%c287, %c0_15] : memref<288x128xf32, #tpu.memory_space<vmem>>, vector<1x128xf32>
    %38 = vector.shape_cast %37 : vector<1x128xf32> to vector<1x128xf32>
    %39 = vector.broadcast %38 : vector<1x128xf32> to vector<8x128xf32>
    %c0_16 = arith.constant 0 : index
    %c0_17 = arith.constant 0 : index
    %40 = vector.load %arg1[%c0_16, %c0_17] : memref<64x8xf32, #tpu.memory_space<vmem>>, vector<64x8xf32>
    %41 = arith.truncf %40 : vector<64x8xf32> to vector<64x8xbf16>
    %cst = arith.constant dense<0.000000e+00> : vector<64x32xf32>
    %42 = tpu.matmul %41, %3, %cst {dimension_numbers = #tpu.dot_dimension_numbers<[1], [0], [0], [1], [0, 0, 1, 1], [], []>} : vector<64x8xbf16>, vector<8x32xbf16>, vector<64x32xf32> -> vector<64x32xf32>
    %43 = arith.addf %42, %18 : vector<64x32xf32>
    %c0_18 = arith.constant 0 : index
    %c0_19 = arith.constant 0 : index
    %44 = vector.load %arg0[%c0_18, %c0_19] : memref<8x16xf32, #tpu.memory_space<vmem>>, vector<8x16xf32>
    %45 = arith.truncf %44 : vector<8x16xf32> to vector<8x16xbf16>
    %cst_20 = arith.constant dense<0.000000e+00> : vector<8x32xf32>
    %46 = tpu.matmul %45, %1, %cst_20 {dimension_numbers = #tpu.dot_dimension_numbers<[1], [0], [0], [1], [0, 0, 1, 1], [], []>} : vector<8x16xbf16>, vector<16x32xbf16>, vector<8x32xf32> -> vector<8x32xf32>
    %cst_21 = arith.constant 0.000000e+00 : f32
    %47 = vector.broadcast %cst_21 : f32 to vector<8x32xf32>
    %cst_22 = arith.constant 0.000000e+00 : f32
    %48 = vector.broadcast %cst_22 : f32 to vector<8x32xf32>
    %cst_23 = arith.constant 0.000000e+00 : f32
    %49 = vector.broadcast %cst_23 : f32 to vector<8x32xf32>
    %cst_24 = arith.constant 0.000000e+00 : f32
    %50 = vector.broadcast %cst_24 : f32 to vector<8x32xf32>
    %51 = vector.extract_strided_slice %43 {offsets = [0, 0], sizes = [8, 32], strides = [1, 1]} : vector<64x32xf32> to vector<8x32xf32>
    %52 = arith.addf %46, %51 : vector<8x32xf32>
    %cst_25 = arith.constant 0.000000e+00 : f32
    %53 = vector.broadcast %cst_25 : f32 to vector<8x32xf32>
    %54 = arith.maximumf %52, %53 : vector<8x32xf32>
    %55 = arith.truncf %54 : vector<8x32xf32> to vector<8x32xbf16>
    %cst_26 = arith.constant dense<0.000000e+00> : vector<8x32xf32>
    %56 = tpu.matmul %55, %5, %cst_26 {dimension_numbers = #tpu.dot_dimension_numbers<[1], [0], [0], [1], [0, 0, 1, 1], [], []>} : vector<8x32xbf16>, vector<32x32xbf16>, vector<8x32xf32> -> vector<8x32xf32>
    %57 = arith.addf %56, %21 : vector<8x32xf32>
    %cst_27 = arith.constant 0.000000e+00 : f32
    %58 = vector.broadcast %cst_27 : f32 to vector<8x32xf32>
    %59 = arith.maximumf %57, %58 : vector<8x32xf32>
    %60 = arith.truncf %59 : vector<8x32xf32> to vector<8x32xbf16>
    %61 = arith.truncf %47 : vector<8x32xf32> to vector<8x32xbf16>
    %62 = tpu.concatenate %60, %61 in 1 : vector<8x32xbf16>, vector<8x32xbf16> -> vector<8x64xbf16>
    %cst_28 = arith.constant dense<0.000000e+00> : vector<8x128xf32>
    %63 = tpu.matmul %62, %13, %cst_28 {dimension_numbers = #tpu.dot_dimension_numbers<[1], [0], [0], [1], [0, 0, 1, 1], [], []>} : vector<8x64xbf16>, vector<64x128xbf16>, vector<8x128xf32> -> vector<8x128xf32>
    %64 = arith.addf %63, %36 : vector<8x128xf32>
    %65 = vector.extract_strided_slice %64 {offsets = [0, 0], sizes = [8, 96], strides = [1, 1]} : vector<8x128xf32> to vector<8x96xf32>
    %66 = arith.negf %65 : vector<8x96xf32>
    %67 = math.exp %66 : vector<8x96xf32>
    %cst_29 = arith.constant 1.000000e+00 : f32
    %68 = vector.broadcast %cst_29 : f32 to vector<8x96xf32>
    %69 = arith.addf %68, %67 : vector<8x96xf32>
    %70 = arith.divf %68, %69 : vector<8x96xf32>
    %71 = vector.extract_strided_slice %64 {offsets = [0, 96], sizes = [8, 32], strides = [1, 1]} : vector<8x128xf32> to vector<8x32xf32>
    %72 = math.tanh %71 : vector<8x32xf32>
    %73 = vector.extract_strided_slice %70 {offsets = [0, 32], sizes = [8, 32], strides = [1, 1]} : vector<8x96xf32> to vector<8x32xf32>
    %74 = arith.mulf %73, %49 : vector<8x32xf32>
    %75 = vector.extract_strided_slice %70 {offsets = [0, 0], sizes = [8, 32], strides = [1, 1]} : vector<8x96xf32> to vector<8x32xf32>
    %76 = arith.mulf %75, %72 : vector<8x32xf32>
    %77 = arith.addf %74, %76 : vector<8x32xf32>
    %78 = vector.extract_strided_slice %70 {offsets = [0, 64], sizes = [8, 32], strides = [1, 1]} : vector<8x96xf32> to vector<8x32xf32>
    %79 = math.tanh %77 : vector<8x32xf32>
    %80 = arith.mulf %78, %79 : vector<8x32xf32>
    %81 = arith.truncf %80 : vector<8x32xf32> to vector<8x32xbf16>
    %82 = arith.truncf %48 : vector<8x32xf32> to vector<8x32xbf16>
    %83 = tpu.concatenate %81, %82 in 1 : vector<8x32xbf16>, vector<8x32xbf16> -> vector<8x64xbf16>
    %cst_30 = arith.constant dense<0.000000e+00> : vector<8x128xf32>
    %84 = tpu.matmul %83, %15, %cst_30 {dimension_numbers = #tpu.dot_dimension_numbers<[1], [0], [0], [1], [0, 0, 1, 1], [], []>} : vector<8x64xbf16>, vector<64x128xbf16>, vector<8x128xf32> -> vector<8x128xf32>
    %85 = arith.addf %84, %39 : vector<8x128xf32>
    %86 = vector.extract_strided_slice %85 {offsets = [0, 0], sizes = [8, 96], strides = [1, 1]} : vector<8x128xf32> to vector<8x96xf32>
    %87 = arith.negf %86 : vector<8x96xf32>
    %88 = math.exp %87 : vector<8x96xf32>
    %cst_31 = arith.constant 1.000000e+00 : f32
    %89 = vector.broadcast %cst_31 : f32 to vector<8x96xf32>
    %90 = arith.addf %89, %88 : vector<8x96xf32>
    %91 = arith.divf %89, %90 : vector<8x96xf32>
    %92 = vector.extract_strided_slice %85 {offsets = [0, 96], sizes = [8, 32], strides = [1, 1]} : vector<8x128xf32> to vector<8x32xf32>
    %93 = math.tanh %92 : vector<8x32xf32>
    %94 = vector.extract_strided_slice %91 {offsets = [0, 32], sizes = [8, 32], strides = [1, 1]} : vector<8x96xf32> to vector<8x32xf32>
    %95 = arith.mulf %94, %50 : vector<8x32xf32>
    %96 = vector.extract_strided_slice %91 {offsets = [0, 0], sizes = [8, 32], strides = [1, 1]} : vector<8x96xf32> to vector<8x32xf32>
    %97 = arith.mulf %96, %93 : vector<8x32xf32>
    %98 = arith.addf %95, %97 : vector<8x32xf32>
    %99 = vector.extract_strided_slice %91 {offsets = [0, 64], sizes = [8, 32], strides = [1, 1]} : vector<8x96xf32> to vector<8x32xf32>
    %100 = math.tanh %98 : vector<8x32xf32>
    %101 = arith.mulf %99, %100 : vector<8x32xf32>
    %102 = arith.truncf %101 : vector<8x32xf32> to vector<8x32xbf16>
    %cst_32 = arith.constant dense<0.000000e+00> : vector<8x32xf32>
    %103 = tpu.matmul %102, %7, %cst_32 {dimension_numbers = #tpu.dot_dimension_numbers<[1], [0], [0], [1], [0, 0, 1, 1], [], []>} : vector<8x32xbf16>, vector<32x32xbf16>, vector<8x32xf32> -> vector<8x32xf32>
    %104 = arith.addf %103, %24 : vector<8x32xf32>
    %cst_33 = arith.constant 0.000000e+00 : f32
    %105 = vector.broadcast %cst_33 : f32 to vector<8x32xf32>
    %106 = arith.maximumf %104, %105 : vector<8x32xf32>
    %107 = arith.truncf %106 : vector<8x32xf32> to vector<8x32xbf16>
    %cst_34 = arith.constant dense<0.000000e+00> : vector<8x32xf32>
    %108 = tpu.matmul %107, %9, %cst_34 {dimension_numbers = #tpu.dot_dimension_numbers<[1], [0], [0], [1], [0, 0, 1, 1], [], []>} : vector<8x32xbf16>, vector<32x32xbf16>, vector<8x32xf32> -> vector<8x32xf32>
    %109 = arith.addf %108, %27 : vector<8x32xf32>
    %cst_35 = arith.constant 0.000000e+00 : f32
    %110 = vector.broadcast %cst_35 : f32 to vector<8x32xf32>
    %111 = arith.maximumf %109, %110 : vector<8x32xf32>
    %112 = arith.truncf %111 : vector<8x32xf32> to vector<8x32xbf16>
    %cst_36 = arith.constant dense<0.000000e+00> : vector<8x48xf32>
    %113 = tpu.matmul %112, %11, %cst_36 {dimension_numbers = #tpu.dot_dimension_numbers<[1], [0], [0], [1], [0, 0, 1, 1], [], []>} : vector<8x32xbf16>, vector<32x48xbf16>, vector<8x48xf32> -> vector<8x48xf32>
    %114 = vector.extract_strided_slice %113 {offsets = [0, 0], sizes = [8, 16], strides = [1, 1]} : vector<8x48xf32> to vector<8x16xf32>
    %115 = arith.addf %44, %114 : vector<8x16xf32>
    %116 = arith.addf %115, %30 : vector<8x16xf32>
    %117 = vector.extract_strided_slice %113 {offsets = [0, 16], sizes = [8, 32], strides = [1, 1]} : vector<8x48xf32> to vector<8x32xf32>
    %118 = arith.addf %46, %117 : vector<8x32xf32>
    %119 = arith.addf %118, %33 : vector<8x32xf32>
    %c0_37 = arith.constant 0 : index
    %c0_38 = arith.constant 0 : index
    %120 = vector.load %arg3[%c0_37, %c0_38] : memref<8x128xf32, #tpu.memory_space<vmem>>, vector<8x16xf32>
    tpu.vector_store %arg3[%c0_37, %c0_38], %116 {strides = array<i32>} : memref<8x128xf32, #tpu.memory_space<vmem>>, vector<8x16xf32>,
    %121 = vector.extract_strided_slice %43 {offsets = [8, 0], sizes = [8, 32], strides = [1, 1]} : vector<64x32xf32> to vector<8x32xf32>
    %122 = arith.addf %119, %121 : vector<8x32xf32>
    %cst_39 = arith.constant 0.000000e+00 : f32
    %123 = vector.broadcast %cst_39 : f32 to vector<8x32xf32>
    %124 = arith.maximumf %122, %123 : vector<8x32xf32>
    %125 = arith.truncf %124 : vector<8x32xf32> to vector<8x32xbf16>
    %cst_40 = arith.constant dense<0.000000e+00> : vector<8x32xf32>
    %126 = tpu.matmul %125, %5, %cst_40 {dimension_numbers = #tpu.dot_dimension_numbers<[1], [0], [0], [1], [0, 0, 1, 1], [], []>} : vector<8x32xbf16>, vector<32x32xbf16>, vector<8x32xf32> -> vector<8x32xf32>
    %127 = arith.addf %126, %21 : vector<8x32xf32>
    %cst_41 = arith.constant 0.000000e+00 : f32
    %128 = vector.broadcast %cst_41 : f32 to vector<8x32xf32>
    %129 = arith.maximumf %127, %128 : vector<8x32xf32>
    %130 = arith.truncf %129 : vector<8x32xf32> to vector<8x32xbf16>
    %131 = arith.truncf %80 : vector<8x32xf32> to vector<8x32xbf16>
    %132 = tpu.concatenate %130, %131 in 1 : vector<8x32xbf16>, vector<8x32xbf16> -> vector<8x64xbf16>
    %cst_42 = arith.constant dense<0.000000e+00> : vector<8x128xf32>
    %133 = tpu.matmul %132, %13, %cst_42 {dimension_numbers = #tpu.dot_dimension_numbers<[1], [0], [0], [1], [0, 0, 1, 1], [], []>} : vector<8x64xbf16>, vector<64x128xbf16>, vector<8x128xf32> -> vector<8x128xf32>
    %134 = arith.addf %133, %36 : vector<8x128xf32>
    %135 = vector.extract_strided_slice %134 {offsets = [0, 0], sizes = [8, 96], strides = [1, 1]} : vector<8x128xf32> to vector<8x96xf32>
    %136 = arith.negf %135 : vector<8x96xf32>
    %137 = math.exp %136 : vector<8x96xf32>
    %cst_43 = arith.constant 1.000000e+00 : f32
    %138 = vector.broadcast %cst_43 : f32 to vector<8x96xf32>
    %139 = arith.addf %138, %137 : vector<8x96xf32>
    %140 = arith.divf %138, %139 : vector<8x96xf32>
    %141 = vector.extract_strided_slice %134 {offsets = [0, 96], sizes = [8, 32], strides = [1, 1]} : vector<8x128xf32> to vector<8x32xf32>
    %142 = math.tanh %141 : vector<8x32xf32>
    %143 = vector.extract_strided_slice %140 {offsets = [0, 32], sizes = [8, 32], strides = [1, 1]} : vector<8x96xf32> to vector<8x32xf32>
    %144 = arith.mulf %143, %77 : vector<8x32xf32>
    %145 = vector.extract_strided_slice %140 {offsets = [0, 0], sizes = [8, 32], strides = [1, 1]} : vector<8x96xf32> to vector<8x32xf32>
    %146 = arith.mulf %145, %142 : vector<8x32xf32>
    %147 = arith.addf %144, %146 : vector<8x32xf32>
    %148 = vector.extract_strided_slice %140 {offsets = [0, 64], sizes = [8, 32], strides = [1, 1]} : vector<8x96xf32> to vector<8x32xf32>
    %149 = math.tanh %147 : vector<8x32xf32>
    %150 = arith.mulf %148, %149 : vector<8x32xf32>
    %151 = arith.truncf %150 : vector<8x32xf32> to vector<8x32xbf16>
    %152 = arith.truncf %101 : vector<8x32xf32> to vector<8x32xbf16>
    %153 = tpu.concatenate %151, %152 in 1 : vector<8x32xbf16>, vector<8x32xbf16> -> vector<8x64xbf16>
    %cst_44 = arith.constant dense<0.000000e+00> : vector<8x128xf32>
    %154 = tpu.matmul %153, %15, %cst_44 {dimension_numbers = #tpu.dot_dimension_numbers<[1], [0], [0], [1], [0, 0, 1, 1], [], []>} : vector<8x64xbf16>, vector<64x128xbf16>, vector<8x128xf32> -> vector<8x128xf32>
    %155 = arith.addf %154, %39 : vector<8x128xf32>
    %156 = vector.extract_strided_slice %155 {offsets = [0, 0], sizes = [8, 96], strides = [1, 1]} : vector<8x128xf32> to vector<8x96xf32>
    %157 = arith.negf %156 : vector<8x96xf32>
    %158 = math.exp %157 : vector<8x96xf32>
    %cst_45 = arith.constant 1.000000e+00 : f32
    %159 = vector.broadcast %cst_45 : f32 to vector<8x96xf32>
    %160 = arith.addf %159, %158 : vector<8x96xf32>
    %161 = arith.divf %159, %160 : vector<8x96xf32>
    %162 = vector.extract_strided_slice %155 {offsets = [0, 96], sizes = [8, 32], strides = [1, 1]} : vector<8x128xf32> to vector<8x32xf32>
    %163 = math.tanh %162 : vector<8x32xf32>
    %164 = vector.extract_strided_slice %161 {offsets = [0, 32], sizes = [8, 32], strides = [1, 1]} : vector<8x96xf32> to vector<8x32xf32>
    %165 = arith.mulf %164, %98 : vector<8x32xf32>
    %166 = vector.extract_strided_slice %161 {offsets = [0, 0], sizes = [8, 32], strides = [1, 1]} : vector<8x96xf32> to vector<8x32xf32>
    %167 = arith.mulf %166, %163 : vector<8x32xf32>
    %168 = arith.addf %165, %167 : vector<8x32xf32>
    %169 = vector.extract_strided_slice %161 {offsets = [0, 64], sizes = [8, 32], strides = [1, 1]} : vector<8x96xf32> to vector<8x32xf32>
    %170 = math.tanh %168 : vector<8x32xf32>
    %171 = arith.mulf %169, %170 : vector<8x32xf32>
    %172 = arith.truncf %171 : vector<8x32xf32> to vector<8x32xbf16>
    %cst_46 = arith.constant dense<0.000000e+00> : vector<8x32xf32>
    %173 = tpu.matmul %172, %7, %cst_46 {dimension_numbers = #tpu.dot_dimension_numbers<[1], [0], [0], [1], [0, 0, 1, 1], [], []>} : vector<8x32xbf16>, vector<32x32xbf16>, vector<8x32xf32> -> vector<8x32xf32>
    %174 = arith.addf %173, %24 : vector<8x32xf32>
    %cst_47 = arith.constant 0.000000e+00 : f32
    %175 = vector.broadcast %cst_47 : f32 to vector<8x32xf32>
    %176 = arith.maximumf %174, %175 : vector<8x32xf32>
    %177 = arith.truncf %176 : vector<8x32xf32> to vector<8x32xbf16>
    %cst_48 = arith.constant dense<0.000000e+00> : vector<8x32xf32>
    %178 = tpu.matmul %177, %9, %cst_48 {dimension_numbers = #tpu.dot_dimension_numbers<[1], [0], [0], [1], [0, 0, 1, 1], [], []>} : vector<8x32xbf16>, vector<32x32xbf16>, vector<8x32xf32> -> vector<8x32xf32>
    %179 = arith.addf %178, %27 : vector<8x32xf32>
    %cst_49 = arith.constant 0.000000e+00 : f32
    %180 = vector.broadcast %cst_49 : f32 to vector<8x32xf32>
    %181 = arith.maximumf %179, %180 : vector<8x32xf32>
    %182 = arith.truncf %181 : vector<8x32xf32> to vector<8x32xbf16>
    %cst_50 = arith.constant dense<0.000000e+00> : vector<8x48xf32>
    %183 = tpu.matmul %182, %11, %cst_50 {dimension_numbers = #tpu.dot_dimension_numbers<[1], [0], [0], [1], [0, 0, 1, 1], [], []>} : vector<8x32xbf16>, vector<32x48xbf16>, vector<8x48xf32> -> vector<8x48xf32>
    %184 = vector.extract_strided_slice %183 {offsets = [0, 0], sizes = [8, 16], strides = [1, 1]} : vector<8x48xf32> to vector<8x16xf32>
    %185 = arith.addf %116, %184 : vector<8x16xf32>
    %186 = arith.addf %185, %30 : vector<8x16xf32>
    %187 = vector.extract_strided_slice %183 {offsets = [0, 16], sizes = [8, 32], strides = [1, 1]} : vector<8x48xf32> to vector<8x32xf32>
    %188 = arith.addf %119, %187 : vector<8x32xf32>
    %189 = arith.addf %188, %33 : vector<8x32xf32>
    %c0_51 = arith.constant 0 : index
    %c16_52 = arith.constant 16 : index
    %190 = vector.load %arg3[%c0_51, %c16_52] : memref<8x128xf32, #tpu.memory_space<vmem>>, vector<8x16xf32>
    tpu.vector_store %arg3[%c0_51, %c16_52], %186 {strides = array<i32>} : memref<8x128xf32, #tpu.memory_space<vmem>>, vector<8x16xf32>,
    %191 = vector.extract_strided_slice %43 {offsets = [16, 0], sizes = [8, 32], strides = [1, 1]} : vector<64x32xf32> to vector<8x32xf32>
    %192 = arith.addf %189, %191 : vector<8x32xf32>
    %cst_53 = arith.constant 0.000000e+00 : f32
    %193 = vector.broadcast %cst_53 : f32 to vector<8x32xf32>
    %194 = arith.maximumf %192, %193 : vector<8x32xf32>
    %195 = arith.truncf %194 : vector<8x32xf32> to vector<8x32xbf16>
    %cst_54 = arith.constant dense<0.000000e+00> : vector<8x32xf32>
    %196 = tpu.matmul %195, %5, %cst_54 {dimension_numbers = #tpu.dot_dimension_numbers<[1], [0], [0], [1], [0, 0, 1, 1], [], []>} : vector<8x32xbf16>, vector<32x32xbf16>, vector<8x32xf32> -> vector<8x32xf32>
    %197 = arith.addf %196, %21 : vector<8x32xf32>
    %cst_55 = arith.constant 0.000000e+00 : f32
    %198 = vector.broadcast %cst_55 : f32 to vector<8x32xf32>
    %199 = arith.maximumf %197, %198 : vector<8x32xf32>
    %200 = arith.truncf %199 : vector<8x32xf32> to vector<8x32xbf16>
    %201 = arith.truncf %150 : vector<8x32xf32> to vector<8x32xbf16>
    %202 = tpu.concatenate %200, %201 in 1 : vector<8x32xbf16>, vector<8x32xbf16> -> vector<8x64xbf16>
    %cst_56 = arith.constant dense<0.000000e+00> : vector<8x128xf32>
    %203 = tpu.matmul %202, %13, %cst_56 {dimension_numbers = #tpu.dot_dimension_numbers<[1], [0], [0], [1], [0, 0, 1, 1], [], []>} : vector<8x64xbf16>, vector<64x128xbf16>, vector<8x128xf32> -> vector<8x128xf32>
    %204 = arith.addf %203, %36 : vector<8x128xf32>
    %205 = vector.extract_strided_slice %204 {offsets = [0, 0], sizes = [8, 96], strides = [1, 1]} : vector<8x128xf32> to vector<8x96xf32>
    %206 = arith.negf %205 : vector<8x96xf32>
    %207 = math.exp %206 : vector<8x96xf32>
    %cst_57 = arith.constant 1.000000e+00 : f32
    %208 = vector.broadcast %cst_57 : f32 to vector<8x96xf32>
    %209 = arith.addf %208, %207 : vector<8x96xf32>
    %210 = arith.divf %208, %209 : vector<8x96xf32>
    %211 = vector.extract_strided_slice %204 {offsets = [0, 96], sizes = [8, 32], strides = [1, 1]} : vector<8x128xf32> to vector<8x32xf32>
    %212 = math.tanh %211 : vector<8x32xf32>
    %213 = vector.extract_strided_slice %210 {offsets = [0, 32], sizes = [8, 32], strides = [1, 1]} : vector<8x96xf32> to vector<8x32xf32>
    %214 = arith.mulf %213, %147 : vector<8x32xf32>
    %215 = vector.extract_strided_slice %210 {offsets = [0, 0], sizes = [8, 32], strides = [1, 1]} : vector<8x96xf32> to vector<8x32xf32>
    %216 = arith.mulf %215, %212 : vector<8x32xf32>
    %217 = arith.addf %214, %216 : vector<8x32xf32>
    %218 = vector.extract_strided_slice %210 {offsets = [0, 64], sizes = [8, 32], strides = [1, 1]} : vector<8x96xf32> to vector<8x32xf32>
    %219 = math.tanh %217 : vector<8x32xf32>
    %220 = arith.mulf %218, %219 : vector<8x32xf32>
    %221 = arith.truncf %220 : vector<8x32xf32> to vector<8x32xbf16>
    %222 = arith.truncf %171 : vector<8x32xf32> to vector<8x32xbf16>
    %223 = tpu.concatenate %221, %222 in 1 : vector<8x32xbf16>, vector<8x32xbf16> -> vector<8x64xbf16>
    %cst_58 = arith.constant dense<0.000000e+00> : vector<8x128xf32>
    %224 = tpu.matmul %223, %15, %cst_58 {dimension_numbers = #tpu.dot_dimension_numbers<[1], [0], [0], [1], [0, 0, 1, 1], [], []>} : vector<8x64xbf16>, vector<64x128xbf16>, vector<8x128xf32> -> vector<8x128xf32>
    %225 = arith.addf %224, %39 : vector<8x128xf32>
    %226 = vector.extract_strided_slice %225 {offsets = [0, 0], sizes = [8, 96], strides = [1, 1]} : vector<8x128xf32> to vector<8x96xf32>
    %227 = arith.negf %226 : vector<8x96xf32>
    %228 = math.exp %227 : vector<8x96xf32>
    %cst_59 = arith.constant 1.000000e+00 : f32
    %229 = vector.broadcast %cst_59 : f32 to vector<8x96xf32>
    %230 = arith.addf %229, %228 : vector<8x96xf32>
    %231 = arith.divf %229, %230 : vector<8x96xf32>
    %232 = vector.extract_strided_slice %225 {offsets = [0, 96], sizes = [8, 32], strides = [1, 1]} : vector<8x128xf32> to vector<8x32xf32>
    %233 = math.tanh %232 : vector<8x32xf32>
    %234 = vector.extract_strided_slice %231 {offsets = [0, 32], sizes = [8, 32], strides = [1, 1]} : vector<8x96xf32> to vector<8x32xf32>
    %235 = arith.mulf %234, %168 : vector<8x32xf32>
    %236 = vector.extract_strided_slice %231 {offsets = [0, 0], sizes = [8, 32], strides = [1, 1]} : vector<8x96xf32> to vector<8x32xf32>
    %237 = arith.mulf %236, %233 : vector<8x32xf32>
    %238 = arith.addf %235, %237 : vector<8x32xf32>
    %239 = vector.extract_strided_slice %231 {offsets = [0, 64], sizes = [8, 32], strides = [1, 1]} : vector<8x96xf32> to vector<8x32xf32>
    %240 = math.tanh %238 : vector<8x32xf32>
    %241 = arith.mulf %239, %240 : vector<8x32xf32>
    %242 = arith.truncf %241 : vector<8x32xf32> to vector<8x32xbf16>
    %cst_60 = arith.constant dense<0.000000e+00> : vector<8x32xf32>
    %243 = tpu.matmul %242, %7, %cst_60 {dimension_numbers = #tpu.dot_dimension_numbers<[1], [0], [0], [1], [0, 0, 1, 1], [], []>} : vector<8x32xbf16>, vector<32x32xbf16>, vector<8x32xf32> -> vector<8x32xf32>
    %244 = arith.addf %243, %24 : vector<8x32xf32>
    %cst_61 = arith.constant 0.000000e+00 : f32
    %245 = vector.broadcast %cst_61 : f32 to vector<8x32xf32>
    %246 = arith.maximumf %244, %245 : vector<8x32xf32>
    %247 = arith.truncf %246 : vector<8x32xf32> to vector<8x32xbf16>
    %cst_62 = arith.constant dense<0.000000e+00> : vector<8x32xf32>
    %248 = tpu.matmul %247, %9, %cst_62 {dimension_numbers = #tpu.dot_dimension_numbers<[1], [0], [0], [1], [0, 0, 1, 1], [], []>} : vector<8x32xbf16>, vector<32x32xbf16>, vector<8x32xf32> -> vector<8x32xf32>
    %249 = arith.addf %248, %27 : vector<8x32xf32>
    %cst_63 = arith.constant 0.000000e+00 : f32
    %250 = vector.broadcast %cst_63 : f32 to vector<8x32xf32>
    %251 = arith.maximumf %249, %250 : vector<8x32xf32>
    %252 = arith.truncf %251 : vector<8x32xf32> to vector<8x32xbf16>
    %cst_64 = arith.constant dense<0.000000e+00> : vector<8x48xf32>
    %253 = tpu.matmul %252, %11, %cst_64 {dimension_numbers = #tpu.dot_dimension_numbers<[1], [0], [0], [1], [0, 0, 1, 1], [], []>} : vector<8x32xbf16>, vector<32x48xbf16>, vector<8x48xf32> -> vector<8x48xf32>
    %254 = vector.extract_strided_slice %253 {offsets = [0, 0], sizes = [8, 16], strides = [1, 1]} : vector<8x48xf32> to vector<8x16xf32>
    %255 = arith.addf %186, %254 : vector<8x16xf32>
    %256 = arith.addf %255, %30 : vector<8x16xf32>
    %257 = vector.extract_strided_slice %253 {offsets = [0, 16], sizes = [8, 32], strides = [1, 1]} : vector<8x48xf32> to vector<8x32xf32>
    %258 = arith.addf %189, %257 : vector<8x32xf32>
    %259 = arith.addf %258, %33 : vector<8x32xf32>
    %c0_65 = arith.constant 0 : index
    %c32 = arith.constant 32 : index
    %260 = vector.load %arg3[%c0_65, %c32] : memref<8x128xf32, #tpu.memory_space<vmem>>, vector<8x16xf32>
    tpu.vector_store %arg3[%c0_65, %c32], %256 {strides = array<i32>} : memref<8x128xf32, #tpu.memory_space<vmem>>, vector<8x16xf32>,
    %261 = vector.extract_strided_slice %43 {offsets = [24, 0], sizes = [8, 32], strides = [1, 1]} : vector<64x32xf32> to vector<8x32xf32>
    %262 = arith.addf %259, %261 : vector<8x32xf32>
    %cst_66 = arith.constant 0.000000e+00 : f32
    %263 = vector.broadcast %cst_66 : f32 to vector<8x32xf32>
    %264 = arith.maximumf %262, %263 : vector<8x32xf32>
    %265 = arith.truncf %264 : vector<8x32xf32> to vector<8x32xbf16>
    %cst_67 = arith.constant dense<0.000000e+00> : vector<8x32xf32>
    %266 = tpu.matmul %265, %5, %cst_67 {dimension_numbers = #tpu.dot_dimension_numbers<[1], [0], [0], [1], [0, 0, 1, 1], [], []>} : vector<8x32xbf16>, vector<32x32xbf16>, vector<8x32xf32> -> vector<8x32xf32>
    %267 = arith.addf %266, %21 : vector<8x32xf32>
    %cst_68 = arith.constant 0.000000e+00 : f32
    %268 = vector.broadcast %cst_68 : f32 to vector<8x32xf32>
    %269 = arith.maximumf %267, %268 : vector<8x32xf32>
    %270 = arith.truncf %269 : vector<8x32xf32> to vector<8x32xbf16>
    %271 = arith.truncf %220 : vector<8x32xf32> to vector<8x32xbf16>
    %272 = tpu.concatenate %270, %271 in 1 : vector<8x32xbf16>, vector<8x32xbf16> -> vector<8x64xbf16>
    %cst_69 = arith.constant dense<0.000000e+00> : vector<8x128xf32>
    %273 = tpu.matmul %272, %13, %cst_69 {dimension_numbers = #tpu.dot_dimension_numbers<[1], [0], [0], [1], [0, 0, 1, 1], [], []>} : vector<8x64xbf16>, vector<64x128xbf16>, vector<8x128xf32> -> vector<8x128xf32>
    %274 = arith.addf %273, %36 : vector<8x128xf32>
    %275 = vector.extract_strided_slice %274 {offsets = [0, 0], sizes = [8, 96], strides = [1, 1]} : vector<8x128xf32> to vector<8x96xf32>
    %276 = arith.negf %275 : vector<8x96xf32>
    %277 = math.exp %276 : vector<8x96xf32>
    %cst_70 = arith.constant 1.000000e+00 : f32
    %278 = vector.broadcast %cst_70 : f32 to vector<8x96xf32>
    %279 = arith.addf %278, %277 : vector<8x96xf32>
    %280 = arith.divf %278, %279 : vector<8x96xf32>
    %281 = vector.extract_strided_slice %274 {offsets = [0, 96], sizes = [8, 32], strides = [1, 1]} : vector<8x128xf32> to vector<8x32xf32>
    %282 = math.tanh %281 : vector<8x32xf32>
    %283 = vector.extract_strided_slice %280 {offsets = [0, 32], sizes = [8, 32], strides = [1, 1]} : vector<8x96xf32> to vector<8x32xf32>
    %284 = arith.mulf %283, %217 : vector<8x32xf32>
    %285 = vector.extract_strided_slice %280 {offsets = [0, 0], sizes = [8, 32], strides = [1, 1]} : vector<8x96xf32> to vector<8x32xf32>
    %286 = arith.mulf %285, %282 : vector<8x32xf32>
    %287 = arith.addf %284, %286 : vector<8x32xf32>
    %288 = vector.extract_strided_slice %280 {offsets = [0, 64], sizes = [8, 32], strides = [1, 1]} : vector<8x96xf32> to vector<8x32xf32>
    %289 = math.tanh %287 : vector<8x32xf32>
    %290 = arith.mulf %288, %289 : vector<8x32xf32>
    %291 = arith.truncf %290 : vector<8x32xf32> to vector<8x32xbf16>
    %292 = arith.truncf %241 : vector<8x32xf32> to vector<8x32xbf16>
    %293 = tpu.concatenate %291, %292 in 1 : vector<8x32xbf16>, vector<8x32xbf16> -> vector<8x64xbf16>
    %cst_71 = arith.constant dense<0.000000e+00> : vector<8x128xf32>
    %294 = tpu.matmul %293, %15, %cst_71 {dimension_numbers = #tpu.dot_dimension_numbers<[1], [0], [0], [1], [0, 0, 1, 1], [], []>} : vector<8x64xbf16>, vector<64x128xbf16>, vector<8x128xf32> -> vector<8x128xf32>
    %295 = arith.addf %294, %39 : vector<8x128xf32>
    %296 = vector.extract_strided_slice %295 {offsets = [0, 0], sizes = [8, 96], strides = [1, 1]} : vector<8x128xf32> to vector<8x96xf32>
    %297 = arith.negf %296 : vector<8x96xf32>
    %298 = math.exp %297 : vector<8x96xf32>
    %cst_72 = arith.constant 1.000000e+00 : f32
    %299 = vector.broadcast %cst_72 : f32 to vector<8x96xf32>
    %300 = arith.addf %299, %298 : vector<8x96xf32>
    %301 = arith.divf %299, %300 : vector<8x96xf32>
    %302 = vector.extract_strided_slice %295 {offsets = [0, 96], sizes = [8, 32], strides = [1, 1]} : vector<8x128xf32> to vector<8x32xf32>
    %303 = math.tanh %302 : vector<8x32xf32>
    %304 = vector.extract_strided_slice %301 {offsets = [0, 32], sizes = [8, 32], strides = [1, 1]} : vector<8x96xf32> to vector<8x32xf32>
    %305 = arith.mulf %304, %238 : vector<8x32xf32>
    %306 = vector.extract_strided_slice %301 {offsets = [0, 0], sizes = [8, 32], strides = [1, 1]} : vector<8x96xf32> to vector<8x32xf32>
    %307 = arith.mulf %306, %303 : vector<8x32xf32>
    %308 = arith.addf %305, %307 : vector<8x32xf32>
    %309 = vector.extract_strided_slice %301 {offsets = [0, 64], sizes = [8, 32], strides = [1, 1]} : vector<8x96xf32> to vector<8x32xf32>
    %310 = math.tanh %308 : vector<8x32xf32>
    %311 = arith.mulf %309, %310 : vector<8x32xf32>
    %312 = arith.truncf %311 : vector<8x32xf32> to vector<8x32xbf16>
    %cst_73 = arith.constant dense<0.000000e+00> : vector<8x32xf32>
    %313 = tpu.matmul %312, %7, %cst_73 {dimension_numbers = #tpu.dot_dimension_numbers<[1], [0], [0], [1], [0, 0, 1, 1], [], []>} : vector<8x32xbf16>, vector<32x32xbf16>, vector<8x32xf32> -> vector<8x32xf32>
    %314 = arith.addf %313, %24 : vector<8x32xf32>
    %cst_74 = arith.constant 0.000000e+00 : f32
    %315 = vector.broadcast %cst_74 : f32 to vector<8x32xf32>
    %316 = arith.maximumf %314, %315 : vector<8x32xf32>
    %317 = arith.truncf %316 : vector<8x32xf32> to vector<8x32xbf16>
    %cst_75 = arith.constant dense<0.000000e+00> : vector<8x32xf32>
    %318 = tpu.matmul %317, %9, %cst_75 {dimension_numbers = #tpu.dot_dimension_numbers<[1], [0], [0], [1], [0, 0, 1, 1], [], []>} : vector<8x32xbf16>, vector<32x32xbf16>, vector<8x32xf32> -> vector<8x32xf32>
    %319 = arith.addf %318, %27 : vector<8x32xf32>
    %cst_76 = arith.constant 0.000000e+00 : f32
    %320 = vector.broadcast %cst_76 : f32 to vector<8x32xf32>
    %321 = arith.maximumf %319, %320 : vector<8x32xf32>
    %322 = arith.truncf %321 : vector<8x32xf32> to vector<8x32xbf16>
    %cst_77 = arith.constant dense<0.000000e+00> : vector<8x48xf32>
    %323 = tpu.matmul %322, %11, %cst_77 {dimension_numbers = #tpu.dot_dimension_numbers<[1], [0], [0], [1], [0, 0, 1, 1], [], []>} : vector<8x32xbf16>, vector<32x48xbf16>, vector<8x48xf32> -> vector<8x48xf32>
    %324 = vector.extract_strided_slice %323 {offsets = [0, 0], sizes = [8, 16], strides = [1, 1]} : vector<8x48xf32> to vector<8x16xf32>
    %325 = arith.addf %256, %324 : vector<8x16xf32>
    %326 = arith.addf %325, %30 : vector<8x16xf32>
    %327 = vector.extract_strided_slice %323 {offsets = [0, 16], sizes = [8, 32], strides = [1, 1]} : vector<8x48xf32> to vector<8x32xf32>
    %328 = arith.addf %259, %327 : vector<8x32xf32>
    %329 = arith.addf %328, %33 : vector<8x32xf32>
    %c0_78 = arith.constant 0 : index
    %c48 = arith.constant 48 : index
    %330 = vector.load %arg3[%c0_78, %c48] : memref<8x128xf32, #tpu.memory_space<vmem>>, vector<8x16xf32>
    tpu.vector_store %arg3[%c0_78, %c48], %326 {strides = array<i32>} : memref<8x128xf32, #tpu.memory_space<vmem>>, vector<8x16xf32>,
    %331 = vector.extract_strided_slice %43 {offsets = [32, 0], sizes = [8, 32], strides = [1, 1]} : vector<64x32xf32> to vector<8x32xf32>
    %332 = arith.addf %329, %331 : vector<8x32xf32>
    %cst_79 = arith.constant 0.000000e+00 : f32
    %333 = vector.broadcast %cst_79 : f32 to vector<8x32xf32>
    %334 = arith.maximumf %332, %333 : vector<8x32xf32>
    %335 = arith.truncf %334 : vector<8x32xf32> to vector<8x32xbf16>
    %cst_80 = arith.constant dense<0.000000e+00> : vector<8x32xf32>
    %336 = tpu.matmul %335, %5, %cst_80 {dimension_numbers = #tpu.dot_dimension_numbers<[1], [0], [0], [1], [0, 0, 1, 1], [], []>} : vector<8x32xbf16>, vector<32x32xbf16>, vector<8x32xf32> -> vector<8x32xf32>
    %337 = arith.addf %336, %21 : vector<8x32xf32>
    %cst_81 = arith.constant 0.000000e+00 : f32
    %338 = vector.broadcast %cst_81 : f32 to vector<8x32xf32>
    %339 = arith.maximumf %337, %338 : vector<8x32xf32>
    %340 = arith.truncf %339 : vector<8x32xf32> to vector<8x32xbf16>
    %341 = arith.truncf %290 : vector<8x32xf32> to vector<8x32xbf16>
    %342 = tpu.concatenate %340, %341 in 1 : vector<8x32xbf16>, vector<8x32xbf16> -> vector<8x64xbf16>
    %cst_82 = arith.constant dense<0.000000e+00> : vector<8x128xf32>
    %343 = tpu.matmul %342, %13, %cst_82 {dimension_numbers = #tpu.dot_dimension_numbers<[1], [0], [0], [1], [0, 0, 1, 1], [], []>} : vector<8x64xbf16>, vector<64x128xbf16>, vector<8x128xf32> -> vector<8x128xf32>
    %344 = arith.addf %343, %36 : vector<8x128xf32>
    %345 = vector.extract_strided_slice %344 {offsets = [0, 0], sizes = [8, 96], strides = [1, 1]} : vector<8x128xf32> to vector<8x96xf32>
    %346 = arith.negf %345 : vector<8x96xf32>
    %347 = math.exp %346 : vector<8x96xf32>
    %cst_83 = arith.constant 1.000000e+00 : f32
    %348 = vector.broadcast %cst_83 : f32 to vector<8x96xf32>
    %349 = arith.addf %348, %347 : vector<8x96xf32>
    %350 = arith.divf %348, %349 : vector<8x96xf32>
    %351 = vector.extract_strided_slice %344 {offsets = [0, 96], sizes = [8, 32], strides = [1, 1]} : vector<8x128xf32> to vector<8x32xf32>
    %352 = math.tanh %351 : vector<8x32xf32>
    %353 = vector.extract_strided_slice %350 {offsets = [0, 32], sizes = [8, 32], strides = [1, 1]} : vector<8x96xf32> to vector<8x32xf32>
    %354 = arith.mulf %353, %287 : vector<8x32xf32>
    %355 = vector.extract_strided_slice %350 {offsets = [0, 0], sizes = [8, 32], strides = [1, 1]} : vector<8x96xf32> to vector<8x32xf32>
    %356 = arith.mulf %355, %352 : vector<8x32xf32>
    %357 = arith.addf %354, %356 : vector<8x32xf32>
    %358 = vector.extract_strided_slice %350 {offsets = [0, 64], sizes = [8, 32], strides = [1, 1]} : vector<8x96xf32> to vector<8x32xf32>
    %359 = math.tanh %357 : vector<8x32xf32>
    %360 = arith.mulf %358, %359 : vector<8x32xf32>
    %361 = arith.truncf %360 : vector<8x32xf32> to vector<8x32xbf16>
    %362 = arith.truncf %311 : vector<8x32xf32> to vector<8x32xbf16>
    %363 = tpu.concatenate %361, %362 in 1 : vector<8x32xbf16>, vector<8x32xbf16> -> vector<8x64xbf16>
    %cst_84 = arith.constant dense<0.000000e+00> : vector<8x128xf32>
    %364 = tpu.matmul %363, %15, %cst_84 {dimension_numbers = #tpu.dot_dimension_numbers<[1], [0], [0], [1], [0, 0, 1, 1], [], []>} : vector<8x64xbf16>, vector<64x128xbf16>, vector<8x128xf32> -> vector<8x128xf32>
    %365 = arith.addf %364, %39 : vector<8x128xf32>
    %366 = vector.extract_strided_slice %365 {offsets = [0, 0], sizes = [8, 96], strides = [1, 1]} : vector<8x128xf32> to vector<8x96xf32>
    %367 = arith.negf %366 : vector<8x96xf32>
    %368 = math.exp %367 : vector<8x96xf32>
    %cst_85 = arith.constant 1.000000e+00 : f32
    %369 = vector.broadcast %cst_85 : f32 to vector<8x96xf32>
    %370 = arith.addf %369, %368 : vector<8x96xf32>
    %371 = arith.divf %369, %370 : vector<8x96xf32>
    %372 = vector.extract_strided_slice %365 {offsets = [0, 96], sizes = [8, 32], strides = [1, 1]} : vector<8x128xf32> to vector<8x32xf32>
    %373 = math.tanh %372 : vector<8x32xf32>
    %374 = vector.extract_strided_slice %371 {offsets = [0, 32], sizes = [8, 32], strides = [1, 1]} : vector<8x96xf32> to vector<8x32xf32>
    %375 = arith.mulf %374, %308 : vector<8x32xf32>
    %376 = vector.extract_strided_slice %371 {offsets = [0, 0], sizes = [8, 32], strides = [1, 1]} : vector<8x96xf32> to vector<8x32xf32>
    %377 = arith.mulf %376, %373 : vector<8x32xf32>
    %378 = arith.addf %375, %377 : vector<8x32xf32>
    %379 = vector.extract_strided_slice %371 {offsets = [0, 64], sizes = [8, 32], strides = [1, 1]} : vector<8x96xf32> to vector<8x32xf32>
    %380 = math.tanh %378 : vector<8x32xf32>
    %381 = arith.mulf %379, %380 : vector<8x32xf32>
    %382 = arith.truncf %381 : vector<8x32xf32> to vector<8x32xbf16>
    %cst_86 = arith.constant dense<0.000000e+00> : vector<8x32xf32>
    %383 = tpu.matmul %382, %7, %cst_86 {dimension_numbers = #tpu.dot_dimension_numbers<[1], [0], [0], [1], [0, 0, 1, 1], [], []>} : vector<8x32xbf16>, vector<32x32xbf16>, vector<8x32xf32> -> vector<8x32xf32>
    %384 = arith.addf %383, %24 : vector<8x32xf32>
    %cst_87 = arith.constant 0.000000e+00 : f32
    %385 = vector.broadcast %cst_87 : f32 to vector<8x32xf32>
    %386 = arith.maximumf %384, %385 : vector<8x32xf32>
    %387 = arith.truncf %386 : vector<8x32xf32> to vector<8x32xbf16>
    %cst_88 = arith.constant dense<0.000000e+00> : vector<8x32xf32>
    %388 = tpu.matmul %387, %9, %cst_88 {dimension_numbers = #tpu.dot_dimension_numbers<[1], [0], [0], [1], [0, 0, 1, 1], [], []>} : vector<8x32xbf16>, vector<32x32xbf16>, vector<8x32xf32> -> vector<8x32xf32>
    %389 = arith.addf %388, %27 : vector<8x32xf32>
    %cst_89 = arith.constant 0.000000e+00 : f32
    %390 = vector.broadcast %cst_89 : f32 to vector<8x32xf32>
    %391 = arith.maximumf %389, %390 : vector<8x32xf32>
    %392 = arith.truncf %391 : vector<8x32xf32> to vector<8x32xbf16>
    %cst_90 = arith.constant dense<0.000000e+00> : vector<8x48xf32>
    %393 = tpu.matmul %392, %11, %cst_90 {dimension_numbers = #tpu.dot_dimension_numbers<[1], [0], [0], [1], [0, 0, 1, 1], [], []>} : vector<8x32xbf16>, vector<32x48xbf16>, vector<8x48xf32> -> vector<8x48xf32>
    %394 = vector.extract_strided_slice %393 {offsets = [0, 0], sizes = [8, 16], strides = [1, 1]} : vector<8x48xf32> to vector<8x16xf32>
    %395 = arith.addf %326, %394 : vector<8x16xf32>
    %396 = arith.addf %395, %30 : vector<8x16xf32>
    %397 = vector.extract_strided_slice %393 {offsets = [0, 16], sizes = [8, 32], strides = [1, 1]} : vector<8x48xf32> to vector<8x32xf32>
    %398 = arith.addf %329, %397 : vector<8x32xf32>
    %399 = arith.addf %398, %33 : vector<8x32xf32>
    %c0_91 = arith.constant 0 : index
    %c64 = arith.constant 64 : index
    %400 = vector.load %arg3[%c0_91, %c64] : memref<8x128xf32, #tpu.memory_space<vmem>>, vector<8x16xf32>
    tpu.vector_store %arg3[%c0_91, %c64], %396 {strides = array<i32>} : memref<8x128xf32, #tpu.memory_space<vmem>>, vector<8x16xf32>,
    %401 = vector.extract_strided_slice %43 {offsets = [40, 0], sizes = [8, 32], strides = [1, 1]} : vector<64x32xf32> to vector<8x32xf32>
    %402 = arith.addf %399, %401 : vector<8x32xf32>
    %cst_92 = arith.constant 0.000000e+00 : f32
    %403 = vector.broadcast %cst_92 : f32 to vector<8x32xf32>
    %404 = arith.maximumf %402, %403 : vector<8x32xf32>
    %405 = arith.truncf %404 : vector<8x32xf32> to vector<8x32xbf16>
    %cst_93 = arith.constant dense<0.000000e+00> : vector<8x32xf32>
    %406 = tpu.matmul %405, %5, %cst_93 {dimension_numbers = #tpu.dot_dimension_numbers<[1], [0], [0], [1], [0, 0, 1, 1], [], []>} : vector<8x32xbf16>, vector<32x32xbf16>, vector<8x32xf32> -> vector<8x32xf32>
    %407 = arith.addf %406, %21 : vector<8x32xf32>
    %cst_94 = arith.constant 0.000000e+00 : f32
    %408 = vector.broadcast %cst_94 : f32 to vector<8x32xf32>
    %409 = arith.maximumf %407, %408 : vector<8x32xf32>
    %410 = arith.truncf %409 : vector<8x32xf32> to vector<8x32xbf16>
    %411 = arith.truncf %360 : vector<8x32xf32> to vector<8x32xbf16>
    %412 = tpu.concatenate %410, %411 in 1 : vector<8x32xbf16>, vector<8x32xbf16> -> vector<8x64xbf16>
    %cst_95 = arith.constant dense<0.000000e+00> : vector<8x128xf32>
    %413 = tpu.matmul %412, %13, %cst_95 {dimension_numbers = #tpu.dot_dimension_numbers<[1], [0], [0], [1], [0, 0, 1, 1], [], []>} : vector<8x64xbf16>, vector<64x128xbf16>, vector<8x128xf32> -> vector<8x128xf32>
    %414 = arith.addf %413, %36 : vector<8x128xf32>
    %415 = vector.extract_strided_slice %414 {offsets = [0, 0], sizes = [8, 96], strides = [1, 1]} : vector<8x128xf32> to vector<8x96xf32>
    %416 = arith.negf %415 : vector<8x96xf32>
    %417 = math.exp %416 : vector<8x96xf32>
    %cst_96 = arith.constant 1.000000e+00 : f32
    %418 = vector.broadcast %cst_96 : f32 to vector<8x96xf32>
    %419 = arith.addf %418, %417 : vector<8x96xf32>
    %420 = arith.divf %418, %419 : vector<8x96xf32>
    %421 = vector.extract_strided_slice %414 {offsets = [0, 96], sizes = [8, 32], strides = [1, 1]} : vector<8x128xf32> to vector<8x32xf32>
    %422 = math.tanh %421 : vector<8x32xf32>
    %423 = vector.extract_strided_slice %420 {offsets = [0, 32], sizes = [8, 32], strides = [1, 1]} : vector<8x96xf32> to vector<8x32xf32>
    %424 = arith.mulf %423, %357 : vector<8x32xf32>
    %425 = vector.extract_strided_slice %420 {offsets = [0, 0], sizes = [8, 32], strides = [1, 1]} : vector<8x96xf32> to vector<8x32xf32>
    %426 = arith.mulf %425, %422 : vector<8x32xf32>
    %427 = arith.addf %424, %426 : vector<8x32xf32>
    %428 = vector.extract_strided_slice %420 {offsets = [0, 64], sizes = [8, 32], strides = [1, 1]} : vector<8x96xf32> to vector<8x32xf32>
    %429 = math.tanh %427 : vector<8x32xf32>
    %430 = arith.mulf %428, %429 : vector<8x32xf32>
    %431 = arith.truncf %430 : vector<8x32xf32> to vector<8x32xbf16>
    %432 = arith.truncf %381 : vector<8x32xf32> to vector<8x32xbf16>
    %433 = tpu.concatenate %431, %432 in 1 : vector<8x32xbf16>, vector<8x32xbf16> -> vector<8x64xbf16>
    %cst_97 = arith.constant dense<0.000000e+00> : vector<8x128xf32>
    %434 = tpu.matmul %433, %15, %cst_97 {dimension_numbers = #tpu.dot_dimension_numbers<[1], [0], [0], [1], [0, 0, 1, 1], [], []>} : vector<8x64xbf16>, vector<64x128xbf16>, vector<8x128xf32> -> vector<8x128xf32>
    %435 = arith.addf %434, %39 : vector<8x128xf32>
    %436 = vector.extract_strided_slice %435 {offsets = [0, 0], sizes = [8, 96], strides = [1, 1]} : vector<8x128xf32> to vector<8x96xf32>
    %437 = arith.negf %436 : vector<8x96xf32>
    %438 = math.exp %437 : vector<8x96xf32>
    %cst_98 = arith.constant 1.000000e+00 : f32
    %439 = vector.broadcast %cst_98 : f32 to vector<8x96xf32>
    %440 = arith.addf %439, %438 : vector<8x96xf32>
    %441 = arith.divf %439, %440 : vector<8x96xf32>
    %442 = vector.extract_strided_slice %435 {offsets = [0, 96], sizes = [8, 32], strides = [1, 1]} : vector<8x128xf32> to vector<8x32xf32>
    %443 = math.tanh %442 : vector<8x32xf32>
    %444 = vector.extract_strided_slice %441 {offsets = [0, 32], sizes = [8, 32], strides = [1, 1]} : vector<8x96xf32> to vector<8x32xf32>
    %445 = arith.mulf %444, %378 : vector<8x32xf32>
    %446 = vector.extract_strided_slice %441 {offsets = [0, 0], sizes = [8, 32], strides = [1, 1]} : vector<8x96xf32> to vector<8x32xf32>
    %447 = arith.mulf %446, %443 : vector<8x32xf32>
    %448 = arith.addf %445, %447 : vector<8x32xf32>
    %449 = vector.extract_strided_slice %441 {offsets = [0, 64], sizes = [8, 32], strides = [1, 1]} : vector<8x96xf32> to vector<8x32xf32>
    %450 = math.tanh %448 : vector<8x32xf32>
    %451 = arith.mulf %449, %450 : vector<8x32xf32>
    %452 = arith.truncf %451 : vector<8x32xf32> to vector<8x32xbf16>
    %cst_99 = arith.constant dense<0.000000e+00> : vector<8x32xf32>
    %453 = tpu.matmul %452, %7, %cst_99 {dimension_numbers = #tpu.dot_dimension_numbers<[1], [0], [0], [1], [0, 0, 1, 1], [], []>} : vector<8x32xbf16>, vector<32x32xbf16>, vector<8x32xf32> -> vector<8x32xf32>
    %454 = arith.addf %453, %24 : vector<8x32xf32>
    %cst_100 = arith.constant 0.000000e+00 : f32
    %455 = vector.broadcast %cst_100 : f32 to vector<8x32xf32>
    %456 = arith.maximumf %454, %455 : vector<8x32xf32>
    %457 = arith.truncf %456 : vector<8x32xf32> to vector<8x32xbf16>
    %cst_101 = arith.constant dense<0.000000e+00> : vector<8x32xf32>
    %458 = tpu.matmul %457, %9, %cst_101 {dimension_numbers = #tpu.dot_dimension_numbers<[1], [0], [0], [1], [0, 0, 1, 1], [], []>} : vector<8x32xbf16>, vector<32x32xbf16>, vector<8x32xf32> -> vector<8x32xf32>
    %459 = arith.addf %458, %27 : vector<8x32xf32>
    %cst_102 = arith.constant 0.000000e+00 : f32
    %460 = vector.broadcast %cst_102 : f32 to vector<8x32xf32>
    %461 = arith.maximumf %459, %460 : vector<8x32xf32>
    %462 = arith.truncf %461 : vector<8x32xf32> to vector<8x32xbf16>
    %cst_103 = arith.constant dense<0.000000e+00> : vector<8x48xf32>
    %463 = tpu.matmul %462, %11, %cst_103 {dimension_numbers = #tpu.dot_dimension_numbers<[1], [0], [0], [1], [0, 0, 1, 1], [], []>} : vector<8x32xbf16>, vector<32x48xbf16>, vector<8x48xf32> -> vector<8x48xf32>
    %464 = vector.extract_strided_slice %463 {offsets = [0, 0], sizes = [8, 16], strides = [1, 1]} : vector<8x48xf32> to vector<8x16xf32>
    %465 = arith.addf %396, %464 : vector<8x16xf32>
    %466 = arith.addf %465, %30 : vector<8x16xf32>
    %467 = vector.extract_strided_slice %463 {offsets = [0, 16], sizes = [8, 32], strides = [1, 1]} : vector<8x48xf32> to vector<8x32xf32>
    %468 = arith.addf %399, %467 : vector<8x32xf32>
    %469 = arith.addf %468, %33 : vector<8x32xf32>
    %c0_104 = arith.constant 0 : index
    %c80 = arith.constant 80 : index
    %470 = vector.load %arg3[%c0_104, %c80] : memref<8x128xf32, #tpu.memory_space<vmem>>, vector<8x16xf32>
    tpu.vector_store %arg3[%c0_104, %c80], %466 {strides = array<i32>} : memref<8x128xf32, #tpu.memory_space<vmem>>, vector<8x16xf32>,
    %471 = vector.extract_strided_slice %43 {offsets = [48, 0], sizes = [8, 32], strides = [1, 1]} : vector<64x32xf32> to vector<8x32xf32>
    %472 = arith.addf %469, %471 : vector<8x32xf32>
    %cst_105 = arith.constant 0.000000e+00 : f32
    %473 = vector.broadcast %cst_105 : f32 to vector<8x32xf32>
    %474 = arith.maximumf %472, %473 : vector<8x32xf32>
    %475 = arith.truncf %474 : vector<8x32xf32> to vector<8x32xbf16>
    %cst_106 = arith.constant dense<0.000000e+00> : vector<8x32xf32>
    %476 = tpu.matmul %475, %5, %cst_106 {dimension_numbers = #tpu.dot_dimension_numbers<[1], [0], [0], [1], [0, 0, 1, 1], [], []>} : vector<8x32xbf16>, vector<32x32xbf16>, vector<8x32xf32> -> vector<8x32xf32>
    %477 = arith.addf %476, %21 : vector<8x32xf32>
    %cst_107 = arith.constant 0.000000e+00 : f32
    %478 = vector.broadcast %cst_107 : f32 to vector<8x32xf32>
    %479 = arith.maximumf %477, %478 : vector<8x32xf32>
    %480 = arith.truncf %479 : vector<8x32xf32> to vector<8x32xbf16>
    %481 = arith.truncf %430 : vector<8x32xf32> to vector<8x32xbf16>
    %482 = tpu.concatenate %480, %481 in 1 : vector<8x32xbf16>, vector<8x32xbf16> -> vector<8x64xbf16>
    %cst_108 = arith.constant dense<0.000000e+00> : vector<8x128xf32>
    %483 = tpu.matmul %482, %13, %cst_108 {dimension_numbers = #tpu.dot_dimension_numbers<[1], [0], [0], [1], [0, 0, 1, 1], [], []>} : vector<8x64xbf16>, vector<64x128xbf16>, vector<8x128xf32> -> vector<8x128xf32>
    %484 = arith.addf %483, %36 : vector<8x128xf32>
    %485 = vector.extract_strided_slice %484 {offsets = [0, 0], sizes = [8, 96], strides = [1, 1]} : vector<8x128xf32> to vector<8x96xf32>
    %486 = arith.negf %485 : vector<8x96xf32>
    %487 = math.exp %486 : vector<8x96xf32>
    %cst_109 = arith.constant 1.000000e+00 : f32
    %488 = vector.broadcast %cst_109 : f32 to vector<8x96xf32>
    %489 = arith.addf %488, %487 : vector<8x96xf32>
    %490 = arith.divf %488, %489 : vector<8x96xf32>
    %491 = vector.extract_strided_slice %484 {offsets = [0, 96], sizes = [8, 32], strides = [1, 1]} : vector<8x128xf32> to vector<8x32xf32>
    %492 = math.tanh %491 : vector<8x32xf32>
    %493 = vector.extract_strided_slice %490 {offsets = [0, 32], sizes = [8, 32], strides = [1, 1]} : vector<8x96xf32> to vector<8x32xf32>
    %494 = arith.mulf %493, %427 : vector<8x32xf32>
    %495 = vector.extract_strided_slice %490 {offsets = [0, 0], sizes = [8, 32], strides = [1, 1]} : vector<8x96xf32> to vector<8x32xf32>
    %496 = arith.mulf %495, %492 : vector<8x32xf32>
    %497 = arith.addf %494, %496 : vector<8x32xf32>
    %498 = vector.extract_strided_slice %490 {offsets = [0, 64], sizes = [8, 32], strides = [1, 1]} : vector<8x96xf32> to vector<8x32xf32>
    %499 = math.tanh %497 : vector<8x32xf32>
    %500 = arith.mulf %498, %499 : vector<8x32xf32>
    %501 = arith.truncf %500 : vector<8x32xf32> to vector<8x32xbf16>
    %502 = arith.truncf %451 : vector<8x32xf32> to vector<8x32xbf16>
    %503 = tpu.concatenate %501, %502 in 1 : vector<8x32xbf16>, vector<8x32xbf16> -> vector<8x64xbf16>
    %cst_110 = arith.constant dense<0.000000e+00> : vector<8x128xf32>
    %504 = tpu.matmul %503, %15, %cst_110 {dimension_numbers = #tpu.dot_dimension_numbers<[1], [0], [0], [1], [0, 0, 1, 1], [], []>} : vector<8x64xbf16>, vector<64x128xbf16>, vector<8x128xf32> -> vector<8x128xf32>
    %505 = arith.addf %504, %39 : vector<8x128xf32>
    %506 = vector.extract_strided_slice %505 {offsets = [0, 0], sizes = [8, 96], strides = [1, 1]} : vector<8x128xf32> to vector<8x96xf32>
    %507 = arith.negf %506 : vector<8x96xf32>
    %508 = math.exp %507 : vector<8x96xf32>
    %cst_111 = arith.constant 1.000000e+00 : f32
    %509 = vector.broadcast %cst_111 : f32 to vector<8x96xf32>
    %510 = arith.addf %509, %508 : vector<8x96xf32>
    %511 = arith.divf %509, %510 : vector<8x96xf32>
    %512 = vector.extract_strided_slice %505 {offsets = [0, 96], sizes = [8, 32], strides = [1, 1]} : vector<8x128xf32> to vector<8x32xf32>
    %513 = math.tanh %512 : vector<8x32xf32>
    %514 = vector.extract_strided_slice %511 {offsets = [0, 32], sizes = [8, 32], strides = [1, 1]} : vector<8x96xf32> to vector<8x32xf32>
    %515 = arith.mulf %514, %448 : vector<8x32xf32>
    %516 = vector.extract_strided_slice %511 {offsets = [0, 0], sizes = [8, 32], strides = [1, 1]} : vector<8x96xf32> to vector<8x32xf32>
    %517 = arith.mulf %516, %513 : vector<8x32xf32>
    %518 = arith.addf %515, %517 : vector<8x32xf32>
    %519 = vector.extract_strided_slice %511 {offsets = [0, 64], sizes = [8, 32], strides = [1, 1]} : vector<8x96xf32> to vector<8x32xf32>
    %520 = math.tanh %518 : vector<8x32xf32>
    %521 = arith.mulf %519, %520 : vector<8x32xf32>
    %522 = arith.truncf %521 : vector<8x32xf32> to vector<8x32xbf16>
    %cst_112 = arith.constant dense<0.000000e+00> : vector<8x32xf32>
    %523 = tpu.matmul %522, %7, %cst_112 {dimension_numbers = #tpu.dot_dimension_numbers<[1], [0], [0], [1], [0, 0, 1, 1], [], []>} : vector<8x32xbf16>, vector<32x32xbf16>, vector<8x32xf32> -> vector<8x32xf32>
    %524 = arith.addf %523, %24 : vector<8x32xf32>
    %cst_113 = arith.constant 0.000000e+00 : f32
    %525 = vector.broadcast %cst_113 : f32 to vector<8x32xf32>
    %526 = arith.maximumf %524, %525 : vector<8x32xf32>
    %527 = arith.truncf %526 : vector<8x32xf32> to vector<8x32xbf16>
    %cst_114 = arith.constant dense<0.000000e+00> : vector<8x32xf32>
    %528 = tpu.matmul %527, %9, %cst_114 {dimension_numbers = #tpu.dot_dimension_numbers<[1], [0], [0], [1], [0, 0, 1, 1], [], []>} : vector<8x32xbf16>, vector<32x32xbf16>, vector<8x32xf32> -> vector<8x32xf32>
    %529 = arith.addf %528, %27 : vector<8x32xf32>
    %cst_115 = arith.constant 0.000000e+00 : f32
    %530 = vector.broadcast %cst_115 : f32 to vector<8x32xf32>
    %531 = arith.maximumf %529, %530 : vector<8x32xf32>
    %532 = arith.truncf %531 : vector<8x32xf32> to vector<8x32xbf16>
    %cst_116 = arith.constant dense<0.000000e+00> : vector<8x48xf32>
    %533 = tpu.matmul %532, %11, %cst_116 {dimension_numbers = #tpu.dot_dimension_numbers<[1], [0], [0], [1], [0, 0, 1, 1], [], []>} : vector<8x32xbf16>, vector<32x48xbf16>, vector<8x48xf32> -> vector<8x48xf32>
    %534 = vector.extract_strided_slice %533 {offsets = [0, 0], sizes = [8, 16], strides = [1, 1]} : vector<8x48xf32> to vector<8x16xf32>
    %535 = arith.addf %466, %534 : vector<8x16xf32>
    %536 = arith.addf %535, %30 : vector<8x16xf32>
    %537 = vector.extract_strided_slice %533 {offsets = [0, 16], sizes = [8, 32], strides = [1, 1]} : vector<8x48xf32> to vector<8x32xf32>
    %538 = arith.addf %469, %537 : vector<8x32xf32>
    %539 = arith.addf %538, %33 : vector<8x32xf32>
    %c0_117 = arith.constant 0 : index
    %c96 = arith.constant 96 : index
    %540 = vector.load %arg3[%c0_117, %c96] : memref<8x128xf32, #tpu.memory_space<vmem>>, vector<8x16xf32>
    tpu.vector_store %arg3[%c0_117, %c96], %536 {strides = array<i32>} : memref<8x128xf32, #tpu.memory_space<vmem>>, vector<8x16xf32>,
    %541 = vector.extract_strided_slice %43 {offsets = [56, 0], sizes = [8, 32], strides = [1, 1]} : vector<64x32xf32> to vector<8x32xf32>
    %542 = arith.addf %539, %541 : vector<8x32xf32>
    %cst_118 = arith.constant 0.000000e+00 : f32
    %543 = vector.broadcast %cst_118 : f32 to vector<8x32xf32>
    %544 = arith.maximumf %542, %543 : vector<8x32xf32>
    %545 = arith.truncf %544 : vector<8x32xf32> to vector<8x32xbf16>
    %cst_119 = arith.constant dense<0.000000e+00> : vector<8x32xf32>
    %546 = tpu.matmul %545, %5, %cst_119 {dimension_numbers = #tpu.dot_dimension_numbers<[1], [0], [0], [1], [0, 0, 1, 1], [], []>} : vector<8x32xbf16>, vector<32x32xbf16>, vector<8x32xf32> -> vector<8x32xf32>
    %547 = arith.addf %546, %21 : vector<8x32xf32>
    %cst_120 = arith.constant 0.000000e+00 : f32
    %548 = vector.broadcast %cst_120 : f32 to vector<8x32xf32>
    %549 = arith.maximumf %547, %548 : vector<8x32xf32>
    %550 = arith.truncf %549 : vector<8x32xf32> to vector<8x32xbf16>
    %551 = arith.truncf %500 : vector<8x32xf32> to vector<8x32xbf16>
    %552 = tpu.concatenate %550, %551 in 1 : vector<8x32xbf16>, vector<8x32xbf16> -> vector<8x64xbf16>
    %cst_121 = arith.constant dense<0.000000e+00> : vector<8x128xf32>
    %553 = tpu.matmul %552, %13, %cst_121 {dimension_numbers = #tpu.dot_dimension_numbers<[1], [0], [0], [1], [0, 0, 1, 1], [], []>} : vector<8x64xbf16>, vector<64x128xbf16>, vector<8x128xf32> -> vector<8x128xf32>
    %554 = arith.addf %553, %36 : vector<8x128xf32>
    %555 = vector.extract_strided_slice %554 {offsets = [0, 0], sizes = [8, 96], strides = [1, 1]} : vector<8x128xf32> to vector<8x96xf32>
    %556 = arith.negf %555 : vector<8x96xf32>
    %557 = math.exp %556 : vector<8x96xf32>
    %cst_122 = arith.constant 1.000000e+00 : f32
    %558 = vector.broadcast %cst_122 : f32 to vector<8x96xf32>
    %559 = arith.addf %558, %557 : vector<8x96xf32>
    %560 = arith.divf %558, %559 : vector<8x96xf32>
    %561 = vector.extract_strided_slice %554 {offsets = [0, 96], sizes = [8, 32], strides = [1, 1]} : vector<8x128xf32> to vector<8x32xf32>
    %562 = math.tanh %561 : vector<8x32xf32>
    %563 = vector.extract_strided_slice %560 {offsets = [0, 32], sizes = [8, 32], strides = [1, 1]} : vector<8x96xf32> to vector<8x32xf32>
    %564 = arith.mulf %563, %497 : vector<8x32xf32>
    %565 = vector.extract_strided_slice %560 {offsets = [0, 0], sizes = [8, 32], strides = [1, 1]} : vector<8x96xf32> to vector<8x32xf32>
    %566 = arith.mulf %565, %562 : vector<8x32xf32>
    %567 = arith.addf %564, %566 : vector<8x32xf32>
    %568 = vector.extract_strided_slice %560 {offsets = [0, 64], sizes = [8, 32], strides = [1, 1]} : vector<8x96xf32> to vector<8x32xf32>
    %569 = math.tanh %567 : vector<8x32xf32>
    %570 = arith.mulf %568, %569 : vector<8x32xf32>
    %571 = arith.truncf %570 : vector<8x32xf32> to vector<8x32xbf16>
    %572 = arith.truncf %521 : vector<8x32xf32> to vector<8x32xbf16>
    %573 = tpu.concatenate %571, %572 in 1 : vector<8x32xbf16>, vector<8x32xbf16> -> vector<8x64xbf16>
    %cst_123 = arith.constant dense<0.000000e+00> : vector<8x128xf32>
    %574 = tpu.matmul %573, %15, %cst_123 {dimension_numbers = #tpu.dot_dimension_numbers<[1], [0], [0], [1], [0, 0, 1, 1], [], []>} : vector<8x64xbf16>, vector<64x128xbf16>, vector<8x128xf32> -> vector<8x128xf32>
    %575 = arith.addf %574, %39 : vector<8x128xf32>
    %576 = vector.extract_strided_slice %575 {offsets = [0, 0], sizes = [8, 96], strides = [1, 1]} : vector<8x128xf32> to vector<8x96xf32>
    %577 = arith.negf %576 : vector<8x96xf32>
    %578 = math.exp %577 : vector<8x96xf32>
    %cst_124 = arith.constant 1.000000e+00 : f32
    %579 = vector.broadcast %cst_124 : f32 to vector<8x96xf32>
    %580 = arith.addf %579, %578 : vector<8x96xf32>
    %581 = arith.divf %579, %580 : vector<8x96xf32>
    %582 = vector.extract_strided_slice %575 {offsets = [0, 96], sizes = [8, 32], strides = [1, 1]} : vector<8x128xf32> to vector<8x32xf32>
    %583 = math.tanh %582 : vector<8x32xf32>
    %584 = vector.extract_strided_slice %581 {offsets = [0, 32], sizes = [8, 32], strides = [1, 1]} : vector<8x96xf32> to vector<8x32xf32>
    %585 = arith.mulf %584, %518 : vector<8x32xf32>
    %586 = vector.extract_strided_slice %581 {offsets = [0, 0], sizes = [8, 32], strides = [1, 1]} : vector<8x96xf32> to vector<8x32xf32>
    %587 = arith.mulf %586, %583 : vector<8x32xf32>
    %588 = arith.addf %585, %587 : vector<8x32xf32>
    %589 = vector.extract_strided_slice %581 {offsets = [0, 64], sizes = [8, 32], strides = [1, 1]} : vector<8x96xf32> to vector<8x32xf32>
    %590 = math.tanh %588 : vector<8x32xf32>
    %591 = arith.mulf %589, %590 : vector<8x32xf32>
    %592 = arith.truncf %591 : vector<8x32xf32> to vector<8x32xbf16>
    %cst_125 = arith.constant dense<0.000000e+00> : vector<8x32xf32>
    %593 = tpu.matmul %592, %7, %cst_125 {dimension_numbers = #tpu.dot_dimension_numbers<[1], [0], [0], [1], [0, 0, 1, 1], [], []>} : vector<8x32xbf16>, vector<32x32xbf16>, vector<8x32xf32> -> vector<8x32xf32>
    %594 = arith.addf %593, %24 : vector<8x32xf32>
    %cst_126 = arith.constant 0.000000e+00 : f32
    %595 = vector.broadcast %cst_126 : f32 to vector<8x32xf32>
    %596 = arith.maximumf %594, %595 : vector<8x32xf32>
    %597 = arith.truncf %596 : vector<8x32xf32> to vector<8x32xbf16>
    %cst_127 = arith.constant dense<0.000000e+00> : vector<8x32xf32>
    %598 = tpu.matmul %597, %9, %cst_127 {dimension_numbers = #tpu.dot_dimension_numbers<[1], [0], [0], [1], [0, 0, 1, 1], [], []>} : vector<8x32xbf16>, vector<32x32xbf16>, vector<8x32xf32> -> vector<8x32xf32>
    %599 = arith.addf %598, %27 : vector<8x32xf32>
    %cst_128 = arith.constant 0.000000e+00 : f32
    %600 = vector.broadcast %cst_128 : f32 to vector<8x32xf32>
    %601 = arith.maximumf %599, %600 : vector<8x32xf32>
    %602 = arith.truncf %601 : vector<8x32xf32> to vector<8x32xbf16>
    %cst_129 = arith.constant dense<0.000000e+00> : vector<8x48xf32>
    %603 = tpu.matmul %602, %11, %cst_129 {dimension_numbers = #tpu.dot_dimension_numbers<[1], [0], [0], [1], [0, 0, 1, 1], [], []>} : vector<8x32xbf16>, vector<32x48xbf16>, vector<8x48xf32> -> vector<8x48xf32>
    %604 = vector.extract_strided_slice %603 {offsets = [0, 0], sizes = [8, 16], strides = [1, 1]} : vector<8x48xf32> to vector<8x16xf32>
    %605 = arith.addf %536, %604 : vector<8x16xf32>
    %606 = arith.addf %605, %30 : vector<8x16xf32>
    %c0_130 = arith.constant 0 : index
    %c112 = arith.constant 112 : index
    %607 = vector.load %arg3[%c0_130, %c112] : memref<8x128xf32, #tpu.memory_space<vmem>>, vector<8x16xf32>
    tpu.vector_store %arg3[%c0_130, %c112], %606 {strides = array<i32>} : memref<8x128xf32, #tpu.memory_space<vmem>>, vector<8x16xf32>,
    return
  }
}

</mosaic_0001>

<llo_original>
// kernel: seqnn_forward.1
$region0: #{seqnn_forward.1}
  #allocation0 [shape = 'u32[]', space=smem, size = 0x4, offset = 0x4, fixed_abs, tag = 'smem constant byte address 0x4 - core index']
  #allocation1 [shape = 'u32[144,128]{1,0:T(1,128)}', space=vmem, size = 0x12000, scoped, tag = 'internal scratch']
  %s0 = inlined_call_operand.hbm [shape: f32[8,16], index: 0, kind: input, shape index: {}]
  %s1 = inlined_call_operand.hbm [shape: f32[64,8], index: 1, kind: input, shape index: {}]
  %s2 = inlined_call_operand.hbm [shape: f32[288,128], index: 2, kind: input, shape index: {}]
  %s3 = inlined_call_operand.vmem [shape: f32[8,128], index: 3, kind: output, shape index: {}]
  %s4 = sld [smem:[#allocation0]]
  $region34: #{seqnn_forward.1} parent=0
    _
  %s6 = ssub.s32 1, %s4
  %s7 = scalar_select 0, %s6, %s4
  $region1: #{seqnn_forward.1} parent=0
    #allocation2 [shape = 'u8[4096]{0}', space=vmem, size = 0x1000, scoped, tag = 'input window, operand 0, single buffered']
    #allocation3 [shape = 's32[1]{0}', space=sflag, size = 0x4, scoped, tag = 'scoped memory for seqnn_forward.1']
    #allocation4 [shape = 'u8[32768]{0}', space=vmem, size = 0x8000, scoped, tag = 'input window, operand 1, single buffered']
    #allocation5 [shape = 's32[1]{0}', space=sflag, size = 0x4, scoped, tag = 'scoped memory for seqnn_forward.1']
    #allocation6 [shape = 'u8[147456]{0}', space=vmem, size = 0x24000, scoped, tag = 'input window, operand 2, single buffered']
    %8 = vsyncpa [#allocation3], 0
    %9 = vsyncpa [#allocation5], 0
    // Predicated region
    $region2: #{seqnn_forward.1} parent=1 // pred_check
      _
    $region3: #{seqnn_forward.1} parent=1 // pred_check_branch
      %11 = sbr.rel (0) target = $region5
    $region4: #{seqnn_forward.1} parent=1 // pred_region
      %s13 = ssub.s32 128, 128
      %14 = vsyncadd [#allocation3], %s13
      %s16 = sshll.u32 [#allocation2], 4
      %s17 = int_to_ptr.vmem [resolvable:$true] %s16
      %19 = dma.hbm_to_vmem [thread:$0]  %s0, 128, %s17, [#allocation3]
    $region5: #{seqnn_forward.1} parent=1 // pred_fallthru
      _
    // Predicated region
    $region6: #{seqnn_forward.1} parent=1 // pred_check
      _
    $region7: #{seqnn_forward.1} parent=1 // pred_check_branch
      %21 = sbr.rel (0) target = $region9
    $region8: #{seqnn_forward.1} parent=1 // pred_region
      %s23 = ssub.s32 1024, 1024
      %24 = vsyncadd [#allocation5], %s23
      %s25 = sshll.u32 [#allocation4], 4
      %s26 = int_to_ptr.vmem [resolvable:$true] %s25
      %31 = dma.hbm_to_vmem [thread:$0]  %s1, 1024, %s26, [#allocation5], 128, 128, 8
    $region9: #{seqnn_forward.1} parent=1 // pred_fallthru
      _
    // Predicated region
    $region10: #{seqnn_forward.1} parent=1 // pred_check
      _
    $region11: #{seqnn_forward.1} parent=1 // pred_check_branch
      %33 = sbr.rel (0) target = $region13
    $region12: #{seqnn_forward.1} parent=1 // pred_region
      %s35 = ssub.s32 4608, 4608
      %36 = vsyncadd [#allocation5], %s35
      %s37 = sshll.u32 [#allocation6], 4
      %s38 = int_to_ptr.vmem [resolvable:$true] %s37
      %43 = dma.hbm_to_vmem [thread:$0]  %s2, 4608, %s38, [#allocation5], 128, 128, 8
    $region13: #{seqnn_forward.1} parent=1 // pred_fallthru
      _
    // Predicated region
    $region14: #{seqnn_forward.1} parent=1 // pred_check
      _
    $region15: #{seqnn_forward.1} parent=1 // pred_check_branch
      %45 = sbr.rel (0) target = $region17
    $region16: #{seqnn_forward.1} parent=1 // pred_region
      %46 = dma.done [#allocation3], 128
    $region17: #{seqnn_forward.1} parent=1 // pred_fallthru
      _
    // Predicated region
    $region18: #{seqnn_forward.1} parent=1 // pred_check
      _
    $region19: #{seqnn_forward.1} parent=1 // pred_check_branch
      %48 = sbr.rel (0) target = $region21
    $region20: #{seqnn_forward.1} parent=1 // pred_region
      %49 = dma.done [#allocation5], 1024
    $region21: #{seqnn_forward.1} parent=1 // pred_fallthru
      _
    // Predicated region
    $region22: #{seqnn_forward.1} parent=1 // pred_check
      _
    $region23: #{seqnn_forward.1} parent=1 // pred_check_branch
      %51 = sbr.rel (0) target = $region25
    $region24: #{seqnn_forward.1} parent=1 // pred_region
      %52 = dma.done [#allocation5], 4608
    $region25: #{seqnn_forward.1} parent=1 // pred_fallthru
      _
    %v54 = vld [vmem:[#allocation6] sm:$0xff]
    %v55 = vld [vmem:[#allocation6 + $0x8] sm:$0xff]
    %v56 = vpack.c.bf16 %v55, %v54
    %v57 = vld [vmem:[#allocation6 + $0x10] sm:$0xff]
    %v58 = vpack.c.bf16 %v57, %v57
    %v59 = vld [vmem:[#allocation6 + $0x18] sm:$0xff]
    %v60 = vld [vmem:[#allocation6 + $0x20] sm:$0xff]
    %v61 = vld [vmem:[#allocation6 + $0x28] sm:$0xff]
    %v62 = vld [vmem:[#allocation6 + $0x30] sm:$0xff]
    %v63 = vpack.c.bf16 %v60, %v59
    %v64 = vpack.c.bf16 %v62, %v61
    %v65 = vld [vmem:[#allocation6 + $0x38] sm:$0xff]
    %v66 = vld [vmem:[#allocation6 + $0x40] sm:$0xff]
    %v67 = vld [vmem:[#allocation6 + $0x48] sm:$0xff]
    %v68 = vld [vmem:[#allocation6 + $0x50] sm:$0xff]
    %v69 = vpack.c.bf16 %v66, %v65
    %v70 = vpack.c.bf16 %v68, %v67
    %v71 = vld [vmem:[#allocation6 + $0x58] sm:$0xff]
    %v72 = vld [vmem:[#allocation6 + $0x60] sm:$0xff]
    %v73 = vld [vmem:[#allocation6 + $0x68] sm:$0xff]
    %v74 = vld [vmem:[#allocation6 + $0x70] sm:$0xff]
    %v75 = vpack.c.bf16 %v72, %v71
    %v76 = vpack.c.bf16 %v74, %v73
    %v77 = vld [vmem:[#allocation6 + $0x78] sm:$0xff]
    %v78 = vld [vmem:[#allocation6 + $0x80] sm:$0xff]
    %v79 = vld [vmem:[#allocation6 + $0x88] sm:$0xff]
    %v80 = vld [vmem:[#allocation6 + $0x90] sm:$0xff]
    %v81 = vpack.c.bf16 %v78, %v77
    %v82 = vpack.c.bf16 %v80, %v79
    %v83 = vld [vmem:[#allocation6 + $0x98] sm:$0xff]
    %v84 = vld [vmem:[#allocation6 + $0xa0] sm:$0xff]
    %v85 = vld [vmem:[#allocation6 + $0xa8] sm:$0xff]
    %v86 = vld [vmem:[#allocation6 + $0xb0] sm:$0xff]
    %v87 = vld [vmem:[#allocation6 + $0xb8] sm:$0xff]
    %v88 = vld [vmem:[#allocation6 + $0xc0] sm:$0xff]
    %v89 = vld [vmem:[#allocation6 + $0xc8] sm:$0xff]
    %v90 = vld [vmem:[#allocation6 + $0xd0] sm:$0xff]
    %v91 = vpack.c.bf16 %v84, %v83
    %v92 = vpack.c.bf16 %v86, %v85
    %v93 = vpack.c.bf16 %v88, %v87
    %v94 = vpack.c.bf16 %v90, %v89
    %v95 = vld [vmem:[#allocation6 + $0xd8] sm:$0xff]
    %v96 = vld [vmem:[#allocation6 + $0xe0] sm:$0xff]
    %v97 = vld [vmem:[#allocation6 + $0xe8] sm:$0xff]
    %v98 = vld [vmem:[#allocation6 + $0xf0] sm:$0xff]
    %v99 = vld [vmem:[#allocation6 + $0xf8] sm:$0xff]
    %v100 = vld [vmem:[#allocation6 + $0x100] sm:$0xff]
    %v101 = vld [vmem:[#allocation6 + $0x108] sm:$0xff]
    %v102 = vld [vmem:[#allocation6 + $0x110] sm:$0xff]
    %v103 = vpack.c.bf16 %v96, %v95
    %v104 = vpack.c.bf16 %v98, %v97
    %v105 = vpack.c.bf16 %v100, %v99
    %v106 = vpack.c.bf16 %v102, %v101
    %v107 = vld [vmem:[#allocation6 + $0x118] sm:$0x1]
    %v108 = vlaneseq
    %v109 = vshrl.u32 %v108, 7
    %v110 = vsub.s32 0, %v109
    %v111 = vrot.slane %v107, %v110
    %v112 = vld [vmem:[#allocation6 + $0x119] sm:$0x1]
    %v113 = vlaneseq
    %v114 = vshrl.u32 %v113, 7
    %v115 = vsub.s32 0, %v114
    %v116 = vrot.slane %v112, %v115
    %v117 = vld [vmem:[#allocation6 + $0x11a] sm:$0x1]
    %v118 = vlaneseq
    %v119 = vshrl.u32 %v118, 7
    %v120 = vsub.s32 0, %v119
    %v121 = vrot.slane %v117, %v120
    %v122 = vld [vmem:[#allocation6 + $0x11b] sm:$0x1]
    %v123 = vlaneseq
    %v124 = vshrl.u32 %v123, 7
    %v125 = vsub.s32 0, %v124
    %v126 = vrot.slane %v122, %v125
    %v127 = vld [vmem:[#allocation6 + $0x11c] sm:$0x1]
    %v128 = vlaneseq
    %v129 = vshrl.u32 %v128, 7
    %v130 = vsub.s32 0, %v129
    %v131 = vrot.slane %v127, %v130
    %v132 = vld [vmem:[#allocation6 + $0x11d] sm:$0x1]
    %v133 = vlaneseq
    %v134 = vshrl.u32 %v133, 7
    %v135 = vsub.s32 0, %v134
    %v136 = vrot.slane %v132, %v135
    %v137 = vld [vmem:[#allocation6 + $0x11e] sm:$0x1]
    %v138 = vlaneseq
    %v139 = vshrl.u32 %v138, 7
    %v140 = vsub.s32 0, %v139
    %v141 = vrot.slane %v137, %v140
    %v142 = vld [vmem:[#allocation6 + $0x11f] sm:$0x1]
    %v143 = vlaneseq
    %v144 = vshrl.u32 %v143, 7
    %v145 = vsub.s32 0, %v144
    %v146 = vrot.slane %v142, %v145
    %v147 = vld [vmem:[#allocation4] sm:$0xff]
    %v148 = vld [vmem:[#allocation4 + $0x8] sm:$0xff]
    %v149 = vld [vmem:[#allocation4 + $0x10] sm:$0xff]
    %v150 = vld [vmem:[#allocation4 + $0x18] sm:$0xff]
    %v151 = vld [vmem:[#allocation4 + $0x20] sm:$0xff]
    %v152 = vld [vmem:[#allocation4 + $0x28] sm:$0xff]
    %v153 = vld [vmem:[#allocation4 + $0x30] sm:$0xff]
    %v154 = vld [vmem:[#allocation4 + $0x38] sm:$0xff]
    %v155 = vpack.c.bf16 %v148, %v147
    %v156 = vpack.c.bf16 %v150, %v149
    %v157 = vpack.c.bf16 %v152, %v151
    %v158 = vpack.c.bf16 %v154, %v153
    %vm159 = vcmask 64512
    %v161 = vsel %vm159, %v155, 0
    %v164 = vsel %vm159, %v156, 0
    %v167 = vsel %vm159, %v157, 0
    %v170 = vsel %vm159, %v158, 0
    %vm172 = vcmask 1043456
    %v174 = vsel %vm172, %v58, 0
    %176 = vmatprep.subr.bf16.mxu0 0
    %177 = vmatpush1.bf16.msra.mxu0 %v174
    %178 = vmatprep.subr.bf16.mxu0 0
    %179 = vmatpush1.bf16.msra.mxu0 0
    %180 = vmatprep.subr.bf16.mxu0 0
    %181 = vmatpush1.bf16.msra.mxu0 0
    %182 = vmatprep.subr.bf16.mxu0 0
    %183 = vmatpush1.bf16.msra.mxu0 0
    %184 = vmatprep.subr.bf16.mxu0 0
    %185 = vmatpush1.bf16.msra.mxu0 0
    %186 = vmatprep.subr.bf16.mxu0 0
    %187 = vmatpush1.bf16.msra.mxu0 0
    %188 = vmatprep.subr.bf16.mxu0 0
    %189 = vmatpush1.bf16.msra.mxu0 0
    %190 = vmatprep.subr.bf16.mxu0 0
    %191 = vmatpush1.bf16.msra.mxu0 0
    %192 = vmatprep.subr.bf16.mxu0 0
    %193 = vmatpush1.bf16.msra.mxu0 0
    %194 = vmatprep.subr.bf16.mxu0 0
    %195 = vmatpush1.bf16.msra.mxu0 0
    %196 = vmatprep.subr.bf16.mxu0 0
    %197 = vmatpush1.bf16.msra.mxu0 0
    %198 = vmatprep.subr.bf16.mxu0 0
    %199 = vmatpush1.bf16.msra.mxu0 0
    %200 = vmatprep.subr.bf16.mxu0 0
    %201 = vmatpush1.bf16.msra.mxu0 0
    %202 = vmatprep.subr.bf16.mxu0 0
    %203 = vmatpush1.bf16.msra.mxu0 0
    %204 = vmatprep.subr.bf16.mxu0 0
    %205 = vmatpush1.bf16.msra.mxu0 0
    %206 = vmatprep.subr.bf16.mxu0 0
    %207 = vmatpush1.bf16.msra.mxu0 0
    %208 = vmatprep.mubr.bf16.mxu0 0
    %209 = vmatmul.mubr.bf16.gmra.mrb[0].mxu0 %v161
    %v210 = vpop.f32.mrb[0].mxu0
    %v211 = vadd.f32 %v111, %v210
    %v212 = vpop.f32.mrb[0].mxu0
    %v213 = vpop.f32.mrb[0].mxu0
    %v214 = vadd.f32 %v111, %v213
    %v215 = vpop.f32.mrb[0].mxu0
    %216 = vmatprep.mubr.bf16.mxu0 0
    %217 = vmatmul.mubr.bf16.gmra.mrb[0].mxu0 %v164
    %v218 = vpop.f32.mrb[0].mxu0
    %v219 = vadd.f32 %v111, %v218
    %v220 = vpop.f32.mrb[0].mxu0
    %v221 = vpop.f32.mrb[0].mxu0
    %v222 = vadd.f32 %v111, %v221
    %v223 = vpop.f32.mrb[0].mxu0
    %224 = vmatprep.mubr.bf16.mxu0 0
    %225 = vmatmul.mubr.bf16.gmra.mrb[0].mxu0 %v167
    %v226 = vpop.f32.mrb[0].mxu0
    %v227 = vadd.f32 %v111, %v226
    %v228 = vpop.f32.mrb[0].mxu0
    %v229 = vpop.f32.mrb[0].mxu0
    %v230 = vadd.f32 %v111, %v229
    %v231 = vpop.f32.mrb[0].mxu0
    %232 = vmatprep.mubr.bf16.mxu0 0
    %233 = vmatmul.mubr.bf16.gmra.mrb[0].mxu0 %v170
    %v234 = vpop.f32.mrb[0].mxu0
    %v235 = vadd.f32 %v111, %v234
    %v236 = vpop.f32.mrb[0].mxu0
    %v237 = vpop.f32.mrb[0].mxu0
    %v238 = vadd.f32 %v111, %v237
    %v239 = vpop.f32.mrb[0].mxu0
    %240 = vdwg.mxu0
    %v241 = vld [vmem:[#allocation2] sm:$0xff]
    %v242 = vpack.c.bf16 %v241, %v241
    %vm243 = vcmask 130048
    %v245 = vsel %vm243, %v242, 0
    %247 = vmatprep.subr.bf16.mxu0 0
    %248 = vmatpush1.bf16.msra.mxu0 %v56
    %249 = vmatprep.subr.bf16.mxu0 0
    %250 = vmatpush1.bf16.msra.mxu0 0
    %251 = vmatprep.subr.bf16.mxu0 0
    %252 = vmatpush1.bf16.msra.mxu0 0
    %253 = vmatprep.subr.bf16.mxu0 0
    %254 = vmatpush1.bf16.msra.mxu0 0
    %255 = vmatprep.subr.bf16.mxu0 0
    %256 = vmatpush1.bf16.msra.mxu0 0
    %257 = vmatprep.subr.bf16.mxu0 0
    %258 = vmatpush1.bf16.msra.mxu0 0
    %259 = vmatprep.subr.bf16.mxu0 0
    %260 = vmatpush1.bf16.msra.mxu0 0
    %261 = vmatprep.subr.bf16.mxu0 0
    %262 = vmatpush1.bf16.msra.mxu0 0
    %263 = vmatprep.subr.bf16.mxu0 0
    %264 = vmatpush1.bf16.msra.mxu0 0
    %265 = vmatprep.subr.bf16.mxu0 0
    %266 = vmatpush1.bf16.msra.mxu0 0
    %267 = vmatprep.subr.bf16.mxu0 0
    %268 = vmatpush1.bf16.msra.mxu0 0
    %269 = vmatprep.subr.bf16.mxu0 0
    %270 = vmatpush1.bf16.msra.mxu0 0
    %271 = vmatprep.subr.bf16.mxu0 0
    %272 = vmatpush1.bf16.msra.mxu0 0
    %273 = vmatprep.subr.bf16.mxu0 0
    %274 = vmatpush1.bf16.msra.mxu0 0
    %275 = vmatprep.subr.bf16.mxu0 0
    %276 = vmatpush1.bf16.msra.mxu0 0
    %277 = vmatprep.subr.bf16.mxu0 0
    %278 = vmatpush1.bf16.msra.mxu0 0
    %279 = vmatprep.mubr.bf16.mxu0 0
    %280 = vmatmul.mubr.bf16.gmra.mrb[0].mxu0 %v245
    %v281 = vpop.f32.mrb[0].mxu0
    %v282 = vadd.f32 0.0, %v281
    %v283 = vpop.f32.mrb[0].mxu0
    %v284 = vpop.f32.mrb[0].mxu0
    %v285 = vpop.f32.mrb[0].mxu0
    %286 = vdwg.mxu0
    %v287 = vadd.f32 %v282, %v211
    %v288 = vmax.f32 %v287, 0.0
    %v289 = vpack.c.bf16 %v288, %v288
    %vm290 = vcmask 261120
    %v292 = vsel %vm290, %v289, 0
    %294 = vmatprep.subr.bf16.mxu0 0
    %295 = vmatpush1.bf16.msra.mxu0 %v63
    %296 = vmatprep.subr.bf16.mxu0 0
    %297 = vmatpush1.bf16.msra.mxu0 %v64
    %298 = vmatprep.subr.bf16.mxu0 0
    %299 = vmatpush1.bf16.msra.mxu0 0
    %300 = vmatprep.subr.bf16.mxu0 0
    %301 = vmatpush1.bf16.msra.mxu0 0
    %302 = vmatprep.subr.bf16.mxu0 0
    %303 = vmatpush1.bf16.msra.mxu0 0
    %304 = vmatprep.subr.bf16.mxu0 0
    %305 = vmatpush1.bf16.msra.mxu0 0
    %306 = vmatprep.subr.bf16.mxu0 0
    %307 = vmatpush1.bf16.msra.mxu0 0
    %308 = vmatprep.subr.bf16.mxu0 0
    %309 = vmatpush1.bf16.msra.mxu0 0
    %310 = vmatprep.subr.bf16.mxu0 0
    %311 = vmatpush1.bf16.msra.mxu0 0
    %312 = vmatprep.subr.bf16.mxu0 0
    %313 = vmatpush1.bf16.msra.mxu0 0
    %314 = vmatprep.subr.bf16.mxu0 0
    %315 = vmatpush1.bf16.msra.mxu0 0
    %316 = vmatprep.subr.bf16.mxu0 0
    %317 = vmatpush1.bf16.msra.mxu0 0
    %318 = vmatprep.subr.bf16.mxu0 0
    %319 = vmatpush1.bf16.msra.mxu0 0
    %320 = vmatprep.subr.bf16.mxu0 0
    %321 = vmatpush1.bf16.msra.mxu0 0
    %322 = vmatprep.subr.bf16.mxu0 0
    %323 = vmatpush1.bf16.msra.mxu0 0
    %324 = vmatprep.subr.bf16.mxu0 0
    %325 = vmatpush1.bf16.msra.mxu0 0
    %326 = vmatprep.mubr.bf16.mxu0 0
    %327 = vmatmul.mubr.bf16.gmra.mrb[0].mxu0 %v292
    %v328 = vpop.f32.mrb[0].mxu0
    %v329 = vadd.f32 %v116, %v328
    %v330 = vpop.f32.mrb[0].mxu0
    %v331 = vpop.f32.mrb[0].mxu0
    %v332 = vpop.f32.mrb[0].mxu0
    %333 = vdwg.mxu0
    %v334 = vmax.f32 %v329, 0.0
    %v335 = vpack.c.bf16 %v334, %v334
    %v338 = vsel %vm290, %v335, 0
    %vm339 = vcmask 523264
    %v340 = vsel %vm339, %v338, 0
    %342 = vmatprep.subr.bf16.mxu0 0
    %343 = vmatpush1.bf16.msra.mxu0 %v91
    %344 = vmatprep.subr.bf16.mxu0 0
    %345 = vmatpush1.bf16.msra.mxu0 %v92
    %346 = vmatprep.subr.bf16.mxu0 0
    %347 = vmatpush1.bf16.msra.mxu0 %v93
    %348 = vmatprep.subr.bf16.mxu0 0
    %349 = vmatpush1.bf16.msra.mxu0 %v94
    %350 = vmatprep.subr.bf16.mxu0 0
    %351 = vmatpush1.bf16.msra.mxu0 0
    %352 = vmatprep.subr.bf16.mxu0 0
    %353 = vmatpush1.bf16.msra.mxu0 0
    %354 = vmatprep.subr.bf16.mxu0 0
    %355 = vmatpush1.bf16.msra.mxu0 0
    %356 = vmatprep.subr.bf16.mxu0 0
    %357 = vmatpush1.bf16.msra.mxu0 0
    %358 = vmatprep.subr.bf16.mxu0 0
    %359 = vmatpush1.bf16.msra.mxu0 0
    %360 = vmatprep.subr.bf16.mxu0 0
    %361 = vmatpush1.bf16.msra.mxu0 0
    %362 = vmatprep.subr.bf16.mxu0 0
    %363 = vmatpush1.bf16.msra.mxu0 0
    %364 = vmatprep.subr.bf16.mxu0 0
    %365 = vmatpush1.bf16.msra.mxu0 0
    %366 = vmatprep.subr.bf16.mxu0 0
    %367 = vmatpush1.bf16.msra.mxu0 0
    %368 = vmatprep.subr.bf16.mxu0 0
    %369 = vmatpush1.bf16.msra.mxu0 0
    %370 = vmatprep.subr.bf16.mxu0 0
    %371 = vmatpush1.bf16.msra.mxu0 0
    %372 = vmatprep.subr.bf16.mxu0 0
    %373 = vmatpush1.bf16.msra.mxu0 0
    %374 = vmatprep.mubr.bf16.mxu0 0
    %375 = vmatmul.mubr.bf16.gmra.mrb[0].mxu0 %v340
    %v376 = vpop.f32.mrb[0].mxu0
    %v377 = vadd.f32 %v141, %v376
    %v378 = vpop.f32.mrb[0].mxu0
    %v379 = vpop.f32.mrb[0].mxu0
    %v380 = vpop.f32.mrb[0].mxu0
    %381 = vdwg.mxu0
    %v382 = vxor.u32 %v377, 2147483648
    %v383 = vmul.f32 %v382, 1.442695
    %v384 = vpow.pop %v383
    %v385 = vadd.f32 %v384, 1.0
    %v386 = vrcp.pop %v385
    %v387 = vmul.f32 1.0, %v386
    %v388 = vtanh.pop %v377
    %v389 = vmul.f32 %v387, 0.0
    %391 = vrot.lane.b32.xlu0 %v388, 32
    %v392 = vpop.permute.xlu0 %391
    %v394 = vmul.f32 %v387, %v392
    %396 = vrot.lane.b32.xlu0 %v394, 32
    %v397 = vpop.permute.xlu0 %396
    %v399 = vadd.f32 %v389, %v397
    %v400 = vtanh.pop %v399
    %402 = vrot.lane.b32.xlu0 %v400, 32
    %v403 = vpop.permute.xlu0 %402
    %v405 = vmul.f32 %v387, %v403
    %v406 = vpack.c.bf16 %v405, %v405
    %408 = vrot.lane.b32.xlu0 %v406, 64
    %v409 = vpop.permute.xlu0 %408
    %v411 = vsel %vm290, %v409, 0
    %v412 = vsel %vm339, %v411, 0
    %414 = vmatprep.subr.bf16.mxu0 0
    %415 = vmatpush1.bf16.msra.mxu0 %v103
    %416 = vmatprep.subr.bf16.mxu0 0
    %417 = vmatpush1.bf16.msra.mxu0 %v104
    %418 = vmatprep.subr.bf16.mxu0 0
    %419 = vmatpush1.bf16.msra.mxu0 %v105
    %420 = vmatprep.subr.bf16.mxu0 0
    %421 = vmatpush1.bf16.msra.mxu0 %v106
    %422 = vmatprep.subr.bf16.mxu0 0
    %423 = vmatpush1.bf16.msra.mxu0 0
    %424 = vmatprep.subr.bf16.mxu0 0
    %425 = vmatpush1.bf16.msra.mxu0 0
    %426 = vmatprep.subr.bf16.mxu0 0
    %427 = vmatpush1.bf16.msra.mxu0 0
    %428 = vmatprep.subr.bf16.mxu0 0
    %429 = vmatpush1.bf16.msra.mxu0 0
    %430 = vmatprep.subr.bf16.mxu0 0
    %431 = vmatpush1.bf16.msra.mxu0 0
    %432 = vmatprep.subr.bf16.mxu0 0
    %433 = vmatpush1.bf16.msra.mxu0 0
    %434 = vmatprep.subr.bf16.mxu0 0
    %435 = vmatpush1.bf16.msra.mxu0 0
    %436 = vmatprep.subr.bf16.mxu0 0
    %437 = vmatpush1.bf16.msra.mxu0 0
    %438 = vmatprep.subr.bf16.mxu0 0
    %439 = vmatpush1.bf16.msra.mxu0 0
    %440 = vmatprep.subr.bf16.mxu0 0
    %441 = vmatpush1.bf16.msra.mxu0 0
    %442 = vmatprep.subr.bf16.mxu0 0
    %443 = vmatpush1.bf16.msra.mxu0 0
    %444 = vmatprep.subr.bf16.mxu0 0
    %445 = vmatpush1.bf16.msra.mxu0 0
    %446 = vmatprep.mubr.bf16.mxu0 0
    %447 = vmatmul.mubr.bf16.gmra.mrb[0].mxu0 %v412
    %v448 = vpop.f32.mrb[0].mxu0
    %v449 = vadd.f32 %v146, %v448
    %v450 = vpop.f32.mrb[0].mxu0
    %v451 = vpop.f32.mrb[0].mxu0
    %v452 = vpop.f32.mrb[0].mxu0
    %453 = vdwg.mxu0
    %v454 = vxor.u32 %v449, 2147483648
    %v455 = vmul.f32 %v454, 1.442695
    %v456 = vpow.pop %v455
    %v457 = vadd.f32 %v456, 1.0
    %v458 = vrcp.pop %v457
    %v459 = vmul.f32 1.0, %v458
    %v460 = vtanh.pop %v449
    %v461 = vmul.f32 %v459, 0.0
    %463 = vrot.lane.b32.xlu0 %v460, 32
    %v464 = vpop.permute.xlu0 %463
    %v466 = vmul.f32 %v459, %v464
    %468 = vrot.lane.b32.xlu0 %v466, 32
    %v469 = vpop.permute.xlu0 %468
    %v471 = vadd.f32 %v461, %v469
    %v472 = vtanh.pop %v471
    %474 = vrot.lane.b32.xlu0 %v472, 32
    %v475 = vpop.permute.xlu0 %474
    %v477 = vmul.f32 %v459, %v475
    %v478 = vpack.c.bf16 %v477, %v477
    %480 = vrot.lane.b32.xlu0 %v478, 64
    %v481 = vpop.permute.xlu0 %480
    %v483 = vsel %vm290, %v481, 0
    %485 = vmatprep.subr.bf16.mxu0 0
    %486 = vmatpush1.bf16.msra.mxu0 %v69
    %487 = vmatprep.subr.bf16.mxu0 0
    %488 = vmatpush1.bf16.msra.mxu0 %v70
    %489 = vmatprep.subr.bf16.mxu0 0
    %490 = vmatpush1.bf16.msra.mxu0 0
    %491 = vmatprep.subr.bf16.mxu0 0
    %492 = vmatpush1.bf16.msra.mxu0 0
    %493 = vmatprep.subr.bf16.mxu0 0
    %494 = vmatpush1.bf16.msra.mxu0 0
    %495 = vmatprep.subr.bf16.mxu0 0
    %496 = vmatpush1.bf16.msra.mxu0 0
    %497 = vmatprep.subr.bf16.mxu0 0
    %498 = vmatpush1.bf16.msra.mxu0 0
    %499 = vmatprep.subr.bf16.mxu0 0
    %500 = vmatpush1.bf16.msra.mxu0 0
    %501 = vmatprep.subr.bf16.mxu0 0
    %502 = vmatpush1.bf16.msra.mxu0 0
    %503 = vmatprep.subr.bf16.mxu0 0
    %504 = vmatpush1.bf16.msra.mxu0 0
    %505 = vmatprep.subr.bf16.mxu0 0
    %506 = vmatpush1.bf16.msra.mxu0 0
    %507 = vmatprep.subr.bf16.mxu0 0
    %508 = vmatpush1.bf16.msra.mxu0 0
    %509 = vmatprep.subr.bf16.mxu0 0
    %510 = vmatpush1.bf16.msra.mxu0 0
    %511 = vmatprep.subr.bf16.mxu0 0
    %512 = vmatpush1.bf16.msra.mxu0 0
    %513 = vmatprep.subr.bf16.mxu0 0
    %514 = vmatpush1.bf16.msra.mxu0 0
    %515 = vmatprep.subr.bf16.mxu0 0
    %516 = vmatpush1.bf16.msra.mxu0 0
    %517 = vmatprep.mubr.bf16.mxu0 0
    %518 = vmatmul.mubr.bf16.gmra.mrb[0].mxu0 %v483
    %v519 = vpop.f32.mrb[0].mxu0
    %v520 = vadd.f32 %v121, %v519
    %v521 = vpop.f32.mrb[0].mxu0
    %v522 = vpop.f32.mrb[0].mxu0
    %v523 = vpop.f32.mrb[0].mxu0
    %524 = vdwg.mxu0
    %v525 = vmax.f32 %v520, 0.0
    %v526 = vpack.c.bf16 %v525, %v525
    %v528 = vsel %vm290, %v526, 0
    %530 = vmatprep.subr.bf16.mxu0 0
    %531 = vmatpush1.bf16.msra.mxu0 %v75
    %532 = vmatprep.subr.bf16.mxu0 0
    %533 = vmatpush1.bf16.msra.mxu0 %v76
    %534 = vmatprep.subr.bf16.mxu0 0
    %535 = vmatpush1.bf16.msra.mxu0 0
    %536 = vmatprep.subr.bf16.mxu0 0
    %537 = vmatpush1.bf16.msra.mxu0 0
    %538 = vmatprep.subr.bf16.mxu0 0
    %539 = vmatpush1.bf16.msra.mxu0 0
    %540 = vmatprep.subr.bf16.mxu0 0
    %541 = vmatpush1.bf16.msra.mxu0 0
    %542 = vmatprep.subr.bf16.mxu0 0
    %543 = vmatpush1.bf16.msra.mxu0 0
    %544 = vmatprep.subr.bf16.mxu0 0
    %545 = vmatpush1.bf16.msra.mxu0 0
    %546 = vmatprep.subr.bf16.mxu0 0
    %547 = vmatpush1.bf16.msra.mxu0 0
    %548 = vmatprep.subr.bf16.mxu0 0
    %549 = vmatpush1.bf16.msra.mxu0 0
    %550 = vmatprep.subr.bf16.mxu0 0
    %551 = vmatpush1.bf16.msra.mxu0 0
    %552 = vmatprep.subr.bf16.mxu0 0
    %553 = vmatpush1.bf16.msra.mxu0 0
    %554 = vmatprep.subr.bf16.mxu0 0
    %555 = vmatpush1.bf16.msra.mxu0 0
    %556 = vmatprep.subr.bf16.mxu0 0
    %557 = vmatpush1.bf16.msra.mxu0 0
    %558 = vmatprep.subr.bf16.mxu0 0
    %559 = vmatpush1.bf16.msra.mxu0 0
    %560 = vmatprep.subr.bf16.mxu0 0
    %561 = vmatpush1.bf16.msra.mxu0 0
    %562 = vmatprep.mubr.bf16.mxu0 0
    %563 = vmatmul.mubr.bf16.gmra.mrb[0].mxu0 %v528
    %v564 = vpop.f32.mrb[0].mxu0
    %v565 = vadd.f32 %v126, %v564
    %v566 = vpop.f32.mrb[0].mxu0
    %v567 = vpop.f32.mrb[0].mxu0
    %v568 = vpop.f32.mrb[0].mxu0
    %569 = vdwg.mxu0
    %v570 = vmax.f32 %v565, 0.0
    %v571 = vpack.c.bf16 %v570, %v570
    %v573 = vsel %vm290, %v571, 0
    %575 = vmatprep.subr.bf16.mxu0 0
    %576 = vmatpush1.bf16.msra.mxu0 %v81
    %577 = vmatprep.subr.bf16.mxu0 0
    %578 = vmatpush1.bf16.msra.mxu0 %v82
    %579 = vmatprep.subr.bf16.mxu0 0
    %580 = vmatpush1.bf16.msra.mxu0 0
    %581 = vmatprep.subr.bf16.mxu0 0
    %582 = vmatpush1.bf16.msra.mxu0 0
    %583 = vmatprep.subr.bf16.mxu0 0
    %584 = vmatpush1.bf16.msra.mxu0 0
    %585 = vmatprep.subr.bf16.mxu0 0
    %586 = vmatpush1.bf16.msra.mxu0 0
    %587 = vmatprep.subr.bf16.mxu0 0
    %588 = vmatpush1.bf16.msra.mxu0 0
    %589 = vmatprep.subr.bf16.mxu0 0
    %590 = vmatpush1.bf16.msra.mxu0 0
    %591 = vmatprep.subr.bf16.mxu0 0
    %592 = vmatpush1.bf16.msra.mxu0 0
    %593 = vmatprep.subr.bf16.mxu0 0
    %594 = vmatpush1.bf16.msra.mxu0 0
    %595 = vmatprep.subr.bf16.mxu0 0
    %596 = vmatpush1.bf16.msra.mxu0 0
    %597 = vmatprep.subr.bf16.mxu0 0
    %598 = vmatpush1.bf16.msra.mxu0 0
    %599 = vmatprep.subr.bf16.mxu0 0
    %600 = vmatpush1.bf16.msra.mxu0 0
    %601 = vmatprep.subr.bf16.mxu0 0
    %602 = vmatpush1.bf16.msra.mxu0 0
    %603 = vmatprep.subr.bf16.mxu0 0
    %604 = vmatpush1.bf16.msra.mxu0 0
    %605 = vmatprep.subr.bf16.mxu0 0
    %606 = vmatpush1.bf16.msra.mxu0 0
    %607 = vmatprep.mubr.bf16.mxu0 0
    %608 = vmatmul.mubr.bf16.gmra.mrb[0].mxu0 %v573
    %v609 = vpop.f32.mrb[0].mxu0
    %v610 = vadd.f32 0.0, %v609
    %v611 = vpop.f32.mrb[0].mxu0
    %v612 = vpop.f32.mrb[0].mxu0
    %v613 = vpop.f32.mrb[0].mxu0
    %614 = vdwg.mxu0
    %v615 = vadd.f32 %v241, %v610
    %v616 = vadd.f32 %v615, %v131
    %618 = vrot.lane.b32.xlu0 %v610, 112
    %v619 = vpop.permute.xlu0 %618
    %v621 = vadd.f32 %v282, %v619
    %v622 = vadd.f32 %v621, %v136
    %623 = vst.msk [vmem:[%s3] sm:$0xff] %vm243, %v616
    %v624 = vadd.f32 %v622, %v214
    %v625 = vmax.f32 %v624, 0.0
    %v626 = vpack.c.bf16 %v625, %v625
    %v628 = vsel %vm290, %v626, 0
    %630 = vmatprep.subr.bf16.mxu0 0
    %631 = vmatpush1.bf16.msra.mxu0 %v63
    %632 = vmatprep.subr.bf16.mxu0 0
    %633 = vmatpush1.bf16.msra.mxu0 %v64
    %634 = vmatprep.subr.bf16.mxu0 0
    %635 = vmatpush1.bf16.msra.mxu0 0
    %636 = vmatprep.subr.bf16.mxu0 0
    %637 = vmatpush1.bf16.msra.mxu0 0
    %638 = vmatprep.subr.bf16.mxu0 0
    %639 = vmatpush1.bf16.msra.mxu0 0
    %640 = vmatprep.subr.bf16.mxu0 0
    %641 = vmatpush1.bf16.msra.mxu0 0
    %642 = vmatprep.subr.bf16.mxu0 0
    %643 = vmatpush1.bf16.msra.mxu0 0
    %644 = vmatprep.subr.bf16.mxu0 0
    %645 = vmatpush1.bf16.msra.mxu0 0
    %646 = vmatprep.subr.bf16.mxu0 0
    %647 = vmatpush1.bf16.msra.mxu0 0
    %648 = vmatprep.subr.bf16.mxu0 0
    %649 = vmatpush1.bf16.msra.mxu0 0
    %650 = vmatprep.subr.bf16.mxu0 0
    %651 = vmatpush1.bf16.msra.mxu0 0
    %652 = vmatprep.subr.bf16.mxu0 0
    %653 = vmatpush1.bf16.msra.mxu0 0
    %654 = vmatprep.subr.bf16.mxu0 0
    %655 = vmatpush1.bf16.msra.mxu0 0
    %656 = vmatprep.subr.bf16.mxu0 0
    %657 = vmatpush1.bf16.msra.mxu0 0
    %658 = vmatprep.subr.bf16.mxu0 0
    %659 = vmatpush1.bf16.msra.mxu0 0
    %660 = vmatprep.subr.bf16.mxu0 0
    %661 = vmatpush1.bf16.msra.mxu0 0
    %662 = vmatprep.mubr.bf16.mxu0 0
    %663 = vmatmul.mubr.bf16.gmra.mrb[0].mxu0 %v628
    %v664 = vpop.f32.mrb[0].mxu0
    %v665 = vadd.f32 %v116, %v664
    %v666 = vpop.f32.mrb[0].mxu0
    %v667 = vpop.f32.mrb[0].mxu0
    %v668 = vpop.f32.mrb[0].mxu0
    %669 = vdwg.mxu0
    %v670 = vmax.f32 %v665, 0.0
    %v671 = vpack.c.bf16 %v670, %v670
    %672 = vrot.lane.b32.xlu0 %v406, 96
    %v673 = vpop.permute.xlu0 %672
    %v676 = vsel %vm290, %v671, %v673
    %v677 = vsel %vm339, %v676, 0
    %679 = vmatprep.subr.bf16.mxu0 0
    %680 = vmatpush1.bf16.msra.mxu0 %v91
    %681 = vmatprep.subr.bf16.mxu0 0
    %682 = vmatpush1.bf16.msra.mxu0 %v92
    %683 = vmatprep.subr.bf16.mxu0 0
    %684 = vmatpush1.bf16.msra.mxu0 %v93
    %685 = vmatprep.subr.bf16.mxu0 0
    %686 = vmatpush1.bf16.msra.mxu0 %v94
    %687 = vmatprep.subr.bf16.mxu0 0
    %688 = vmatpush1.bf16.msra.mxu0 0
    %689 = vmatprep.subr.bf16.mxu0 0
    %690 = vmatpush1.bf16.msra.mxu0 0
    %691 = vmatprep.subr.bf16.mxu0 0
    %692 = vmatpush1.bf16.msra.mxu0 0
    %693 = vmatprep.subr.bf16.mxu0 0
    %694 = vmatpush1.bf16.msra.mxu0 0
    %695 = vmatprep.subr.bf16.mxu0 0
    %696 = vmatpush1.bf16.msra.mxu0 0
    %697 = vmatprep.subr.bf16.mxu0 0
    %698 = vmatpush1.bf16.msra.mxu0 0
    %699 = vmatprep.subr.bf16.mxu0 0
    %700 = vmatpush1.bf16.msra.mxu0 0
    %701 = vmatprep.subr.bf16.mxu0 0
    %702 = vmatpush1.bf16.msra.mxu0 0
    %703 = vmatprep.subr.bf16.mxu0 0
    %704 = vmatpush1.bf16.msra.mxu0 0
    %705 = vmatprep.subr.bf16.mxu0 0
    %706 = vmatpush1.bf16.msra.mxu0 0
    %707 = vmatprep.subr.bf16.mxu0 0
    %708 = vmatpush1.bf16.msra.mxu0 0
    %709 = vmatprep.subr.bf16.mxu0 0
    %710 = vmatpush1.bf16.msra.mxu0 0
    %711 = vmatprep.mubr.bf16.mxu0 0
    %712 = vmatmul.mubr.bf16.gmra.mrb[0].mxu0 %v677
    %v713 = vpop.f32.mrb[0].mxu0
    %v714 = vadd.f32 %v141, %v713
    %v715 = vpop.f32.mrb[0].mxu0
    %v716 = vpop.f32.mrb[0].mxu0
    %v717 = vpop.f32.mrb[0].mxu0
    %718 = vdwg.mxu0
    %v719 = vxor.u32 %v714, 2147483648
    %v720 = vmul.f32 %v719, 1.442695
    %v721 = vpow.pop %v720
    %v722 = vadd.f32 %v721, 1.0
    %v723 = vrcp.pop %v722
    %v724 = vmul.f32 1.0, %v723
    %v725 = vtanh.pop %v714
    %v726 = vmul.f32 %v724, %v399
    %728 = vrot.lane.b32.xlu0 %v725, 32
    %v729 = vpop.permute.xlu0 %728
    %v731 = vmul.f32 %v724, %v729
    %733 = vrot.lane.b32.xlu0 %v731, 32
    %v734 = vpop.permute.xlu0 %733
    %v736 = vadd.f32 %v726, %v734
    %v737 = vtanh.pop %v736
    %739 = vrot.lane.b32.xlu0 %v737, 32
    %v740 = vpop.permute.xlu0 %739
    %v742 = vmul.f32 %v724, %v740
    %v743 = vpack.c.bf16 %v742, %v742
    %745 = vrot.lane.b32.xlu0 %v743, 64
    %v746 = vpop.permute.xlu0 %745
    %747 = vrot.lane.b32.xlu0 %v478, 96
    %v748 = vpop.permute.xlu0 %747
    %v751 = vsel %vm290, %v746, %v748
    %v752 = vsel %vm339, %v751, 0
    %754 = vmatprep.subr.bf16.mxu0 0
    %755 = vmatpush1.bf16.msra.mxu0 %v103
    %756 = vmatprep.subr.bf16.mxu0 0
    %757 = vmatpush1.bf16.msra.mxu0 %v104
    %758 = vmatprep.subr.bf16.mxu0 0
    %759 = vmatpush1.bf16.msra.mxu0 %v105
    %760 = vmatprep.subr.bf16.mxu0 0
    %761 = vmatpush1.bf16.msra.mxu0 %v106
    %762 = vmatprep.subr.bf16.mxu0 0
    %763 = vmatpush1.bf16.msra.mxu0 0
    %764 = vmatprep.subr.bf16.mxu0 0
    %765 = vmatpush1.bf16.msra.mxu0 0
    %766 = vmatprep.subr.bf16.mxu0 0
    %767 = vmatpush1.bf16.msra.mxu0 0
    %768 = vmatprep.subr.bf16.mxu0 0
    %769 = vmatpush1.bf16.msra.mxu0 0
    %770 = vmatprep.subr.bf16.mxu0 0
    %771 = vmatpush1.bf16.msra.mxu0 0
    %772 = vmatprep.subr.bf16.mxu0 0
    %773 = vmatpush1.bf16.msra.mxu0 0
    %774 = vmatprep.subr.bf16.mxu0 0
    %775 = vmatpush1.bf16.msra.mxu0 0
    %776 = vmatprep.subr.bf16.mxu0 0
    %777 = vmatpush1.bf16.msra.mxu0 0
    %778 = vmatprep.subr.bf16.mxu0 0
    %779 = vmatpush1.bf16.msra.mxu0 0
    %780 = vmatprep.subr.bf16.mxu0 0
    %781 = vmatpush1.bf16.msra.mxu0 0
    %782 = vmatprep.subr.bf16.mxu0 0
    %783 = vmatpush1.bf16.msra.mxu0 0
    %784 = vmatprep.subr.bf16.mxu0 0
    %785 = vmatpush1.bf16.msra.mxu0 0
    %786 = vmatprep.mubr.bf16.mxu0 0
    %787 = vmatmul.mubr.bf16.gmra.mrb[0].mxu0 %v752
    %v788 = vpop.f32.mrb[0].mxu0
    %v789 = vadd.f32 %v146, %v788
    %v790 = vpop.f32.mrb[0].mxu0
    %v791 = vpop.f32.mrb[0].mxu0
    %v792 = vpop.f32.mrb[0].mxu0
    %793 = vdwg.mxu0
    %v794 = vxor.u32 %v789, 2147483648
    %v795 = vmul.f32 %v794, 1.442695
    %v796 = vpow.pop %v795
    %v797 = vadd.f32 %v796, 1.0
    %v798 = vrcp.pop %v797
    %v799 = vmul.f32 1.0, %v798
    %v800 = vtanh.pop %v789
    %v801 = vmul.f32 %v799, %v471
    %803 = vrot.lane.b32.xlu0 %v800, 32
    %v804 = vpop.permute.xlu0 %803
    %v806 = vmul.f32 %v799, %v804
    %808 = vrot.lane.b32.xlu0 %v806, 32
    %v809 = vpop.permute.xlu0 %808
    %v811 = vadd.f32 %v801, %v809
    %v812 = vtanh.pop %v811
    %814 = vrot.lane.b32.xlu0 %v812, 32
    %v815 = vpop.permute.xlu0 %814
    %v817 = vmul.f32 %v799, %v815
    %v818 = vpack.c.bf16 %v817, %v817
    %820 = vrot.lane.b32.xlu0 %v818, 64
    %v821 = vpop.permute.xlu0 %820
    %v823 = vsel %vm290, %v821, 0
    %825 = vmatprep.subr.bf16.mxu0 0
    %826 = vmatpush1.bf16.msra.mxu0 %v69
    %827 = vmatprep.subr.bf16.mxu0 0
    %828 = vmatpush1.bf16.msra.mxu0 %v70
    %829 = vmatprep.subr.bf16.mxu0 0
    %830 = vmatpush1.bf16.msra.mxu0 0
    %831 = vmatprep.subr.bf16.mxu0 0
    %832 = vmatpush1.bf16.msra.mxu0 0
    %833 = vmatprep.subr.bf16.mxu0 0
    %834 = vmatpush1.bf16.msra.mxu0 0
    %835 = vmatprep.subr.bf16.mxu0 0
    %836 = vmatpush1.bf16.msra.mxu0 0
    %837 = vmatprep.subr.bf16.mxu0 0
    %838 = vmatpush1.bf16.msra.mxu0 0
    %839 = vmatprep.subr.bf16.mxu0 0
    %840 = vmatpush1.bf16.msra.mxu0 0
    %841 = vmatprep.subr.bf16.mxu0 0
    %842 = vmatpush1.bf16.msra.mxu0 0
    %843 = vmatprep.subr.bf16.mxu0 0
    %844 = vmatpush1.bf16.msra.mxu0 0
    %845 = vmatprep.subr.bf16.mxu0 0
    %846 = vmatpush1.bf16.msra.mxu0 0
    %847 = vmatprep.subr.bf16.mxu0 0
    %848 = vmatpush1.bf16.msra.mxu0 0
    %849 = vmatprep.subr.bf16.mxu0 0
    %850 = vmatpush1.bf16.msra.mxu0 0
    %851 = vmatprep.subr.bf16.mxu0 0
    %852 = vmatpush1.bf16.msra.mxu0 0
    %853 = vmatprep.subr.bf16.mxu0 0
    %854 = vmatpush1.bf16.msra.mxu0 0
    %855 = vmatprep.subr.bf16.mxu0 0
    %856 = vmatpush1.bf16.msra.mxu0 0
    %857 = vmatprep.mubr.bf16.mxu0 0
    %858 = vmatmul.mubr.bf16.gmra.mrb[0].mxu0 %v823
    %v859 = vpop.f32.mrb[0].mxu0
    %v860 = vadd.f32 %v121, %v859
    %v861 = vpop.f32.mrb[0].mxu0
    %v862 = vpop.f32.mrb[0].mxu0
    %v863 = vpop.f32.mrb[0].mxu0
    %864 = vdwg.mxu0
    %v865 = vmax.f32 %v860, 0.0
    %v866 = vpack.c.bf16 %v865, %v865
    %v868 = vsel %vm290, %v866, 0
    %870 = vmatprep.subr.bf16.mxu0 0
    %871 = vmatpush1.bf16.msra.mxu0 %v75
    %872 = vmatprep.subr.bf16.mxu0 0
    %873 = vmatpush1.bf16.msra.mxu0 %v76
    %874 = vmatprep.subr.bf16.mxu0 0
    %875 = vmatpush1.bf16.msra.mxu0 0
    %876 = vmatprep.subr.bf16.mxu0 0
    %877 = vmatpush1.bf16.msra.mxu0 0
    %878 = vmatprep.subr.bf16.mxu0 0
    %879 = vmatpush1.bf16.msra.mxu0 0
    %880 = vmatprep.subr.bf16.mxu0 0
    %881 = vmatpush1.bf16.msra.mxu0 0
    %882 = vmatprep.subr.bf16.mxu0 0
    %883 = vmatpush1.bf16.msra.mxu0 0
    %884 = vmatprep.subr.bf16.mxu0 0
    %885 = vmatpush1.bf16.msra.mxu0 0
    %886 = vmatprep.subr.bf16.mxu0 0
    %887 = vmatpush1.bf16.msra.mxu0 0
    %888 = vmatprep.subr.bf16.mxu0 0
    %889 = vmatpush1.bf16.msra.mxu0 0
    %890 = vmatprep.subr.bf16.mxu0 0
    %891 = vmatpush1.bf16.msra.mxu0 0
    %892 = vmatprep.subr.bf16.mxu0 0
    %893 = vmatpush1.bf16.msra.mxu0 0
    %894 = vmatprep.subr.bf16.mxu0 0
    %895 = vmatpush1.bf16.msra.mxu0 0
    %896 = vmatprep.subr.bf16.mxu0 0
    %897 = vmatpush1.bf16.msra.mxu0 0
    %898 = vmatprep.subr.bf16.mxu0 0
    %899 = vmatpush1.bf16.msra.mxu0 0
    %900 = vmatprep.subr.bf16.mxu0 0
    %901 = vmatpush1.bf16.msra.mxu0 0
    %902 = vmatprep.mubr.bf16.mxu0 0
    %903 = vmatmul.mubr.bf16.gmra.mrb[0].mxu0 %v868
    %v904 = vpop.f32.mrb[0].mxu0
    %v905 = vadd.f32 %v126, %v904
    %v906 = vpop.f32.mrb[0].mxu0
    %v907 = vpop.f32.mrb[0].mxu0
    %v908 = vpop.f32.mrb[0].mxu0
    %909 = vdwg.mxu0
    %v910 = vmax.f32 %v905, 0.0
    %v911 = vpack.c.bf16 %v910, %v910
    %v913 = vsel %vm290, %v911, 0
    %915 = vmatprep.subr.bf16.mxu0 0
    %916 = vmatpush1.bf16.msra.mxu0 %v81
    %917 = vmatprep.subr.bf16.mxu0 0
    %918 = vmatpush1.bf16.msra.mxu0 %v82
    %919 = vmatprep.subr.bf16.mxu0 0
    %920 = vmatpush1.bf16.msra.mxu0 0
    %921 = vmatprep.subr.bf16.mxu0 0
    %922 = vmatpush1.bf16.msra.mxu0 0
    %923 = vmatprep.subr.bf16.mxu0 0
    %924 = vmatpush1.bf16.msra.mxu0 0
    %925 = vmatprep.subr.bf16.mxu0 0
    %926 = vmatpush1.bf16.msra.mxu0 0
    %927 = vmatprep.subr.bf16.mxu0 0
    %928 = vmatpush1.bf16.msra.mxu0 0
    %929 = vmatprep.subr.bf16.mxu0 0
    %930 = vmatpush1.bf16.msra.mxu0 0
    %931 = vmatprep.subr.bf16.mxu0 0
    %932 = vmatpush1.bf16.msra.mxu0 0
    %933 = vmatprep.subr.bf16.mxu0 0
    %934 = vmatpush1.bf16.msra.mxu0 0
    %935 = vmatprep.subr.bf16.mxu0 0
    %936 = vmatpush1.bf16.msra.mxu0 0
    %937 = vmatprep.subr.bf16.mxu0 0
    %938 = vmatpush1.bf16.msra.mxu0 0
    %939 = vmatprep.subr.bf16.mxu0 0
    %940 = vmatpush1.bf16.msra.mxu0 0
    %941 = vmatprep.subr.bf16.mxu0 0
    %942 = vmatpush1.bf16.msra.mxu0 0
    %943 = vmatprep.subr.bf16.mxu0 0
    %944 = vmatpush1.bf16.msra.mxu0 0
    %945 = vmatprep.subr.bf16.mxu0 0
    %946 = vmatpush1.bf16.msra.mxu0 0
    %947 = vmatprep.mubr.bf16.mxu0 0
    %948 = vmatmul.mubr.bf16.gmra.mrb[0].mxu0 %v913
    %v949 = vpop.f32.mrb[0].mxu0
    %v950 = vadd.f32 0.0, %v949
    %v951 = vpop.f32.mrb[0].mxu0
    %v952 = vpop.f32.mrb[0].mxu0
    %v953 = vpop.f32.mrb[0].mxu0
    %954 = vdwg.mxu0
    %v955 = vadd.f32 %v616, %v950
    %v956 = vadd.f32 %v955, %v131
    %958 = vrot.lane.b32.xlu0 %v950, 112
    %v959 = vpop.permute.xlu0 %958
    %v961 = vadd.f32 %v622, %v959
    %v962 = vadd.f32 %v961, %v136
    %964 = vrot.lane.b32.xlu0 %v956, 16
    %v965 = vpop.permute.xlu0 %964
    %vm967 = vcmask 261248
    %968 = vst.msk [vmem:[%s3] sm:$0xff] %vm967, %v965
    %v969 = vadd.f32 %v962, %v219
    %v970 = vmax.f32 %v969, 0.0
    %v971 = vpack.c.bf16 %v970, %v970
    %v973 = vsel %vm290, %v971, 0
    %975 = vmatprep.subr.bf16.mxu0 0
    %976 = vmatpush1.bf16.msra.mxu0 %v63
    %977 = vmatprep.subr.bf16.mxu0 0
    %978 = vmatpush1.bf16.msra.mxu0 %v64
    %979 = vmatprep.subr.bf16.mxu0 0
    %980 = vmatpush1.bf16.msra.mxu0 0
    %981 = vmatprep.subr.bf16.mxu0 0
    %982 = vmatpush1.bf16.msra.mxu0 0
    %983 = vmatprep.subr.bf16.mxu0 0
    %984 = vmatpush1.bf16.msra.mxu0 0
    %985 = vmatprep.subr.bf16.mxu0 0
    %986 = vmatpush1.bf16.msra.mxu0 0
    %987 = vmatprep.subr.bf16.mxu0 0
    %988 = vmatpush1.bf16.msra.mxu0 0
    %989 = vmatprep.subr.bf16.mxu0 0
    %990 = vmatpush1.bf16.msra.mxu0 0
    %991 = vmatprep.subr.bf16.mxu0 0
    %992 = vmatpush1.bf16.msra.mxu0 0
    %993 = vmatprep.subr.bf16.mxu0 0
    %994 = vmatpush1.bf16.msra.mxu0 0
    %995 = vmatprep.subr.bf16.mxu0 0
    %996 = vmatpush1.bf16.msra.mxu0 0
    %997 = vmatprep.subr.bf16.mxu0 0
    %998 = vmatpush1.bf16.msra.mxu0 0
    %999 = vmatprep.subr.bf16.mxu0 0
    %1000 = vmatpush1.bf16.msra.mxu0 0
    %1001 = vmatprep.subr.bf16.mxu0 0
    %1002 = vmatpush1.bf16.msra.mxu0 0
    %1003 = vmatprep.subr.bf16.mxu0 0
    %1004 = vmatpush1.bf16.msra.mxu0 0
    %1005 = vmatprep.subr.bf16.mxu0 0
    %1006 = vmatpush1.bf16.msra.mxu0 0
    %1007 = vmatprep.mubr.bf16.mxu0 0
    %1008 = vmatmul.mubr.bf16.gmra.mrb[0].mxu0 %v973
    %v1009 = vpop.f32.mrb[0].mxu0
    %v1010 = vadd.f32 %v116, %v1009
    %v1011 = vpop.f32.mrb[0].mxu0
    %v1012 = vpop.f32.mrb[0].mxu0
    %v1013 = vpop.f32.mrb[0].mxu0
    %1014 = vdwg.mxu0
    %v1015 = vmax.f32 %v1010, 0.0
    %v1016 = vpack.c.bf16 %v1015, %v1015
    %1017 = vrot.lane.b32.xlu0 %v743, 96
    %v1018 = vpop.permute.xlu0 %1017
    %v1021 = vsel %vm290, %v1016, %v1018
    %v1022 = vsel %vm339, %v1021, 0
    %1024 = vmatprep.subr.bf16.mxu0 0
    %1025 = vmatpush1.bf16.msra.mxu0 %v91
    %1026 = vmatprep.subr.bf16.mxu0 0
    %1027 = vmatpush1.bf16.msra.mxu0 %v92
    %1028 = vmatprep.subr.bf16.mxu0 0
    %1029 = vmatpush1.bf16.msra.mxu0 %v93
    %1030 = vmatprep.subr.bf16.mxu0 0
    %1031 = vmatpush1.bf16.msra.mxu0 %v94
    %1032 = vmatprep.subr.bf16.mxu0 0
    %1033 = vmatpush1.bf16.msra.mxu0 0
    %1034 = vmatprep.subr.bf16.mxu0 0
    %1035 = vmatpush1.bf16.msra.mxu0 0
    %1036 = vmatprep.subr.bf16.mxu0 0
    %1037 = vmatpush1.bf16.msra.mxu0 0
    %1038 = vmatprep.subr.bf16.mxu0 0
    %1039 = vmatpush1.bf16.msra.mxu0 0
    %1040 = vmatprep.subr.bf16.mxu0 0
    %1041 = vmatpush1.bf16.msra.mxu0 0
    %1042 = vmatprep.subr.bf16.mxu0 0
    %1043 = vmatpush1.bf16.msra.mxu0 0
    %1044 = vmatprep.subr.bf16.mxu0 0
    %1045 = vmatpush1.bf16.msra.mxu0 0
    %1046 = vmatprep.subr.bf16.mxu0 0
    %1047 = vmatpush1.bf16.msra.mxu0 0
    %1048 = vmatprep.subr.bf16.mxu0 0
    %1049 = vmatpush1.bf16.msra.mxu0 0
    %1050 = vmatprep.subr.bf16.mxu0 0
    %1051 = vmatpush1.bf16.msra.mxu0 0
    %1052 = vmatprep.subr.bf16.mxu0 0
    %1053 = vmatpush1.bf16.msra.mxu0 0
    %1054 = vmatprep.subr.bf16.mxu0 0
    %1055 = vmatpush1.bf16.msra.mxu0 0
    %1056 = vmatprep.mubr.bf16.mxu0 0
    %1057 = vmatmul.mubr.bf16.gmra.mrb[0].mxu0 %v1022
    %v1058 = vpop.f32.mrb[0].mxu0
    %v1059 = vadd.f32 %v141, %v1058
    %v1060 = vpop.f32.mrb[0].mxu0
    %v1061 = vpop.f32.mrb[0].mxu0
    %v1062 = vpop.f32.mrb[0].mxu0
    %1063 = vdwg.mxu0
    %v1064 = vxor.u32 %v1059, 2147483648
    %v1065 = vmul.f32 %v1064, 1.442695
    %v1066 = vpow.pop %v1065
    %v1067 = vadd.f32 %v1066, 1.0
    %v1068 = vrcp.pop %v1067
    %v1069 = vmul.f32 1.0, %v1068
    %v1070 = vtanh.pop %v1059
    %v1071 = vmul.f32 %v1069, %v736
    %1073 = vrot.lane.b32.xlu0 %v1070, 32
    %v1074 = vpop.permute.xlu0 %1073
    %v1076 = vmul.f32 %v1069, %v1074
    %1078 = vrot.lane.b32.xlu0 %v1076, 32
    %v1079 = vpop.permute.xlu0 %1078
    %v1081 = vadd.f32 %v1071, %v1079
    %v1082 = vtanh.pop %v1081
    %1084 = vrot.lane.b32.xlu0 %v1082, 32
    %v1085 = vpop.permute.xlu0 %1084
    %v1087 = vmul.f32 %v1069, %v1085
    %v1088 = vpack.c.bf16 %v1087, %v1087
    %1090 = vrot.lane.b32.xlu0 %v1088, 64
    %v1091 = vpop.permute.xlu0 %1090
    %1092 = vrot.lane.b32.xlu0 %v818, 96
    %v1093 = vpop.permute.xlu0 %1092
    %v1096 = vsel %vm290, %v1091, %v1093
    %v1097 = vsel %vm339, %v1096, 0
    %1099 = vmatprep.subr.bf16.mxu0 0
    %1100 = vmatpush1.bf16.msra.mxu0 %v103
    %1101 = vmatprep.subr.bf16.mxu0 0
    %1102 = vmatpush1.bf16.msra.mxu0 %v104
    %1103 = vmatprep.subr.bf16.mxu0 0
    %1104 = vmatpush1.bf16.msra.mxu0 %v105
    %1105 = vmatprep.subr.bf16.mxu0 0
    %1106 = vmatpush1.bf16.msra.mxu0 %v106
    %1107 = vmatprep.subr.bf16.mxu0 0
    %1108 = vmatpush1.bf16.msra.mxu0 0
    %1109 = vmatprep.subr.bf16.mxu0 0
    %1110 = vmatpush1.bf16.msra.mxu0 0
    %1111 = vmatprep.subr.bf16.mxu0 0
    %1112 = vmatpush1.bf16.msra.mxu0 0
    %1113 = vmatprep.subr.bf16.mxu0 0
    %1114 = vmatpush1.bf16.msra.mxu0 0
    %1115 = vmatprep.subr.bf16.mxu0 0
    %1116 = vmatpush1.bf16.msra.mxu0 0
    %1117 = vmatprep.subr.bf16.mxu0 0
    %1118 = vmatpush1.bf16.msra.mxu0 0
    %1119 = vmatprep.subr.bf16.mxu0 0
    %1120 = vmatpush1.bf16.msra.mxu0 0
    %1121 = vmatprep.subr.bf16.mxu0 0
    %1122 = vmatpush1.bf16.msra.mxu0 0
    %1123 = vmatprep.subr.bf16.mxu0 0
    %1124 = vmatpush1.bf16.msra.mxu0 0
    %1125 = vmatprep.subr.bf16.mxu0 0
    %1126 = vmatpush1.bf16.msra.mxu0 0
    %1127 = vmatprep.subr.bf16.mxu0 0
    %1128 = vmatpush1.bf16.msra.mxu0 0
    %1129 = vmatprep.subr.bf16.mxu0 0
    %1130 = vmatpush1.bf16.msra.mxu0 0
    %1131 = vmatprep.mubr.bf16.mxu0 0
    %1132 = vmatmul.mubr.bf16.gmra.mrb[0].mxu0 %v1097
    %v1133 = vpop.f32.mrb[0].mxu0
    %v1134 = vadd.f32 %v146, %v1133
    %v1135 = vpop.f32.mrb[0].mxu0
    %v1136 = vpop.f32.mrb[0].mxu0
    %v1137 = vpop.f32.mrb[0].mxu0
    %1138 = vdwg.mxu0
    %v1139 = vxor.u32 %v1134, 2147483648
    %v1140 = vmul.f32 %v1139, 1.442695
    %v1141 = vpow.pop %v1140
    %v1142 = vadd.f32 %v1141, 1.0
    %v1143 = vrcp.pop %v1142
    %v1144 = vmul.f32 1.0, %v1143
    %v1145 = vtanh.pop %v1134
    %v1146 = vmul.f32 %v1144, %v811
    %1148 = vrot.lane.b32.xlu0 %v1145, 32
    %v1149 = vpop.permute.xlu0 %1148
    %v1151 = vmul.f32 %v1144, %v1149
    %1153 = vrot.lane.b32.xlu0 %v1151, 32
    %v1154 = vpop.permute.xlu0 %1153
    %v1156 = vadd.f32 %v1146, %v1154
    %v1157 = vtanh.pop %v1156
    %1159 = vrot.lane.b32.xlu0 %v1157, 32
    %v1160 = vpop.permute.xlu0 %1159
    %v1162 = vmul.f32 %v1144, %v1160
    %v1163 = vpack.c.bf16 %v1162, %v1162
    %1165 = vrot.lane.b32.xlu0 %v1163, 64
    %v1166 = vpop.permute.xlu0 %1165
    %v1168 = vsel %vm290, %v1166, 0
    %1170 = vmatprep.subr.bf16.mxu0 0
    %1171 = vmatpush1.bf16.msra.mxu0 %v69
    %1172 = vmatprep.subr.bf16.mxu0 0
    %1173 = vmatpush1.bf16.msra.mxu0 %v70
    %1174 = vmatprep.subr.bf16.mxu0 0
    %1175 = vmatpush1.bf16.msra.mxu0 0
    %1176 = vmatprep.subr.bf16.mxu0 0
    %1177 = vmatpush1.bf16.msra.mxu0 0
    %1178 = vmatprep.subr.bf16.mxu0 0
    %1179 = vmatpush1.bf16.msra.mxu0 0
    %1180 = vmatprep.subr.bf16.mxu0 0
    %1181 = vmatpush1.bf16.msra.mxu0 0
    %1182 = vmatprep.subr.bf16.mxu0 0
    %1183 = vmatpush1.bf16.msra.mxu0 0
    %1184 = vmatprep.subr.bf16.mxu0 0
    %1185 = vmatpush1.bf16.msra.mxu0 0
    %1186 = vmatprep.subr.bf16.mxu0 0
    %1187 = vmatpush1.bf16.msra.mxu0 0
    %1188 = vmatprep.subr.bf16.mxu0 0
    %1189 = vmatpush1.bf16.msra.mxu0 0
    %1190 = vmatprep.subr.bf16.mxu0 0
    %1191 = vmatpush1.bf16.msra.mxu0 0
    %1192 = vmatprep.subr.bf16.mxu0 0
    %1193 = vmatpush1.bf16.msra.mxu0 0
    %1194 = vmatprep.subr.bf16.mxu0 0
    %1195 = vmatpush1.bf16.msra.mxu0 0
    %1196 = vmatprep.subr.bf16.mxu0 0
    %1197 = vmatpush1.bf16.msra.mxu0 0
    %1198 = vmatprep.subr.bf16.mxu0 0
    %1199 = vmatpush1.bf16.msra.mxu0 0
    %1200 = vmatprep.subr.bf16.mxu0 0
    %1201 = vmatpush1.bf16.msra.mxu0 0
    %1202 = vmatprep.mubr.bf16.mxu0 0
    %1203 = vmatmul.mubr.bf16.gmra.mrb[0].mxu0 %v1168
    %v1204 = vpop.f32.mrb[0].mxu0
    %v1205 = vadd.f32 %v121, %v1204
    %v1206 = vpop.f32.mrb[0].mxu0
    %v1207 = vpop.f32.mrb[0].mxu0
    %v1208 = vpop.f32.mrb[0].mxu0
    %1209 = vdwg.mxu0
    %v1210 = vmax.f32 %v1205, 0.0
    %v1211 = vpack.c.bf16 %v1210, %v1210
    %v1213 = vsel %vm290, %v1211, 0
    %1215 = vmatprep.subr.bf16.mxu0 0
    %1216 = vmatpush1.bf16.msra.mxu0 %v75
    %1217 = vmatprep.subr.bf16.mxu0 0
    %1218 = vmatpush1.bf16.msra.mxu0 %v76
    %1219 = vmatprep.subr.bf16.mxu0 0
    %1220 = vmatpush1.bf16.msra.mxu0 0
    %1221 = vmatprep.subr.bf16.mxu0 0
    %1222 = vmatpush1.bf16.msra.mxu0 0
    %1223 = vmatprep.subr.bf16.mxu0 0
    %1224 = vmatpush1.bf16.msra.mxu0 0
    %1225 = vmatprep.subr.bf16.mxu0 0
    %1226 = vmatpush1.bf16.msra.mxu0 0
    %1227 = vmatprep.subr.bf16.mxu0 0
    %1228 = vmatpush1.bf16.msra.mxu0 0
    %1229 = vmatprep.subr.bf16.mxu0 0
    %1230 = vmatpush1.bf16.msra.mxu0 0
    %1231 = vmatprep.subr.bf16.mxu0 0
    %1232 = vmatpush1.bf16.msra.mxu0 0
    %1233 = vmatprep.subr.bf16.mxu0 0
    %1234 = vmatpush1.bf16.msra.mxu0 0
    %1235 = vmatprep.subr.bf16.mxu0 0
    %1236 = vmatpush1.bf16.msra.mxu0 0
    %1237 = vmatprep.subr.bf16.mxu0 0
    %1238 = vmatpush1.bf16.msra.mxu0 0
    %1239 = vmatprep.subr.bf16.mxu0 0
    %1240 = vmatpush1.bf16.msra.mxu0 0
    %1241 = vmatprep.subr.bf16.mxu0 0
    %1242 = vmatpush1.bf16.msra.mxu0 0
    %1243 = vmatprep.subr.bf16.mxu0 0
    %1244 = vmatpush1.bf16.msra.mxu0 0
    %1245 = vmatprep.subr.bf16.mxu0 0
    %1246 = vmatpush1.bf16.msra.mxu0 0
    %1247 = vmatprep.mubr.bf16.mxu0 0
    %1248 = vmatmul.mubr.bf16.gmra.mrb[0].mxu0 %v1213
    %v1249 = vpop.f32.mrb[0].mxu0
    %v1250 = vadd.f32 %v126, %v1249
    %v1251 = vpop.f32.mrb[0].mxu0
    %v1252 = vpop.f32.mrb[0].mxu0
    %v1253 = vpop.f32.mrb[0].mxu0
    %1254 = vdwg.mxu0
    %v1255 = vmax.f32 %v1250, 0.0
    %v1256 = vpack.c.bf16 %v1255, %v1255
    %v1258 = vsel %vm290, %v1256, 0
    %1260 = vmatprep.subr.bf16.mxu0 0
    %1261 = vmatpush1.bf16.msra.mxu0 %v81
    %1262 = vmatprep.subr.bf16.mxu0 0
    %1263 = vmatpush1.bf16.msra.mxu0 %v82
    %1264 = vmatprep.subr.bf16.mxu0 0
    %1265 = vmatpush1.bf16.msra.mxu0 0
    %1266 = vmatprep.subr.bf16.mxu0 0
    %1267 = vmatpush1.bf16.msra.mxu0 0
    %1268 = vmatprep.subr.bf16.mxu0 0
    %1269 = vmatpush1.bf16.msra.mxu0 0
    %1270 = vmatprep.subr.bf16.mxu0 0
    %1271 = vmatpush1.bf16.msra.mxu0 0
    %1272 = vmatprep.subr.bf16.mxu0 0
    %1273 = vmatpush1.bf16.msra.mxu0 0
    %1274 = vmatprep.subr.bf16.mxu0 0
    %1275 = vmatpush1.bf16.msra.mxu0 0
    %1276 = vmatprep.subr.bf16.mxu0 0
    %1277 = vmatpush1.bf16.msra.mxu0 0
    %1278 = vmatprep.subr.bf16.mxu0 0
    %1279 = vmatpush1.bf16.msra.mxu0 0
    %1280 = vmatprep.subr.bf16.mxu0 0
    %1281 = vmatpush1.bf16.msra.mxu0 0
    %1282 = vmatprep.subr.bf16.mxu0 0
    %1283 = vmatpush1.bf16.msra.mxu0 0
    %1284 = vmatprep.subr.bf16.mxu0 0
    %1285 = vmatpush1.bf16.msra.mxu0 0
    %1286 = vmatprep.subr.bf16.mxu0 0
    %1287 = vmatpush1.bf16.msra.mxu0 0
    %1288 = vmatprep.subr.bf16.mxu0 0
    %1289 = vmatpush1.bf16.msra.mxu0 0
    %1290 = vmatprep.subr.bf16.mxu0 0
    %1291 = vmatpush1.bf16.msra.mxu0 0
    %1292 = vmatprep.mubr.bf16.mxu0 0
    %1293 = vmatmul.mubr.bf16.gmra.mrb[0].mxu0 %v1258
    %v1294 = vpop.f32.mrb[0].mxu0
    %v1295 = vadd.f32 0.0, %v1294
    %v1296 = vpop.f32.mrb[0].mxu0
    %v1297 = vpop.f32.mrb[0].mxu0
    %v1298 = vpop.f32.mrb[0].mxu0
    %1299 = vdwg.mxu0
    %v1300 = vadd.f32 %v956, %v1295
    %v1301 = vadd.f32 %v1300, %v131
    %1303 = vrot.lane.b32.xlu0 %v1295, 112
    %v1304 = vpop.permute.xlu0 %1303
    %v1306 = vadd.f32 %v962, %v1304
    %v1307 = vadd.f32 %v1306, %v136
    %1309 = vrot.lane.b32.xlu0 %v1301, 32
    %v1310 = vpop.permute.xlu0 %1309
    %vm1312 = vcmask 392448
    %1313 = vst.msk [vmem:[%s3] sm:$0xff] %vm1312, %v1310
    %v1314 = vadd.f32 %v1307, %v222
    %v1315 = vmax.f32 %v1314, 0.0
    %v1316 = vpack.c.bf16 %v1315, %v1315
    %v1318 = vsel %vm290, %v1316, 0
    %1320 = vmatprep.subr.bf16.mxu0 0
    %1321 = vmatpush1.bf16.msra.mxu0 %v63
    %1322 = vmatprep.subr.bf16.mxu0 0
    %1323 = vmatpush1.bf16.msra.mxu0 %v64
    %1324 = vmatprep.subr.bf16.mxu0 0
    %1325 = vmatpush1.bf16.msra.mxu0 0
    %1326 = vmatprep.subr.bf16.mxu0 0
    %1327 = vmatpush1.bf16.msra.mxu0 0
    %1328 = vmatprep.subr.bf16.mxu0 0
    %1329 = vmatpush1.bf16.msra.mxu0 0
    %1330 = vmatprep.subr.bf16.mxu0 0
    %1331 = vmatpush1.bf16.msra.mxu0 0
    %1332 = vmatprep.subr.bf16.mxu0 0
    %1333 = vmatpush1.bf16.msra.mxu0 0
    %1334 = vmatprep.subr.bf16.mxu0 0
    %1335 = vmatpush1.bf16.msra.mxu0 0
    %1336 = vmatprep.subr.bf16.mxu0 0
    %1337 = vmatpush1.bf16.msra.mxu0 0
    %1338 = vmatprep.subr.bf16.mxu0 0
    %1339 = vmatpush1.bf16.msra.mxu0 0
    %1340 = vmatprep.subr.bf16.mxu0 0
    %1341 = vmatpush1.bf16.msra.mxu0 0
    %1342 = vmatprep.subr.bf16.mxu0 0
    %1343 = vmatpush1.bf16.msra.mxu0 0
    %1344 = vmatprep.subr.bf16.mxu0 0
    %1345 = vmatpush1.bf16.msra.mxu0 0
    %1346 = vmatprep.subr.bf16.mxu0 0
    %1347 = vmatpush1.bf16.msra.mxu0 0
    %1348 = vmatprep.subr.bf16.mxu0 0
    %1349 = vmatpush1.bf16.msra.mxu0 0
    %1350 = vmatprep.subr.bf16.mxu0 0
    %1351 = vmatpush1.bf16.msra.mxu0 0
    %1352 = vmatprep.mubr.bf16.mxu0 0
    %1353 = vmatmul.mubr.bf16.gmra.mrb[0].mxu0 %v1318
    %v1354 = vpop.f32.mrb[0].mxu0
    %v1355 = vadd.f32 %v116, %v1354
    %v1356 = vpop.f32.mrb[0].mxu0
    %v1357 = vpop.f32.mrb[0].mxu0
    %v1358 = vpop.f32.mrb[0].mxu0
    %1359 = vdwg.mxu0
    %v1360 = vmax.f32 %v1355, 0.0
    %v1361 = vpack.c.bf16 %v1360, %v1360
    %1362 = vrot.lane.b32.xlu0 %v1088, 96
    %v1363 = vpop.permute.xlu0 %1362
    %v1366 = vsel %vm290, %v1361, %v1363
    %v1367 = vsel %vm339, %v1366, 0
    %1369 = vmatprep.subr.bf16.mxu0 0
    %1370 = vmatpush1.bf16.msra.mxu0 %v91
    %1371 = vmatprep.subr.bf16.mxu0 0
    %1372 = vmatpush1.bf16.msra.mxu0 %v92
    %1373 = vmatprep.subr.bf16.mxu0 0
    %1374 = vmatpush1.bf16.msra.mxu0 %v93
    %1375 = vmatprep.subr.bf16.mxu0 0
    %1376 = vmatpush1.bf16.msra.mxu0 %v94
    %1377 = vmatprep.subr.bf16.mxu0 0
    %1378 = vmatpush1.bf16.msra.mxu0 0
    %1379 = vmatprep.subr.bf16.mxu0 0
    %1380 = vmatpush1.bf16.msra.mxu0 0
    %1381 = vmatprep.subr.bf16.mxu0 0
    %1382 = vmatpush1.bf16.msra.mxu0 0
    %1383 = vmatprep.subr.bf16.mxu0 0
    %1384 = vmatpush1.bf16.msra.mxu0 0
    %1385 = vmatprep.subr.bf16.mxu0 0
    %1386 = vmatpush1.bf16.msra.mxu0 0
    %1387 = vmatprep.subr.bf16.mxu0 0
    %1388 = vmatpush1.bf16.msra.mxu0 0
    %1389 = vmatprep.subr.bf16.mxu0 0
    %1390 = vmatpush1.bf16.msra.mxu0 0
    %1391 = vmatprep.subr.bf16.mxu0 0
    %1392 = vmatpush1.bf16.msra.mxu0 0
    %1393 = vmatprep.subr.bf16.mxu0 0
    %1394 = vmatpush1.bf16.msra.mxu0 0
    %1395 = vmatprep.subr.bf16.mxu0 0
    %1396 = vmatpush1.bf16.msra.mxu0 0
    %1397 = vmatprep.subr.bf16.mxu0 0
    %1398 = vmatpush1.bf16.msra.mxu0 0
    %1399 = vmatprep.subr.bf16.mxu0 0
    %1400 = vmatpush1.bf16.msra.mxu0 0
    %1401 = vmatprep.mubr.bf16.mxu0 0
    %1402 = vmatmul.mubr.bf16.gmra.mrb[0].mxu0 %v1367
    %v1403 = vpop.f32.mrb[0].mxu0
    %v1404 = vadd.f32 %v141, %v1403
    %v1405 = vpop.f32.mrb[0].mxu0
    %v1406 = vpop.f32.mrb[0].mxu0
    %v1407 = vpop.f32.mrb[0].mxu0
    %1408 = vdwg.mxu0
    %v1409 = vxor.u32 %v1404, 2147483648
    %v1410 = vmul.f32 %v1409, 1.442695
    %v1411 = vpow.pop %v1410
    %v1412 = vadd.f32 %v1411, 1.0
    %v1413 = vrcp.pop %v1412
    %v1414 = vmul.f32 1.0, %v1413
    %v1415 = vtanh.pop %v1404
    %v1416 = vmul.f32 %v1414, %v1081
    %1418 = vrot.lane.b32.xlu0 %v1415, 32
    %v1419 = vpop.permute.xlu0 %1418
    %v1421 = vmul.f32 %v1414, %v1419
    %1423 = vrot.lane.b32.xlu0 %v1421, 32
    %v1424 = vpop.permute.xlu0 %1423
    %v1426 = vadd.f32 %v1416, %v1424
    %v1427 = vtanh.pop %v1426
    %1429 = vrot.lane.b32.xlu0 %v1427, 32
    %v1430 = vpop.permute.xlu0 %1429
    %v1432 = vmul.f32 %v1414, %v1430
    %v1433 = vpack.c.bf16 %v1432, %v1432
    %1435 = vrot.lane.b32.xlu0 %v1433, 64
    %v1436 = vpop.permute.xlu0 %1435
    %1437 = vrot.lane.b32.xlu0 %v1163, 96
    %v1438 = vpop.permute.xlu0 %1437
    %v1441 = vsel %vm290, %v1436, %v1438
    %v1442 = vsel %vm339, %v1441, 0
    %1444 = vmatprep.subr.bf16.mxu0 0
    %1445 = vmatpush1.bf16.msra.mxu0 %v103
    %1446 = vmatprep.subr.bf16.mxu0 0
    %1447 = vmatpush1.bf16.msra.mxu0 %v104
    %1448 = vmatprep.subr.bf16.mxu0 0
    %1449 = vmatpush1.bf16.msra.mxu0 %v105
    %1450 = vmatprep.subr.bf16.mxu0 0
    %1451 = vmatpush1.bf16.msra.mxu0 %v106
    %1452 = vmatprep.subr.bf16.mxu0 0
    %1453 = vmatpush1.bf16.msra.mxu0 0
    %1454 = vmatprep.subr.bf16.mxu0 0
    %1455 = vmatpush1.bf16.msra.mxu0 0
    %1456 = vmatprep.subr.bf16.mxu0 0
    %1457 = vmatpush1.bf16.msra.mxu0 0
    %1458 = vmatprep.subr.bf16.mxu0 0
    %1459 = vmatpush1.bf16.msra.mxu0 0
    %1460 = vmatprep.subr.bf16.mxu0 0
    %1461 = vmatpush1.bf16.msra.mxu0 0
    %1462 = vmatprep.subr.bf16.mxu0 0
    %1463 = vmatpush1.bf16.msra.mxu0 0
    %1464 = vmatprep.subr.bf16.mxu0 0
    %1465 = vmatpush1.bf16.msra.mxu0 0
    %1466 = vmatprep.subr.bf16.mxu0 0
    %1467 = vmatpush1.bf16.msra.mxu0 0
    %1468 = vmatprep.subr.bf16.mxu0 0
    %1469 = vmatpush1.bf16.msra.mxu0 0
    %1470 = vmatprep.subr.bf16.mxu0 0
    %1471 = vmatpush1.bf16.msra.mxu0 0
    %1472 = vmatprep.subr.bf16.mxu0 0
    %1473 = vmatpush1.bf16.msra.mxu0 0
    %1474 = vmatprep.subr.bf16.mxu0 0
    %1475 = vmatpush1.bf16.msra.mxu0 0
    %1476 = vmatprep.mubr.bf16.mxu0 0
    %1477 = vmatmul.mubr.bf16.gmra.mrb[0].mxu0 %v1442
    %v1478 = vpop.f32.mrb[0].mxu0
    %v1479 = vadd.f32 %v146, %v1478
    %v1480 = vpop.f32.mrb[0].mxu0
    %v1481 = vpop.f32.mrb[0].mxu0
    %v1482 = vpop.f32.mrb[0].mxu0
    %1483 = vdwg.mxu0
    %v1484 = vxor.u32 %v1479, 2147483648
    %v1485 = vmul.f32 %v1484, 1.442695
    %v1486 = vpow.pop %v1485
    %v1487 = vadd.f32 %v1486, 1.0
    %v1488 = vrcp.pop %v1487
    %v1489 = vmul.f32 1.0, %v1488
    %v1490 = vtanh.pop %v1479
    %v1491 = vmul.f32 %v1489, %v1156
    %1493 = vrot.lane.b32.xlu0 %v1490, 32
    %v1494 = vpop.permute.xlu0 %1493
    %v1496 = vmul.f32 %v1489, %v1494
    %1498 = vrot.lane.b32.xlu0 %v1496, 32
    %v1499 = vpop.permute.xlu0 %1498
    %v1501 = vadd.f32 %v1491, %v1499
    %v1502 = vtanh.pop %v1501
    %1504 = vrot.lane.b32.xlu0 %v1502, 32
    %v1505 = vpop.permute.xlu0 %1504
    %v1507 = vmul.f32 %v1489, %v1505
    %v1508 = vpack.c.bf16 %v1507, %v1507
    %1510 = vrot.lane.b32.xlu0 %v1508, 64
    %v1511 = vpop.permute.xlu0 %1510
    %v1513 = vsel %vm290, %v1511, 0
    %1515 = vmatprep.subr.bf16.mxu0 0
    %1516 = vmatpush1.bf16.msra.mxu0 %v69
    %1517 = vmatprep.subr.bf16.mxu0 0
    %1518 = vmatpush1.bf16.msra.mxu0 %v70
    %1519 = vmatprep.subr.bf16.mxu0 0
    %1520 = vmatpush1.bf16.msra.mxu0 0
    %1521 = vmatprep.subr.bf16.mxu0 0
    %1522 = vmatpush1.bf16.msra.mxu0 0
    %1523 = vmatprep.subr.bf16.mxu0 0
    %1524 = vmatpush1.bf16.msra.mxu0 0
    %1525 = vmatprep.subr.bf16.mxu0 0
    %1526 = vmatpush1.bf16.msra.mxu0 0
    %1527 = vmatprep.subr.bf16.mxu0 0
    %1528 = vmatpush1.bf16.msra.mxu0 0
    %1529 = vmatprep.subr.bf16.mxu0 0
    %1530 = vmatpush1.bf16.msra.mxu0 0
    %1531 = vmatprep.subr.bf16.mxu0 0
    %1532 = vmatpush1.bf16.msra.mxu0 0
    %1533 = vmatprep.subr.bf16.mxu0 0
    %1534 = vmatpush1.bf16.msra.mxu0 0
    %1535 = vmatprep.subr.bf16.mxu0 0
    %1536 = vmatpush1.bf16.msra.mxu0 0
    %1537 = vmatprep.subr.bf16.mxu0 0
    %1538 = vmatpush1.bf16.msra.mxu0 0
    %1539 = vmatprep.subr.bf16.mxu0 0
    %1540 = vmatpush1.bf16.msra.mxu0 0
    %1541 = vmatprep.subr.bf16.mxu0 0
    %1542 = vmatpush1.bf16.msra.mxu0 0
    %1543 = vmatprep.subr.bf16.mxu0 0
    %1544 = vmatpush1.bf16.msra.mxu0 0
    %1545 = vmatprep.subr.bf16.mxu0 0
    %1546 = vmatpush1.bf16.msra.mxu0 0
    %1547 = vmatprep.mubr.bf16.mxu0 0
    %1548 = vmatmul.mubr.bf16.gmra.mrb[0].mxu0 %v1513
    %v1549 = vpop.f32.mrb[0].mxu0
    %v1550 = vadd.f32 %v121, %v1549
    %v1551 = vpop.f32.mrb[0].mxu0
    %v1552 = vpop.f32.mrb[0].mxu0
    %v1553 = vpop.f32.mrb[0].mxu0
    %1554 = vdwg.mxu0
    %v1555 = vmax.f32 %v1550, 0.0
    %v1556 = vpack.c.bf16 %v1555, %v1555
    %v1558 = vsel %vm290, %v1556, 0
    %1560 = vmatprep.subr.bf16.mxu0 0
    %1561 = vmatpush1.bf16.msra.mxu0 %v75
    %1562 = vmatprep.subr.bf16.mxu0 0
    %1563 = vmatpush1.bf16.msra.mxu0 %v76
    %1564 = vmatprep.subr.bf16.mxu0 0
    %1565 = vmatpush1.bf16.msra.mxu0 0
    %1566 = vmatprep.subr.bf16.mxu0 0
    %1567 = vmatpush1.bf16.msra.mxu0 0
    %1568 = vmatprep.subr.bf16.mxu0 0
    %1569 = vmatpush1.bf16.msra.mxu0 0
    %1570 = vmatprep.subr.bf16.mxu0 0
    %1571 = vmatpush1.bf16.msra.mxu0 0
    %1572 = vmatprep.subr.bf16.mxu0 0
    %1573 = vmatpush1.bf16.msra.mxu0 0
    %1574 = vmatprep.subr.bf16.mxu0 0
    %1575 = vmatpush1.bf16.msra.mxu0 0
    %1576 = vmatprep.subr.bf16.mxu0 0
    %1577 = vmatpush1.bf16.msra.mxu0 0
    %1578 = vmatprep.subr.bf16.mxu0 0
    %1579 = vmatpush1.bf16.msra.mxu0 0
    %1580 = vmatprep.subr.bf16.mxu0 0
    %1581 = vmatpush1.bf16.msra.mxu0 0
    %1582 = vmatprep.subr.bf16.mxu0 0
    %1583 = vmatpush1.bf16.msra.mxu0 0
    %1584 = vmatprep.subr.bf16.mxu0 0
    %1585 = vmatpush1.bf16.msra.mxu0 0
    %1586 = vmatprep.subr.bf16.mxu0 0
    %1587 = vmatpush1.bf16.msra.mxu0 0
    %1588 = vmatprep.subr.bf16.mxu0 0
    %1589 = vmatpush1.bf16.msra.mxu0 0
    %1590 = vmatprep.subr.bf16.mxu0 0
    %1591 = vmatpush1.bf16.msra.mxu0 0
    %1592 = vmatprep.mubr.bf16.mxu0 0
    %1593 = vmatmul.mubr.bf16.gmra.mrb[0].mxu0 %v1558
    %v1594 = vpop.f32.mrb[0].mxu0
    %v1595 = vadd.f32 %v126, %v1594
    %v1596 = vpop.f32.mrb[0].mxu0
    %v1597 = vpop.f32.mrb[0].mxu0
    %v1598 = vpop.f32.mrb[0].mxu0
    %1599 = vdwg.mxu0
    %v1600 = vmax.f32 %v1595, 0.0
    %v1601 = vpack.c.bf16 %v1600, %v1600
    %v1603 = vsel %vm290, %v1601, 0
    %1605 = vmatprep.subr.bf16.mxu0 0
    %1606 = vmatpush1.bf16.msra.mxu0 %v81
    %1607 = vmatprep.subr.bf16.mxu0 0
    %1608 = vmatpush1.bf16.msra.mxu0 %v82
    %1609 = vmatprep.subr.bf16.mxu0 0
    %1610 = vmatpush1.bf16.msra.mxu0 0
    %1611 = vmatprep.subr.bf16.mxu0 0
    %1612 = vmatpush1.bf16.msra.mxu0 0
    %1613 = vmatprep.subr.bf16.mxu0 0
    %1614 = vmatpush1.bf16.msra.mxu0 0
    %1615 = vmatprep.subr.bf16.mxu0 0
    %1616 = vmatpush1.bf16.msra.mxu0 0
    %1617 = vmatprep.subr.bf16.mxu0 0
    %1618 = vmatpush1.bf16.msra.mxu0 0
    %1619 = vmatprep.subr.bf16.mxu0 0
    %1620 = vmatpush1.bf16.msra.mxu0 0
    %1621 = vmatprep.subr.bf16.mxu0 0
    %1622 = vmatpush1.bf16.msra.mxu0 0
    %1623 = vmatprep.subr.bf16.mxu0 0
    %1624 = vmatpush1.bf16.msra.mxu0 0
    %1625 = vmatprep.subr.bf16.mxu0 0
    %1626 = vmatpush1.bf16.msra.mxu0 0
    %1627 = vmatprep.subr.bf16.mxu0 0
    %1628 = vmatpush1.bf16.msra.mxu0 0
    %1629 = vmatprep.subr.bf16.mxu0 0
    %1630 = vmatpush1.bf16.msra.mxu0 0
    %1631 = vmatprep.subr.bf16.mxu0 0
    %1632 = vmatpush1.bf16.msra.mxu0 0
    %1633 = vmatprep.subr.bf16.mxu0 0
    %1634 = vmatpush1.bf16.msra.mxu0 0
    %1635 = vmatprep.subr.bf16.mxu0 0
    %1636 = vmatpush1.bf16.msra.mxu0 0
    %1637 = vmatprep.mubr.bf16.mxu0 0
    %1638 = vmatmul.mubr.bf16.gmra.mrb[0].mxu0 %v1603
    %v1639 = vpop.f32.mrb[0].mxu0
    %v1640 = vadd.f32 0.0, %v1639
    %v1641 = vpop.f32.mrb[0].mxu0
    %v1642 = vpop.f32.mrb[0].mxu0
    %v1643 = vpop.f32.mrb[0].mxu0
    %1644 = vdwg.mxu0
    %v1645 = vadd.f32 %v1301, %v1640
    %v1646 = vadd.f32 %v1645, %v131
    %1648 = vrot.lane.b32.xlu0 %v1640, 112
    %v1649 = vpop.permute.xlu0 %1648
    %v1651 = vadd.f32 %v1307, %v1649
    %v1652 = vadd.f32 %v1651, %v136
    %1654 = vrot.lane.b32.xlu0 %v1646, 48
    %v1655 = vpop.permute.xlu0 %1654
    %vm1657 = vcmask 523648
    %1658 = vst.msk [vmem:[%s3] sm:$0xff] %vm1657, %v1655
    %v1659 = vadd.f32 %v1652, %v227
    %v1660 = vmax.f32 %v1659, 0.0
    %v1661 = vpack.c.bf16 %v1660, %v1660
    %v1663 = vsel %vm290, %v1661, 0
    %1665 = vmatprep.subr.bf16.mxu0 0
    %1666 = vmatpush1.bf16.msra.mxu0 %v63
    %1667 = vmatprep.subr.bf16.mxu0 0
    %1668 = vmatpush1.bf16.msra.mxu0 %v64
    %1669 = vmatprep.subr.bf16.mxu0 0
    %1670 = vmatpush1.bf16.msra.mxu0 0
    %1671 = vmatprep.subr.bf16.mxu0 0
    %1672 = vmatpush1.bf16.msra.mxu0 0
    %1673 = vmatprep.subr.bf16.mxu0 0
    %1674 = vmatpush1.bf16.msra.mxu0 0
    %1675 = vmatprep.subr.bf16.mxu0 0
    %1676 = vmatpush1.bf16.msra.mxu0 0
    %1677 = vmatprep.subr.bf16.mxu0 0
    %1678 = vmatpush1.bf16.msra.mxu0 0
    %1679 = vmatprep.subr.bf16.mxu0 0
    %1680 = vmatpush1.bf16.msra.mxu0 0
    %1681 = vmatprep.subr.bf16.mxu0 0
    %1682 = vmatpush1.bf16.msra.mxu0 0
    %1683 = vmatprep.subr.bf16.mxu0 0
    %1684 = vmatpush1.bf16.msra.mxu0 0
    %1685 = vmatprep.subr.bf16.mxu0 0
    %1686 = vmatpush1.bf16.msra.mxu0 0
    %1687 = vmatprep.subr.bf16.mxu0 0
    %1688 = vmatpush1.bf16.msra.mxu0 0
    %1689 = vmatprep.subr.bf16.mxu0 0
    %1690 = vmatpush1.bf16.msra.mxu0 0
    %1691 = vmatprep.subr.bf16.mxu0 0
    %1692 = vmatpush1.bf16.msra.mxu0 0
    %1693 = vmatprep.subr.bf16.mxu0 0
    %1694 = vmatpush1.bf16.msra.mxu0 0
    %1695 = vmatprep.subr.bf16.mxu0 0
    %1696 = vmatpush1.bf16.msra.mxu0 0
    %1697 = vmatprep.mubr.bf16.mxu0 0
    %1698 = vmatmul.mubr.bf16.gmra.mrb[0].mxu0 %v1663
    %v1699 = vpop.f32.mrb[0].mxu0
    %v1700 = vadd.f32 %v116, %v1699
    %v1701 = vpop.f32.mrb[0].mxu0
    %v1702 = vpop.f32.mrb[0].mxu0
    %v1703 = vpop.f32.mrb[0].mxu0
    %1704 = vdwg.mxu0
    %v1705 = vmax.f32 %v1700, 0.0
    %v1706 = vpack.c.bf16 %v1705, %v1705
    %1707 = vrot.lane.b32.xlu0 %v1433, 96
    %v1708 = vpop.permute.xlu0 %1707
    %v1711 = vsel %vm290, %v1706, %v1708
    %v1712 = vsel %vm339, %v1711, 0
    %1714 = vmatprep.subr.bf16.mxu0 0
    %1715 = vmatpush1.bf16.msra.mxu0 %v91
    %1716 = vmatprep.subr.bf16.mxu0 0
    %1717 = vmatpush1.bf16.msra.mxu0 %v92
    %1718 = vmatprep.subr.bf16.mxu0 0
    %1719 = vmatpush1.bf16.msra.mxu0 %v93
    %1720 = vmatprep.subr.bf16.mxu0 0
    %1721 = vmatpush1.bf16.msra.mxu0 %v94
    %1722 = vmatprep.subr.bf16.mxu0 0
    %1723 = vmatpush1.bf16.msra.mxu0 0
    %1724 = vmatprep.subr.bf16.mxu0 0
    %1725 = vmatpush1.bf16.msra.mxu0 0
    %1726 = vmatprep.subr.bf16.mxu0 0
    %1727 = vmatpush1.bf16.msra.mxu0 0
    %1728 = vmatprep.subr.bf16.mxu0 0
    %1729 = vmatpush1.bf16.msra.mxu0 0
    %1730 = vmatprep.subr.bf16.mxu0 0
    %1731 = vmatpush1.bf16.msra.mxu0 0
    %1732 = vmatprep.subr.bf16.mxu0 0
    %1733 = vmatpush1.bf16.msra.mxu0 0
    %1734 = vmatprep.subr.bf16.mxu0 0
    %1735 = vmatpush1.bf16.msra.mxu0 0
    %1736 = vmatprep.subr.bf16.mxu0 0
    %1737 = vmatpush1.bf16.msra.mxu0 0
    %1738 = vmatprep.subr.bf16.mxu0 0
    %1739 = vmatpush1.bf16.msra.mxu0 0
    %1740 = vmatprep.subr.bf16.mxu0 0
    %1741 = vmatpush1.bf16.msra.mxu0 0
    %1742 = vmatprep.subr.bf16.mxu0 0
    %1743 = vmatpush1.bf16.msra.mxu0 0
    %1744 = vmatprep.subr.bf16.mxu0 0
    %1745 = vmatpush1.bf16.msra.mxu0 0
    %1746 = vmatprep.mubr.bf16.mxu0 0
    %1747 = vmatmul.mubr.bf16.gmra.mrb[0].mxu0 %v1712
    %v1748 = vpop.f32.mrb[0].mxu0
    %v1749 = vadd.f32 %v141, %v1748
    %v1750 = vpop.f32.mrb[0].mxu0
    %v1751 = vpop.f32.mrb[0].mxu0
    %v1752 = vpop.f32.mrb[0].mxu0
    %1753 = vdwg.mxu0
    %v1754 = vxor.u32 %v1749, 2147483648
    %v1755 = vmul.f32 %v1754, 1.442695
    %v1756 = vpow.pop %v1755
    %v1757 = vadd.f32 %v1756, 1.0
    %v1758 = vrcp.pop %v1757
    %v1759 = vmul.f32 1.0, %v1758
    %v1760 = vtanh.pop %v1749
    %v1761 = vmul.f32 %v1759, %v1426
    %1763 = vrot.lane.b32.xlu0 %v1760, 32
    %v1764 = vpop.permute.xlu0 %1763
    %v1766 = vmul.f32 %v1759, %v1764
    %1768 = vrot.lane.b32.xlu0 %v1766, 32
    %v1769 = vpop.permute.xlu0 %1768
    %v1771 = vadd.f32 %v1761, %v1769
    %v1772 = vtanh.pop %v1771
    %1774 = vrot.lane.b32.xlu0 %v1772, 32
    %v1775 = vpop.permute.xlu0 %1774
    %v1777 = vmul.f32 %v1759, %v1775
    %v1778 = vpack.c.bf16 %v1777, %v1777
    %1780 = vrot.lane.b32.xlu0 %v1778, 64
    %v1781 = vpop.permute.xlu0 %1780
    %1782 = vrot.lane.b32.xlu0 %v1508, 96
    %v1783 = vpop.permute.xlu0 %1782
    %v1786 = vsel %vm290, %v1781, %v1783
    %v1787 = vsel %vm339, %v1786, 0
    %1789 = vmatprep.subr.bf16.mxu0 0
    %1790 = vmatpush1.bf16.msra.mxu0 %v103
    %1791 = vmatprep.subr.bf16.mxu0 0
    %1792 = vmatpush1.bf16.msra.mxu0 %v104
    %1793 = vmatprep.subr.bf16.mxu0 0
    %1794 = vmatpush1.bf16.msra.mxu0 %v105
    %1795 = vmatprep.subr.bf16.mxu0 0
    %1796 = vmatpush1.bf16.msra.mxu0 %v106
    %1797 = vmatprep.subr.bf16.mxu0 0
    %1798 = vmatpush1.bf16.msra.mxu0 0
    %1799 = vmatprep.subr.bf16.mxu0 0
    %1800 = vmatpush1.bf16.msra.mxu0 0
    %1801 = vmatprep.subr.bf16.mxu0 0
    %1802 = vmatpush1.bf16.msra.mxu0 0
    %1803 = vmatprep.subr.bf16.mxu0 0
    %1804 = vmatpush1.bf16.msra.mxu0 0
    %1805 = vmatprep.subr.bf16.mxu0 0
    %1806 = vmatpush1.bf16.msra.mxu0 0
    %1807 = vmatprep.subr.bf16.mxu0 0
    %1808 = vmatpush1.bf16.msra.mxu0 0
    %1809 = vmatprep.subr.bf16.mxu0 0
    %1810 = vmatpush1.bf16.msra.mxu0 0
    %1811 = vmatprep.subr.bf16.mxu0 0
    %1812 = vmatpush1.bf16.msra.mxu0 0
    %1813 = vmatprep.subr.bf16.mxu0 0
    %1814 = vmatpush1.bf16.msra.mxu0 0
    %1815 = vmatprep.subr.bf16.mxu0 0
    %1816 = vmatpush1.bf16.msra.mxu0 0
    %1817 = vmatprep.subr.bf16.mxu0 0
    %1818 = vmatpush1.bf16.msra.mxu0 0
    %1819 = vmatprep.subr.bf16.mxu0 0
    %1820 = vmatpush1.bf16.msra.mxu0 0
    %1821 = vmatprep.mubr.bf16.mxu0 0
    %1822 = vmatmul.mubr.bf16.gmra.mrb[0].mxu0 %v1787
    %v1823 = vpop.f32.mrb[0].mxu0
    %v1824 = vadd.f32 %v146, %v1823
    %v1825 = vpop.f32.mrb[0].mxu0
    %v1826 = vpop.f32.mrb[0].mxu0
    %v1827 = vpop.f32.mrb[0].mxu0
    %1828 = vdwg.mxu0
    %v1829 = vxor.u32 %v1824, 2147483648
    %v1830 = vmul.f32 %v1829, 1.442695
    %v1831 = vpow.pop %v1830
    %v1832 = vadd.f32 %v1831, 1.0
    %v1833 = vrcp.pop %v1832
    %v1834 = vmul.f32 1.0, %v1833
    %v1835 = vtanh.pop %v1824
    %v1836 = vmul.f32 %v1834, %v1501
    %1838 = vrot.lane.b32.xlu0 %v1835, 32
    %v1839 = vpop.permute.xlu0 %1838
    %v1841 = vmul.f32 %v1834, %v1839
    %1843 = vrot.lane.b32.xlu0 %v1841, 32
    %v1844 = vpop.permute.xlu0 %1843
    %v1846 = vadd.f32 %v1836, %v1844
    %v1847 = vtanh.pop %v1846
    %1849 = vrot.lane.b32.xlu0 %v1847, 32
    %v1850 = vpop.permute.xlu0 %1849
    %v1852 = vmul.f32 %v1834, %v1850
    %v1853 = vpack.c.bf16 %v1852, %v1852
    %1855 = vrot.lane.b32.xlu0 %v1853, 64
    %v1856 = vpop.permute.xlu0 %1855
    %v1858 = vsel %vm290, %v1856, 0
    %1860 = vmatprep.subr.bf16.mxu0 0
    %1861 = vmatpush1.bf16.msra.mxu0 %v69
    %1862 = vmatprep.subr.bf16.mxu0 0
    %1863 = vmatpush1.bf16.msra.mxu0 %v70
    %1864 = vmatprep.subr.bf16.mxu0 0
    %1865 = vmatpush1.bf16.msra.mxu0 0
    %1866 = vmatprep.subr.bf16.mxu0 0
    %1867 = vmatpush1.bf16.msra.mxu0 0
    %1868 = vmatprep.subr.bf16.mxu0 0
    %1869 = vmatpush1.bf16.msra.mxu0 0
    %1870 = vmatprep.subr.bf16.mxu0 0
    %1871 = vmatpush1.bf16.msra.mxu0 0
    %1872 = vmatprep.subr.bf16.mxu0 0
    %1873 = vmatpush1.bf16.msra.mxu0 0
    %1874 = vmatprep.subr.bf16.mxu0 0
    %1875 = vmatpush1.bf16.msra.mxu0 0
    %1876 = vmatprep.subr.bf16.mxu0 0
    %1877 = vmatpush1.bf16.msra.mxu0 0
    %1878 = vmatprep.subr.bf16.mxu0 0
    %1879 = vmatpush1.bf16.msra.mxu0 0
    %1880 = vmatprep.subr.bf16.mxu0 0
    %1881 = vmatpush1.bf16.msra.mxu0 0
    %1882 = vmatprep.subr.bf16.mxu0 0
    %1883 = vmatpush1.bf16.msra.mxu0 0
    %1884 = vmatprep.subr.bf16.mxu0 0
    %1885 = vmatpush1.bf16.msra.mxu0 0
    %1886 = vmatprep.subr.bf16.mxu0 0
    %1887 = vmatpush1.bf16.msra.mxu0 0
    %1888 = vmatprep.subr.bf16.mxu0 0
    %1889 = vmatpush1.bf16.msra.mxu0 0
    %1890 = vmatprep.subr.bf16.mxu0 0
    %1891 = vmatpush1.bf16.msra.mxu0 0
    %1892 = vmatprep.mubr.bf16.mxu0 0
    %1893 = vmatmul.mubr.bf16.gmra.mrb[0].mxu0 %v1858
    %v1894 = vpop.f32.mrb[0].mxu0
    %v1895 = vadd.f32 %v121, %v1894
    %v1896 = vpop.f32.mrb[0].mxu0
    %v1897 = vpop.f32.mrb[0].mxu0
    %v1898 = vpop.f32.mrb[0].mxu0
    %1899 = vdwg.mxu0
    %v1900 = vmax.f32 %v1895, 0.0
    %v1901 = vpack.c.bf16 %v1900, %v1900
    %v1903 = vsel %vm290, %v1901, 0
    %1905 = vmatprep.subr.bf16.mxu0 0
    %1906 = vmatpush1.bf16.msra.mxu0 %v75
    %1907 = vmatprep.subr.bf16.mxu0 0
    %1908 = vmatpush1.bf16.msra.mxu0 %v76
    %1909 = vmatprep.subr.bf16.mxu0 0
    %1910 = vmatpush1.bf16.msra.mxu0 0
    %1911 = vmatprep.subr.bf16.mxu0 0
    %1912 = vmatpush1.bf16.msra.mxu0 0
    %1913 = vmatprep.subr.bf16.mxu0 0
    %1914 = vmatpush1.bf16.msra.mxu0 0
    %1915 = vmatprep.subr.bf16.mxu0 0
    %1916 = vmatpush1.bf16.msra.mxu0 0
    %1917 = vmatprep.subr.bf16.mxu0 0
    %1918 = vmatpush1.bf16.msra.mxu0 0
    %1919 = vmatprep.subr.bf16.mxu0 0
    %1920 = vmatpush1.bf16.msra.mxu0 0
    %1921 = vmatprep.subr.bf16.mxu0 0
    %1922 = vmatpush1.bf16.msra.mxu0 0
    %1923 = vmatprep.subr.bf16.mxu0 0
    %1924 = vmatpush1.bf16.msra.mxu0 0
    %1925 = vmatprep.subr.bf16.mxu0 0
    %1926 = vmatpush1.bf16.msra.mxu0 0
    %1927 = vmatprep.subr.bf16.mxu0 0
    %1928 = vmatpush1.bf16.msra.mxu0 0
    %1929 = vmatprep.subr.bf16.mxu0 0
    %1930 = vmatpush1.bf16.msra.mxu0 0
    %1931 = vmatprep.subr.bf16.mxu0 0
    %1932 = vmatpush1.bf16.msra.mxu0 0
    %1933 = vmatprep.subr.bf16.mxu0 0
    %1934 = vmatpush1.bf16.msra.mxu0 0
    %1935 = vmatprep.subr.bf16.mxu0 0
    %1936 = vmatpush1.bf16.msra.mxu0 0
    %1937 = vmatprep.mubr.bf16.mxu0 0
    %1938 = vmatmul.mubr.bf16.gmra.mrb[0].mxu0 %v1903
    %v1939 = vpop.f32.mrb[0].mxu0
    %v1940 = vadd.f32 %v126, %v1939
    %v1941 = vpop.f32.mrb[0].mxu0
    %v1942 = vpop.f32.mrb[0].mxu0
    %v1943 = vpop.f32.mrb[0].mxu0
    %1944 = vdwg.mxu0
    %v1945 = vmax.f32 %v1940, 0.0
    %v1946 = vpack.c.bf16 %v1945, %v1945
    %v1948 = vsel %vm290, %v1946, 0
    %1950 = vmatprep.subr.bf16.mxu0 0
    %1951 = vmatpush1.bf16.msra.mxu0 %v81
    %1952 = vmatprep.subr.bf16.mxu0 0
    %1953 = vmatpush1.bf16.msra.mxu0 %v82
    %1954 = vmatprep.subr.bf16.mxu0 0
    %1955 = vmatpush1.bf16.msra.mxu0 0
    %1956 = vmatprep.subr.bf16.mxu0 0
    %1957 = vmatpush1.bf16.msra.mxu0 0
    %1958 = vmatprep.subr.bf16.mxu0 0
    %1959 = vmatpush1.bf16.msra.mxu0 0
    %1960 = vmatprep.subr.bf16.mxu0 0
    %1961 = vmatpush1.bf16.msra.mxu0 0
    %1962 = vmatprep.subr.bf16.mxu0 0
    %1963 = vmatpush1.bf16.msra.mxu0 0
    %1964 = vmatprep.subr.bf16.mxu0 0
    %1965 = vmatpush1.bf16.msra.mxu0 0
    %1966 = vmatprep.subr.bf16.mxu0 0
    %1967 = vmatpush1.bf16.msra.mxu0 0
    %1968 = vmatprep.subr.bf16.mxu0 0
    %1969 = vmatpush1.bf16.msra.mxu0 0
    %1970 = vmatprep.subr.bf16.mxu0 0
    %1971 = vmatpush1.bf16.msra.mxu0 0
    %1972 = vmatprep.subr.bf16.mxu0 0
    %1973 = vmatpush1.bf16.msra.mxu0 0
    %1974 = vmatprep.subr.bf16.mxu0 0
    %1975 = vmatpush1.bf16.msra.mxu0 0
    %1976 = vmatprep.subr.bf16.mxu0 0
    %1977 = vmatpush1.bf16.msra.mxu0 0
    %1978 = vmatprep.subr.bf16.mxu0 0
    %1979 = vmatpush1.bf16.msra.mxu0 0
    %1980 = vmatprep.subr.bf16.mxu0 0
    %1981 = vmatpush1.bf16.msra.mxu0 0
    %1982 = vmatprep.mubr.bf16.mxu0 0
    %1983 = vmatmul.mubr.bf16.gmra.mrb[0].mxu0 %v1948
    %v1984 = vpop.f32.mrb[0].mxu0
    %v1985 = vadd.f32 0.0, %v1984
    %v1986 = vpop.f32.mrb[0].mxu0
    %v1987 = vpop.f32.mrb[0].mxu0
    %v1988 = vpop.f32.mrb[0].mxu0
    %1989 = vdwg.mxu0
    %v1990 = vadd.f32 %v1646, %v1985
    %v1991 = vadd.f32 %v1990, %v131
    %1993 = vrot.lane.b32.xlu0 %v1985, 112
    %v1994 = vpop.permute.xlu0 %1993
    %v1996 = vadd.f32 %v1652, %v1994
    %v1997 = vadd.f32 %v1996, %v136
    %1999 = vrot.lane.b32.xlu0 %v1991, 64
    %v2000 = vpop.permute.xlu0 %1999
    %vm2002 = vcmask 654848
    %2003 = vst.msk [vmem:[%s3] sm:$0xff] %vm2002, %v2000
    %v2004 = vadd.f32 %v1997, %v230
    %v2005 = vmax.f32 %v2004, 0.0
    %v2006 = vpack.c.bf16 %v2005, %v2005
    %v2008 = vsel %vm290, %v2006, 0
    %2010 = vmatprep.subr.bf16.mxu0 0
    %2011 = vmatpush1.bf16.msra.mxu0 %v63
    %2012 = vmatprep.subr.bf16.mxu0 0
    %2013 = vmatpush1.bf16.msra.mxu0 %v64
    %2014 = vmatprep.subr.bf16.mxu0 0
    %2015 = vmatpush1.bf16.msra.mxu0 0
    %2016 = vmatprep.subr.bf16.mxu0 0
    %2017 = vmatpush1.bf16.msra.mxu0 0
    %2018 = vmatprep.subr.bf16.mxu0 0
    %2019 = vmatpush1.bf16.msra.mxu0 0
    %2020 = vmatprep.subr.bf16.mxu0 0
    %2021 = vmatpush1.bf16.msra.mxu0 0
    %2022 = vmatprep.subr.bf16.mxu0 0
    %2023 = vmatpush1.bf16.msra.mxu0 0
    %2024 = vmatprep.subr.bf16.mxu0 0
    %2025 = vmatpush1.bf16.msra.mxu0 0
    %2026 = vmatprep.subr.bf16.mxu0 0
    %2027 = vmatpush1.bf16.msra.mxu0 0
    %2028 = vmatprep.subr.bf16.mxu0 0
    %2029 = vmatpush1.bf16.msra.mxu0 0
    %2030 = vmatprep.subr.bf16.mxu0 0
    %2031 = vmatpush1.bf16.msra.mxu0 0
    %2032 = vmatprep.subr.bf16.mxu0 0
    %2033 = vmatpush1.bf16.msra.mxu0 0
    %2034 = vmatprep.subr.bf16.mxu0 0
    %2035 = vmatpush1.bf16.msra.mxu0 0
    %2036 = vmatprep.subr.bf16.mxu0 0
    %2037 = vmatpush1.bf16.msra.mxu0 0
    %2038 = vmatprep.subr.bf16.mxu0 0
    %2039 = vmatpush1.bf16.msra.mxu0 0
    %2040 = vmatprep.subr.bf16.mxu0 0
    %2041 = vmatpush1.bf16.msra.mxu0 0
    %2042 = vmatprep.mubr.bf16.mxu0 0
    %2043 = vmatmul.mubr.bf16.gmra.mrb[0].mxu0 %v2008
    %v2044 = vpop.f32.mrb[0].mxu0
    %v2045 = vadd.f32 %v116, %v2044
    %v2046 = vpop.f32.mrb[0].mxu0
    %v2047 = vpop.f32.mrb[0].mxu0
    %v2048 = vpop.f32.mrb[0].mxu0
    %2049 = vdwg.mxu0
    %v2050 = vmax.f32 %v2045, 0.0
    %v2051 = vpack.c.bf16 %v2050, %v2050
    %2052 = vrot.lane.b32.xlu0 %v1778, 96
    %v2053 = vpop.permute.xlu0 %2052
    %v2056 = vsel %vm290, %v2051, %v2053
    %v2057 = vsel %vm339, %v2056, 0
    %2059 = vmatprep.subr.bf16.mxu0 0
    %2060 = vmatpush1.bf16.msra.mxu0 %v91
    %2061 = vmatprep.subr.bf16.mxu0 0
    %2062 = vmatpush1.bf16.msra.mxu0 %v92
    %2063 = vmatprep.subr.bf16.mxu0 0
    %2064 = vmatpush1.bf16.msra.mxu0 %v93
    %2065 = vmatprep.subr.bf16.mxu0 0
    %2066 = vmatpush1.bf16.msra.mxu0 %v94
    %2067 = vmatprep.subr.bf16.mxu0 0
    %2068 = vmatpush1.bf16.msra.mxu0 0
    %2069 = vmatprep.subr.bf16.mxu0 0
    %2070 = vmatpush1.bf16.msra.mxu0 0
    %2071 = vmatprep.subr.bf16.mxu0 0
    %2072 = vmatpush1.bf16.msra.mxu0 0
    %2073 = vmatprep.subr.bf16.mxu0 0
    %2074 = vmatpush1.bf16.msra.mxu0 0
    %2075 = vmatprep.subr.bf16.mxu0 0
    %2076 = vmatpush1.bf16.msra.mxu0 0
    %2077 = vmatprep.subr.bf16.mxu0 0
    %2078 = vmatpush1.bf16.msra.mxu0 0
    %2079 = vmatprep.subr.bf16.mxu0 0
    %2080 = vmatpush1.bf16.msra.mxu0 0
    %2081 = vmatprep.subr.bf16.mxu0 0
    %2082 = vmatpush1.bf16.msra.mxu0 0
    %2083 = vmatprep.subr.bf16.mxu0 0
    %2084 = vmatpush1.bf16.msra.mxu0 0
    %2085 = vmatprep.subr.bf16.mxu0 0
    %2086 = vmatpush1.bf16.msra.mxu0 0
    %2087 = vmatprep.subr.bf16.mxu0 0
    %2088 = vmatpush1.bf16.msra.mxu0 0
    %2089 = vmatprep.subr.bf16.mxu0 0
    %2090 = vmatpush1.bf16.msra.mxu0 0
    %2091 = vmatprep.mubr.bf16.mxu0 0
    %2092 = vmatmul.mubr.bf16.gmra.mrb[0].mxu0 %v2057
    %v2093 = vpop.f32.mrb[0].mxu0
    %v2094 = vadd.f32 %v141, %v2093
    %v2095 = vpop.f32.mrb[0].mxu0
    %v2096 = vpop.f32.mrb[0].mxu0
    %v2097 = vpop.f32.mrb[0].mxu0
    %2098 = vdwg.mxu0
    %v2099 = vxor.u32 %v2094, 2147483648
    %v2100 = vmul.f32 %v2099, 1.442695
    %v2101 = vpow.pop %v2100
    %v2102 = vadd.f32 %v2101, 1.0
    %v2103 = vrcp.pop %v2102
    %v2104 = vmul.f32 1.0, %v2103
    %v2105 = vtanh.pop %v2094
    %v2106 = vmul.f32 %v2104, %v1771
    %2108 = vrot.lane.b32.xlu0 %v2105, 32
    %v2109 = vpop.permute.xlu0 %2108
    %v2111 = vmul.f32 %v2104, %v2109
    %2113 = vrot.lane.b32.xlu0 %v2111, 32
    %v2114 = vpop.permute.xlu0 %2113
    %v2116 = vadd.f32 %v2106, %v2114
    %v2117 = vtanh.pop %v2116
    %2119 = vrot.lane.b32.xlu0 %v2117, 32
    %v2120 = vpop.permute.xlu0 %2119
    %v2122 = vmul.f32 %v2104, %v2120
    %v2123 = vpack.c.bf16 %v2122, %v2122
    %2125 = vrot.lane.b32.xlu0 %v2123, 64
    %v2126 = vpop.permute.xlu0 %2125
    %2127 = vrot.lane.b32.xlu0 %v1853, 96
    %v2128 = vpop.permute.xlu0 %2127
    %v2131 = vsel %vm290, %v2126, %v2128
    %v2132 = vsel %vm339, %v2131, 0
    %2134 = vmatprep.subr.bf16.mxu0 0
    %2135 = vmatpush1.bf16.msra.mxu0 %v103
    %2136 = vmatprep.subr.bf16.mxu0 0
    %2137 = vmatpush1.bf16.msra.mxu0 %v104
    %2138 = vmatprep.subr.bf16.mxu0 0
    %2139 = vmatpush1.bf16.msra.mxu0 %v105
    %2140 = vmatprep.subr.bf16.mxu0 0
    %2141 = vmatpush1.bf16.msra.mxu0 %v106
    %2142 = vmatprep.subr.bf16.mxu0 0
    %2143 = vmatpush1.bf16.msra.mxu0 0
    %2144 = vmatprep.subr.bf16.mxu0 0
    %2145 = vmatpush1.bf16.msra.mxu0 0
    %2146 = vmatprep.subr.bf16.mxu0 0
    %2147 = vmatpush1.bf16.msra.mxu0 0
    %2148 = vmatprep.subr.bf16.mxu0 0
    %2149 = vmatpush1.bf16.msra.mxu0 0
    %2150 = vmatprep.subr.bf16.mxu0 0
    %2151 = vmatpush1.bf16.msra.mxu0 0
    %2152 = vmatprep.subr.bf16.mxu0 0
    %2153 = vmatpush1.bf16.msra.mxu0 0
    %2154 = vmatprep.subr.bf16.mxu0 0
    %2155 = vmatpush1.bf16.msra.mxu0 0
    %2156 = vmatprep.subr.bf16.mxu0 0
    %2157 = vmatpush1.bf16.msra.mxu0 0
    %2158 = vmatprep.subr.bf16.mxu0 0
    %2159 = vmatpush1.bf16.msra.mxu0 0
    %2160 = vmatprep.subr.bf16.mxu0 0
    %2161 = vmatpush1.bf16.msra.mxu0 0
    %2162 = vmatprep.subr.bf16.mxu0 0
    %2163 = vmatpush1.bf16.msra.mxu0 0
    %2164 = vmatprep.subr.bf16.mxu0 0
    %2165 = vmatpush1.bf16.msra.mxu0 0
    %2166 = vmatprep.mubr.bf16.mxu0 0
    %2167 = vmatmul.mubr.bf16.gmra.mrb[0].mxu0 %v2132
    %v2168 = vpop.f32.mrb[0].mxu0
    %v2169 = vadd.f32 %v146, %v2168
    %v2170 = vpop.f32.mrb[0].mxu0
    %v2171 = vpop.f32.mrb[0].mxu0
    %v2172 = vpop.f32.mrb[0].mxu0
    %2173 = vdwg.mxu0
    %v2174 = vxor.u32 %v2169, 2147483648
    %v2175 = vmul.f32 %v2174, 1.442695
    %v2176 = vpow.pop %v2175
    %v2177 = vadd.f32 %v2176, 1.0
    %v2178 = vrcp.pop %v2177
    %v2179 = vmul.f32 1.0, %v2178
    %v2180 = vtanh.pop %v2169
    %v2181 = vmul.f32 %v2179, %v1846
    %2183 = vrot.lane.b32.xlu0 %v2180, 32
    %v2184 = vpop.permute.xlu0 %2183
    %v2186 = vmul.f32 %v2179, %v2184
    %2188 = vrot.lane.b32.xlu0 %v2186, 32
    %v2189 = vpop.permute.xlu0 %2188
    %v2191 = vadd.f32 %v2181, %v2189
    %v2192 = vtanh.pop %v2191
    %2194 = vrot.lane.b32.xlu0 %v2192, 32
    %v2195 = vpop.permute.xlu0 %2194
    %v2197 = vmul.f32 %v2179, %v2195
    %v2198 = vpack.c.bf16 %v2197, %v2197
    %2200 = vrot.lane.b32.xlu0 %v2198, 64
    %v2201 = vpop.permute.xlu0 %2200
    %v2203 = vsel %vm290, %v2201, 0
    %2205 = vmatprep.subr.bf16.mxu0 0
    %2206 = vmatpush1.bf16.msra.mxu0 %v69
    %2207 = vmatprep.subr.bf16.mxu0 0
    %2208 = vmatpush1.bf16.msra.mxu0 %v70
    %2209 = vmatprep.subr.bf16.mxu0 0
    %2210 = vmatpush1.bf16.msra.mxu0 0
    %2211 = vmatprep.subr.bf16.mxu0 0
    %2212 = vmatpush1.bf16.msra.mxu0 0
    %2213 = vmatprep.subr.bf16.mxu0 0
    %2214 = vmatpush1.bf16.msra.mxu0 0
    %2215 = vmatprep.subr.bf16.mxu0 0
    %2216 = vmatpush1.bf16.msra.mxu0 0
    %2217 = vmatprep.subr.bf16.mxu0 0
    %2218 = vmatpush1.bf16.msra.mxu0 0
    %2219 = vmatprep.subr.bf16.mxu0 0
    %2220 = vmatpush1.bf16.msra.mxu0 0
    %2221 = vmatprep.subr.bf16.mxu0 0
    %2222 = vmatpush1.bf16.msra.mxu0 0
    %2223 = vmatprep.subr.bf16.mxu0 0
    %2224 = vmatpush1.bf16.msra.mxu0 0
    %2225 = vmatprep.subr.bf16.mxu0 0
    %2226 = vmatpush1.bf16.msra.mxu0 0
    %2227 = vmatprep.subr.bf16.mxu0 0
    %2228 = vmatpush1.bf16.msra.mxu0 0
    %2229 = vmatprep.subr.bf16.mxu0 0
    %2230 = vmatpush1.bf16.msra.mxu0 0
    %2231 = vmatprep.subr.bf16.mxu0 0
    %2232 = vmatpush1.bf16.msra.mxu0 0
    %2233 = vmatprep.subr.bf16.mxu0 0
    %2234 = vmatpush1.bf16.msra.mxu0 0
    %2235 = vmatprep.subr.bf16.mxu0 0
    %2236 = vmatpush1.bf16.msra.mxu0 0
    %2237 = vmatprep.mubr.bf16.mxu0 0
    %2238 = vmatmul.mubr.bf16.gmra.mrb[0].mxu0 %v2203
    %v2239 = vpop.f32.mrb[0].mxu0
    %v2240 = vadd.f32 %v121, %v2239
    %v2241 = vpop.f32.mrb[0].mxu0
    %v2242 = vpop.f32.mrb[0].mxu0
    %v2243 = vpop.f32.mrb[0].mxu0
    %2244 = vdwg.mxu0
    %v2245 = vmax.f32 %v2240, 0.0
    %v2246 = vpack.c.bf16 %v2245, %v2245
    %v2248 = vsel %vm290, %v2246, 0
    %2250 = vmatprep.subr.bf16.mxu0 0
    %2251 = vmatpush1.bf16.msra.mxu0 %v75
    %2252 = vmatprep.subr.bf16.mxu0 0
    %2253 = vmatpush1.bf16.msra.mxu0 %v76
    %2254 = vmatprep.subr.bf16.mxu0 0
    %2255 = vmatpush1.bf16.msra.mxu0 0
    %2256 = vmatprep.subr.bf16.mxu0 0
    %2257 = vmatpush1.bf16.msra.mxu0 0
    %2258 = vmatprep.subr.bf16.mxu0 0
    %2259 = vmatpush1.bf16.msra.mxu0 0
    %2260 = vmatprep.subr.bf16.mxu0 0
    %2261 = vmatpush1.bf16.msra.mxu0 0
    %2262 = vmatprep.subr.bf16.mxu0 0
    %2263 = vmatpush1.bf16.msra.mxu0 0
    %2264 = vmatprep.subr.bf16.mxu0 0
    %2265 = vmatpush1.bf16.msra.mxu0 0
    %2266 = vmatprep.subr.bf16.mxu0 0
    %2267 = vmatpush1.bf16.msra.mxu0 0
    %2268 = vmatprep.subr.bf16.mxu0 0
    %2269 = vmatpush1.bf16.msra.mxu0 0
    %2270 = vmatprep.subr.bf16.mxu0 0
    %2271 = vmatpush1.bf16.msra.mxu0 0
    %2272 = vmatprep.subr.bf16.mxu0 0
    %2273 = vmatpush1.bf16.msra.mxu0 0
    %2274 = vmatprep.subr.bf16.mxu0 0
    %2275 = vmatpush1.bf16.msra.mxu0 0
    %2276 = vmatprep.subr.bf16.mxu0 0
    %2277 = vmatpush1.bf16.msra.mxu0 0
    %2278 = vmatprep.subr.bf16.mxu0 0
    %2279 = vmatpush1.bf16.msra.mxu0 0
    %2280 = vmatprep.subr.bf16.mxu0 0
    %2281 = vmatpush1.bf16.msra.mxu0 0
    %2282 = vmatprep.mubr.bf16.mxu0 0
    %2283 = vmatmul.mubr.bf16.gmra.mrb[0].mxu0 %v2248
    %v2284 = vpop.f32.mrb[0].mxu0
    %v2285 = vadd.f32 %v126, %v2284
    %v2286 = vpop.f32.mrb[0].mxu0
    %v2287 = vpop.f32.mrb[0].mxu0
    %v2288 = vpop.f32.mrb[0].mxu0
    %2289 = vdwg.mxu0
    %v2290 = vmax.f32 %v2285, 0.0
    %v2291 = vpack.c.bf16 %v2290, %v2290
    %v2293 = vsel %vm290, %v2291, 0
    %2295 = vmatprep.subr.bf16.mxu0 0
    %2296 = vmatpush1.bf16.msra.mxu0 %v81
    %2297 = vmatprep.subr.bf16.mxu0 0
    %2298 = vmatpush1.bf16.msra.mxu0 %v82
    %2299 = vmatprep.subr.bf16.mxu0 0
    %2300 = vmatpush1.bf16.msra.mxu0 0
    %2301 = vmatprep.subr.bf16.mxu0 0
    %2302 = vmatpush1.bf16.msra.mxu0 0
    %2303 = vmatprep.subr.bf16.mxu0 0
    %2304 = vmatpush1.bf16.msra.mxu0 0
    %2305 = vmatprep.subr.bf16.mxu0 0
    %2306 = vmatpush1.bf16.msra.mxu0 0
    %2307 = vmatprep.subr.bf16.mxu0 0
    %2308 = vmatpush1.bf16.msra.mxu0 0
    %2309 = vmatprep.subr.bf16.mxu0 0
    %2310 = vmatpush1.bf16.msra.mxu0 0
    %2311 = vmatprep.subr.bf16.mxu0 0
    %2312 = vmatpush1.bf16.msra.mxu0 0
    %2313 = vmatprep.subr.bf16.mxu0 0
    %2314 = vmatpush1.bf16.msra.mxu0 0
    %2315 = vmatprep.subr.bf16.mxu0 0
    %2316 = vmatpush1.bf16.msra.mxu0 0
    %2317 = vmatprep.subr.bf16.mxu0 0
    %2318 = vmatpush1.bf16.msra.mxu0 0
    %2319 = vmatprep.subr.bf16.mxu0 0
    %2320 = vmatpush1.bf16.msra.mxu0 0
    %2321 = vmatprep.subr.bf16.mxu0 0
    %2322 = vmatpush1.bf16.msra.mxu0 0
    %2323 = vmatprep.subr.bf16.mxu0 0
    %2324 = vmatpush1.bf16.msra.mxu0 0
    %2325 = vmatprep.subr.bf16.mxu0 0
    %2326 = vmatpush1.bf16.msra.mxu0 0
    %2327 = vmatprep.mubr.bf16.mxu0 0
    %2328 = vmatmul.mubr.bf16.gmra.mrb[0].mxu0 %v2293
    %v2329 = vpop.f32.mrb[0].mxu0
    %v2330 = vadd.f32 0.0, %v2329
    %v2331 = vpop.f32.mrb[0].mxu0
    %v2332 = vpop.f32.mrb[0].mxu0
    %v2333 = vpop.f32.mrb[0].mxu0
    %2334 = vdwg.mxu0
    %v2335 = vadd.f32 %v1991, %v2330
    %v2336 = vadd.f32 %v2335, %v131
    %2338 = vrot.lane.b32.xlu0 %v2330, 112
    %v2339 = vpop.permute.xlu0 %2338
    %v2341 = vadd.f32 %v1997, %v2339
    %v2342 = vadd.f32 %v2341, %v136
    %2344 = vrot.lane.b32.xlu0 %v2336, 80
    %v2345 = vpop.permute.xlu0 %2344
    %vm2347 = vcmask 786048
    %2348 = vst.msk [vmem:[%s3] sm:$0xff] %vm2347, %v2345
    %v2349 = vadd.f32 %v2342, %v235
    %v2350 = vmax.f32 %v2349, 0.0
    %v2351 = vpack.c.bf16 %v2350, %v2350
    %v2353 = vsel %vm290, %v2351, 0
    %2355 = vmatprep.subr.bf16.mxu0 0
    %2356 = vmatpush1.bf16.msra.mxu0 %v63
    %2357 = vmatprep.subr.bf16.mxu0 0
    %2358 = vmatpush1.bf16.msra.mxu0 %v64
    %2359 = vmatprep.subr.bf16.mxu0 0
    %2360 = vmatpush1.bf16.msra.mxu0 0
    %2361 = vmatprep.subr.bf16.mxu0 0
    %2362 = vmatpush1.bf16.msra.mxu0 0
    %2363 = vmatprep.subr.bf16.mxu0 0
    %2364 = vmatpush1.bf16.msra.mxu0 0
    %2365 = vmatprep.subr.bf16.mxu0 0
    %2366 = vmatpush1.bf16.msra.mxu0 0
    %2367 = vmatprep.subr.bf16.mxu0 0
    %2368 = vmatpush1.bf16.msra.mxu0 0
    %2369 = vmatprep.subr.bf16.mxu0 0
    %2370 = vmatpush1.bf16.msra.mxu0 0
    %2371 = vmatprep.subr.bf16.mxu0 0
    %2372 = vmatpush1.bf16.msra.mxu0 0
    %2373 = vmatprep.subr.bf16.mxu0 0
    %2374 = vmatpush1.bf16.msra.mxu0 0
    %2375 = vmatprep.subr.bf16.mxu0 0
    %2376 = vmatpush1.bf16.msra.mxu0 0
    %2377 = vmatprep.subr.bf16.mxu0 0
    %2378 = vmatpush1.bf16.msra.mxu0 0
    %2379 = vmatprep.subr.bf16.mxu0 0
    %2380 = vmatpush1.bf16.msra.mxu0 0
    %2381 = vmatprep.subr.bf16.mxu0 0
    %2382 = vmatpush1.bf16.msra.mxu0 0
    %2383 = vmatprep.subr.bf16.mxu0 0
    %2384 = vmatpush1.bf16.msra.mxu0 0
    %2385 = vmatprep.subr.bf16.mxu0 0
    %2386 = vmatpush1.bf16.msra.mxu0 0
    %2387 = vmatprep.mubr.bf16.mxu0 0
    %2388 = vmatmul.mubr.bf16.gmra.mrb[0].mxu0 %v2353
    %v2389 = vpop.f32.mrb[0].mxu0
    %v2390 = vadd.f32 %v116, %v2389
    %v2391 = vpop.f32.mrb[0].mxu0
    %v2392 = vpop.f32.mrb[0].mxu0
    %v2393 = vpop.f32.mrb[0].mxu0
    %2394 = vdwg.mxu0
    %v2395 = vmax.f32 %v2390, 0.0
    %v2396 = vpack.c.bf16 %v2395, %v2395
    %2397 = vrot.lane.b32.xlu0 %v2123, 96
    %v2398 = vpop.permute.xlu0 %2397
    %v2401 = vsel %vm290, %v2396, %v2398
    %v2402 = vsel %vm339, %v2401, 0
    %2404 = vmatprep.subr.bf16.mxu0 0
    %2405 = vmatpush1.bf16.msra.mxu0 %v91
    %2406 = vmatprep.subr.bf16.mxu0 0
    %2407 = vmatpush1.bf16.msra.mxu0 %v92
    %2408 = vmatprep.subr.bf16.mxu0 0
    %2409 = vmatpush1.bf16.msra.mxu0 %v93
    %2410 = vmatprep.subr.bf16.mxu0 0
    %2411 = vmatpush1.bf16.msra.mxu0 %v94
    %2412 = vmatprep.subr.bf16.mxu0 0
    %2413 = vmatpush1.bf16.msra.mxu0 0
    %2414 = vmatprep.subr.bf16.mxu0 0
    %2415 = vmatpush1.bf16.msra.mxu0 0
    %2416 = vmatprep.subr.bf16.mxu0 0
    %2417 = vmatpush1.bf16.msra.mxu0 0
    %2418 = vmatprep.subr.bf16.mxu0 0
    %2419 = vmatpush1.bf16.msra.mxu0 0
    %2420 = vmatprep.subr.bf16.mxu0 0
    %2421 = vmatpush1.bf16.msra.mxu0 0
    %2422 = vmatprep.subr.bf16.mxu0 0
    %2423 = vmatpush1.bf16.msra.mxu0 0
    %2424 = vmatprep.subr.bf16.mxu0 0
    %2425 = vmatpush1.bf16.msra.mxu0 0
    %2426 = vmatprep.subr.bf16.mxu0 0
    %2427 = vmatpush1.bf16.msra.mxu0 0
    %2428 = vmatprep.subr.bf16.mxu0 0
    %2429 = vmatpush1.bf16.msra.mxu0 0
    %2430 = vmatprep.subr.bf16.mxu0 0
    %2431 = vmatpush1.bf16.msra.mxu0 0
    %2432 = vmatprep.subr.bf16.mxu0 0
    %2433 = vmatpush1.bf16.msra.mxu0 0
    %2434 = vmatprep.subr.bf16.mxu0 0
    %2435 = vmatpush1.bf16.msra.mxu0 0
    %2436 = vmatprep.mubr.bf16.mxu0 0
    %2437 = vmatmul.mubr.bf16.gmra.mrb[0].mxu0 %v2402
    %v2438 = vpop.f32.mrb[0].mxu0
    %v2439 = vadd.f32 %v141, %v2438
    %v2440 = vpop.f32.mrb[0].mxu0
    %v2441 = vpop.f32.mrb[0].mxu0
    %v2442 = vpop.f32.mrb[0].mxu0
    %2443 = vdwg.mxu0
    %v2444 = vxor.u32 %v2439, 2147483648
    %v2445 = vmul.f32 %v2444, 1.442695
    %v2446 = vpow.pop %v2445
    %v2447 = vadd.f32 %v2446, 1.0
    %v2448 = vrcp.pop %v2447
    %v2449 = vmul.f32 1.0, %v2448
    %v2450 = vtanh.pop %v2439
    %v2451 = vmul.f32 %v2449, %v2116
    %2453 = vrot.lane.b32.xlu0 %v2450, 32
    %v2454 = vpop.permute.xlu0 %2453
    %v2456 = vmul.f32 %v2449, %v2454
    %2458 = vrot.lane.b32.xlu0 %v2456, 32
    %v2459 = vpop.permute.xlu0 %2458
    %v2461 = vadd.f32 %v2451, %v2459
    %v2462 = vtanh.pop %v2461
    %2464 = vrot.lane.b32.xlu0 %v2462, 32
    %v2465 = vpop.permute.xlu0 %2464
    %v2467 = vmul.f32 %v2449, %v2465
    %v2468 = vpack.c.bf16 %v2467, %v2467
    %2470 = vrot.lane.b32.xlu0 %v2468, 64
    %v2471 = vpop.permute.xlu0 %2470
    %2472 = vrot.lane.b32.xlu0 %v2198, 96
    %v2473 = vpop.permute.xlu0 %2472
    %v2476 = vsel %vm290, %v2471, %v2473
    %v2477 = vsel %vm339, %v2476, 0
    %2479 = vmatprep.subr.bf16.mxu0 0
    %2480 = vmatpush1.bf16.msra.mxu0 %v103
    %2481 = vmatprep.subr.bf16.mxu0 0
    %2482 = vmatpush1.bf16.msra.mxu0 %v104
    %2483 = vmatprep.subr.bf16.mxu0 0
    %2484 = vmatpush1.bf16.msra.mxu0 %v105
    %2485 = vmatprep.subr.bf16.mxu0 0
    %2486 = vmatpush1.bf16.msra.mxu0 %v106
    %2487 = vmatprep.subr.bf16.mxu0 0
    %2488 = vmatpush1.bf16.msra.mxu0 0
    %2489 = vmatprep.subr.bf16.mxu0 0
    %2490 = vmatpush1.bf16.msra.mxu0 0
    %2491 = vmatprep.subr.bf16.mxu0 0
    %2492 = vmatpush1.bf16.msra.mxu0 0
    %2493 = vmatprep.subr.bf16.mxu0 0
    %2494 = vmatpush1.bf16.msra.mxu0 0
    %2495 = vmatprep.subr.bf16.mxu0 0
    %2496 = vmatpush1.bf16.msra.mxu0 0
    %2497 = vmatprep.subr.bf16.mxu0 0
    %2498 = vmatpush1.bf16.msra.mxu0 0
    %2499 = vmatprep.subr.bf16.mxu0 0
    %2500 = vmatpush1.bf16.msra.mxu0 0
    %2501 = vmatprep.subr.bf16.mxu0 0
    %2502 = vmatpush1.bf16.msra.mxu0 0
    %2503 = vmatprep.subr.bf16.mxu0 0
    %2504 = vmatpush1.bf16.msra.mxu0 0
    %2505 = vmatprep.subr.bf16.mxu0 0
    %2506 = vmatpush1.bf16.msra.mxu0 0
    %2507 = vmatprep.subr.bf16.mxu0 0
    %2508 = vmatpush1.bf16.msra.mxu0 0
    %2509 = vmatprep.subr.bf16.mxu0 0
    %2510 = vmatpush1.bf16.msra.mxu0 0
    %2511 = vmatprep.mubr.bf16.mxu0 0
    %2512 = vmatmul.mubr.bf16.gmra.mrb[0].mxu0 %v2477
    %v2513 = vpop.f32.mrb[0].mxu0
    %v2514 = vadd.f32 %v146, %v2513
    %v2515 = vpop.f32.mrb[0].mxu0
    %v2516 = vpop.f32.mrb[0].mxu0
    %v2517 = vpop.f32.mrb[0].mxu0
    %2518 = vdwg.mxu0
    %v2519 = vxor.u32 %v2514, 2147483648
    %v2520 = vmul.f32 %v2519, 1.442695
    %v2521 = vpow.pop %v2520
    %v2522 = vadd.f32 %v2521, 1.0
    %v2523 = vrcp.pop %v2522
    %v2524 = vmul.f32 1.0, %v2523
    %v2525 = vtanh.pop %v2514
    %v2526 = vmul.f32 %v2524, %v2191
    %2528 = vrot.lane.b32.xlu0 %v2525, 32
    %v2529 = vpop.permute.xlu0 %2528
    %v2531 = vmul.f32 %v2524, %v2529
    %2533 = vrot.lane.b32.xlu0 %v2531, 32
    %v2534 = vpop.permute.xlu0 %2533
    %v2536 = vadd.f32 %v2526, %v2534
    %v2537 = vtanh.pop %v2536
    %2539 = vrot.lane.b32.xlu0 %v2537, 32
    %v2540 = vpop.permute.xlu0 %2539
    %v2542 = vmul.f32 %v2524, %v2540
    %v2543 = vpack.c.bf16 %v2542, %v2542
    %2545 = vrot.lane.b32.xlu0 %v2543, 64
    %v2546 = vpop.permute.xlu0 %2545
    %v2548 = vsel %vm290, %v2546, 0
    %2550 = vmatprep.subr.bf16.mxu0 0
    %2551 = vmatpush1.bf16.msra.mxu0 %v69
    %2552 = vmatprep.subr.bf16.mxu0 0
    %2553 = vmatpush1.bf16.msra.mxu0 %v70
    %2554 = vmatprep.subr.bf16.mxu0 0
    %2555 = vmatpush1.bf16.msra.mxu0 0
    %2556 = vmatprep.subr.bf16.mxu0 0
    %2557 = vmatpush1.bf16.msra.mxu0 0
    %2558 = vmatprep.subr.bf16.mxu0 0
    %2559 = vmatpush1.bf16.msra.mxu0 0
    %2560 = vmatprep.subr.bf16.mxu0 0
    %2561 = vmatpush1.bf16.msra.mxu0 0
    %2562 = vmatprep.subr.bf16.mxu0 0
    %2563 = vmatpush1.bf16.msra.mxu0 0
    %2564 = vmatprep.subr.bf16.mxu0 0
    %2565 = vmatpush1.bf16.msra.mxu0 0
    %2566 = vmatprep.subr.bf16.mxu0 0
    %2567 = vmatpush1.bf16.msra.mxu0 0
    %2568 = vmatprep.subr.bf16.mxu0 0
    %2569 = vmatpush1.bf16.msra.mxu0 0
    %2570 = vmatprep.subr.bf16.mxu0 0
    %2571 = vmatpush1.bf16.msra.mxu0 0
    %2572 = vmatprep.subr.bf16.mxu0 0
    %2573 = vmatpush1.bf16.msra.mxu0 0
    %2574 = vmatprep.subr.bf16.mxu0 0
    %2575 = vmatpush1.bf16.msra.mxu0 0
    %2576 = vmatprep.subr.bf16.mxu0 0
    %2577 = vmatpush1.bf16.msra.mxu0 0
    %2578 = vmatprep.subr.bf16.mxu0 0
    %2579 = vmatpush1.bf16.msra.mxu0 0
    %2580 = vmatprep.subr.bf16.mxu0 0
    %2581 = vmatpush1.bf16.msra.mxu0 0
    %2582 = vmatprep.mubr.bf16.mxu0 0
    %2583 = vmatmul.mubr.bf16.gmra.mrb[0].mxu0 %v2548
    %v2584 = vpop.f32.mrb[0].mxu0
    %v2585 = vadd.f32 %v121, %v2584
    %v2586 = vpop.f32.mrb[0].mxu0
    %v2587 = vpop.f32.mrb[0].mxu0
    %v2588 = vpop.f32.mrb[0].mxu0
    %2589 = vdwg.mxu0
    %v2590 = vmax.f32 %v2585, 0.0
    %v2591 = vpack.c.bf16 %v2590, %v2590
    %v2593 = vsel %vm290, %v2591, 0
    %2595 = vmatprep.subr.bf16.mxu0 0
    %2596 = vmatpush1.bf16.msra.mxu0 %v75
    %2597 = vmatprep.subr.bf16.mxu0 0
    %2598 = vmatpush1.bf16.msra.mxu0 %v76
    %2599 = vmatprep.subr.bf16.mxu0 0
    %2600 = vmatpush1.bf16.msra.mxu0 0
    %2601 = vmatprep.subr.bf16.mxu0 0
    %2602 = vmatpush1.bf16.msra.mxu0 0
    %2603 = vmatprep.subr.bf16.mxu0 0
    %2604 = vmatpush1.bf16.msra.mxu0 0
    %2605 = vmatprep.subr.bf16.mxu0 0
    %2606 = vmatpush1.bf16.msra.mxu0 0
    %2607 = vmatprep.subr.bf16.mxu0 0
    %2608 = vmatpush1.bf16.msra.mxu0 0
    %2609 = vmatprep.subr.bf16.mxu0 0
    %2610 = vmatpush1.bf16.msra.mxu0 0
    %2611 = vmatprep.subr.bf16.mxu0 0
    %2612 = vmatpush1.bf16.msra.mxu0 0
    %2613 = vmatprep.subr.bf16.mxu0 0
    %2614 = vmatpush1.bf16.msra.mxu0 0
    %2615 = vmatprep.subr.bf16.mxu0 0
    %2616 = vmatpush1.bf16.msra.mxu0 0
    %2617 = vmatprep.subr.bf16.mxu0 0
    %2618 = vmatpush1.bf16.msra.mxu0 0
    %2619 = vmatprep.subr.bf16.mxu0 0
    %2620 = vmatpush1.bf16.msra.mxu0 0
    %2621 = vmatprep.subr.bf16.mxu0 0
    %2622 = vmatpush1.bf16.msra.mxu0 0
    %2623 = vmatprep.subr.bf16.mxu0 0
    %2624 = vmatpush1.bf16.msra.mxu0 0
    %2625 = vmatprep.subr.bf16.mxu0 0
    %2626 = vmatpush1.bf16.msra.mxu0 0
    %2627 = vmatprep.mubr.bf16.mxu0 0
    %2628 = vmatmul.mubr.bf16.gmra.mrb[0].mxu0 %v2593
    %v2629 = vpop.f32.mrb[0].mxu0
    %v2630 = vadd.f32 %v126, %v2629
    %v2631 = vpop.f32.mrb[0].mxu0
    %v2632 = vpop.f32.mrb[0].mxu0
    %v2633 = vpop.f32.mrb[0].mxu0
    %2634 = vdwg.mxu0
    %v2635 = vmax.f32 %v2630, 0.0
    %v2636 = vpack.c.bf16 %v2635, %v2635
    %v2638 = vsel %vm290, %v2636, 0
    %2640 = vmatprep.subr.bf16.mxu0 0
    %2641 = vmatpush1.bf16.msra.mxu0 %v81
    %2642 = vmatprep.subr.bf16.mxu0 0
    %2643 = vmatpush1.bf16.msra.mxu0 %v82
    %2644 = vmatprep.subr.bf16.mxu0 0
    %2645 = vmatpush1.bf16.msra.mxu0 0
    %2646 = vmatprep.subr.bf16.mxu0 0
    %2647 = vmatpush1.bf16.msra.mxu0 0
    %2648 = vmatprep.subr.bf16.mxu0 0
    %2649 = vmatpush1.bf16.msra.mxu0 0
    %2650 = vmatprep.subr.bf16.mxu0 0
    %2651 = vmatpush1.bf16.msra.mxu0 0
    %2652 = vmatprep.subr.bf16.mxu0 0
    %2653 = vmatpush1.bf16.msra.mxu0 0
    %2654 = vmatprep.subr.bf16.mxu0 0
    %2655 = vmatpush1.bf16.msra.mxu0 0
    %2656 = vmatprep.subr.bf16.mxu0 0
    %2657 = vmatpush1.bf16.msra.mxu0 0
    %2658 = vmatprep.subr.bf16.mxu0 0
    %2659 = vmatpush1.bf16.msra.mxu0 0
    %2660 = vmatprep.subr.bf16.mxu0 0
    %2661 = vmatpush1.bf16.msra.mxu0 0
    %2662 = vmatprep.subr.bf16.mxu0 0
    %2663 = vmatpush1.bf16.msra.mxu0 0
    %2664 = vmatprep.subr.bf16.mxu0 0
    %2665 = vmatpush1.bf16.msra.mxu0 0
    %2666 = vmatprep.subr.bf16.mxu0 0
    %2667 = vmatpush1.bf16.msra.mxu0 0
    %2668 = vmatprep.subr.bf16.mxu0 0
    %2669 = vmatpush1.bf16.msra.mxu0 0
    %2670 = vmatprep.subr.bf16.mxu0 0
    %2671 = vmatpush1.bf16.msra.mxu0 0
    %2672 = vmatprep.mubr.bf16.mxu0 0
    %2673 = vmatmul.mubr.bf16.gmra.mrb[0].mxu0 %v2638
    %v2674 = vpop.f32.mrb[0].mxu0
    %v2675 = vadd.f32 0.0, %v2674
    %v2676 = vpop.f32.mrb[0].mxu0
    %v2677 = vpop.f32.mrb[0].mxu0
    %v2678 = vpop.f32.mrb[0].mxu0
    %2679 = vdwg.mxu0
    %v2680 = vadd.f32 %v2336, %v2675
    %v2681 = vadd.f32 %v2680, %v131
    %2683 = vrot.lane.b32.xlu0 %v2675, 112
    %v2684 = vpop.permute.xlu0 %2683
    %v2686 = vadd.f32 %v2342, %v2684
    %v2687 = vadd.f32 %v2686, %v136
    %2689 = vrot.lane.b32.xlu0 %v2681, 96
    %v2690 = vpop.permute.xlu0 %2689
    %vm2692 = vcmask 917248
    %2693 = vst.msk [vmem:[%s3] sm:$0xff] %vm2692, %v2690
    %v2694 = vadd.f32 %v2687, %v238
    %v2695 = vmax.f32 %v2694, 0.0
    %v2696 = vpack.c.bf16 %v2695, %v2695
    %v2698 = vsel %vm290, %v2696, 0
    %2700 = vmatprep.subr.bf16.mxu0 0
    %2701 = vmatpush1.bf16.msra.mxu0 %v63
    %2702 = vmatprep.subr.bf16.mxu0 0
    %2703 = vmatpush1.bf16.msra.mxu0 %v64
    %2704 = vmatprep.subr.bf16.mxu0 0
    %2705 = vmatpush1.bf16.msra.mxu0 0
    %2706 = vmatprep.subr.bf16.mxu0 0
    %2707 = vmatpush1.bf16.msra.mxu0 0
    %2708 = vmatprep.subr.bf16.mxu0 0
    %2709 = vmatpush1.bf16.msra.mxu0 0
    %2710 = vmatprep.subr.bf16.mxu0 0
    %2711 = vmatpush1.bf16.msra.mxu0 0
    %2712 = vmatprep.subr.bf16.mxu0 0
    %2713 = vmatpush1.bf16.msra.mxu0 0
    %2714 = vmatprep.subr.bf16.mxu0 0
    %2715 = vmatpush1.bf16.msra.mxu0 0
    %2716 = vmatprep.subr.bf16.mxu0 0
    %2717 = vmatpush1.bf16.msra.mxu0 0
    %2718 = vmatprep.subr.bf16.mxu0 0
    %2719 = vmatpush1.bf16.msra.mxu0 0
    %2720 = vmatprep.subr.bf16.mxu0 0
    %2721 = vmatpush1.bf16.msra.mxu0 0
    %2722 = vmatprep.subr.bf16.mxu0 0
    %2723 = vmatpush1.bf16.msra.mxu0 0
    %2724 = vmatprep.subr.bf16.mxu0 0
    %2725 = vmatpush1.bf16.msra.mxu0 0
    %2726 = vmatprep.subr.bf16.mxu0 0
    %2727 = vmatpush1.bf16.msra.mxu0 0
    %2728 = vmatprep.subr.bf16.mxu0 0
    %2729 = vmatpush1.bf16.msra.mxu0 0
    %2730 = vmatprep.subr.bf16.mxu0 0
    %2731 = vmatpush1.bf16.msra.mxu0 0
    %2732 = vmatprep.mubr.bf16.mxu0 0
    %2733 = vmatmul.mubr.bf16.gmra.mrb[0].mxu0 %v2698
    %v2734 = vpop.f32.mrb[0].mxu0
    %v2735 = vadd.f32 %v116, %v2734
    %v2736 = vpop.f32.mrb[0].mxu0
    %v2737 = vpop.f32.mrb[0].mxu0
    %v2738 = vpop.f32.mrb[0].mxu0
    %2739 = vdwg.mxu0
    %v2740 = vmax.f32 %v2735, 0.0
    %v2741 = vpack.c.bf16 %v2740, %v2740
    %2742 = vrot.lane.b32.xlu0 %v2468, 96
    %v2743 = vpop.permute.xlu0 %2742
    %v2746 = vsel %vm290, %v2741, %v2743
    %v2747 = vsel %vm339, %v2746, 0
    %2749 = vmatprep.subr.bf16.mxu0 0
    %2750 = vmatpush1.bf16.msra.mxu0 %v91
    %2751 = vmatprep.subr.bf16.mxu0 0
    %2752 = vmatpush1.bf16.msra.mxu0 %v92
    %2753 = vmatprep.subr.bf16.mxu0 0
    %2754 = vmatpush1.bf16.msra.mxu0 %v93
    %2755 = vmatprep.subr.bf16.mxu0 0
    %2756 = vmatpush1.bf16.msra.mxu0 %v94
    %2757 = vmatprep.subr.bf16.mxu0 0
    %2758 = vmatpush1.bf16.msra.mxu0 0
    %2759 = vmatprep.subr.bf16.mxu0 0
    %2760 = vmatpush1.bf16.msra.mxu0 0
    %2761 = vmatprep.subr.bf16.mxu0 0
    %2762 = vmatpush1.bf16.msra.mxu0 0
    %2763 = vmatprep.subr.bf16.mxu0 0
    %2764 = vmatpush1.bf16.msra.mxu0 0
    %2765 = vmatprep.subr.bf16.mxu0 0
    %2766 = vmatpush1.bf16.msra.mxu0 0
    %2767 = vmatprep.subr.bf16.mxu0 0
    %2768 = vmatpush1.bf16.msra.mxu0 0
    %2769 = vmatprep.subr.bf16.mxu0 0
    %2770 = vmatpush1.bf16.msra.mxu0 0
    %2771 = vmatprep.subr.bf16.mxu0 0
    %2772 = vmatpush1.bf16.msra.mxu0 0
    %2773 = vmatprep.subr.bf16.mxu0 0
    %2774 = vmatpush1.bf16.msra.mxu0 0
    %2775 = vmatprep.subr.bf16.mxu0 0
    %2776 = vmatpush1.bf16.msra.mxu0 0
    %2777 = vmatprep.subr.bf16.mxu0 0
    %2778 = vmatpush1.bf16.msra.mxu0 0
    %2779 = vmatprep.subr.bf16.mxu0 0
    %2780 = vmatpush1.bf16.msra.mxu0 0
    %2781 = vmatprep.mubr.bf16.mxu0 0
    %2782 = vmatmul.mubr.bf16.gmra.mrb[0].mxu0 %v2747
    %v2783 = vpop.f32.mrb[0].mxu0
    %v2784 = vadd.f32 %v141, %v2783
    %v2785 = vpop.f32.mrb[0].mxu0
    %v2786 = vpop.f32.mrb[0].mxu0
    %v2787 = vpop.f32.mrb[0].mxu0
    %2788 = vdwg.mxu0
    %v2789 = vxor.u32 %v2784, 2147483648
    %v2790 = vmul.f32 %v2789, 1.442695
    %v2791 = vpow.pop %v2790
    %v2792 = vadd.f32 %v2791, 1.0
    %v2793 = vrcp.pop %v2792
    %v2794 = vmul.f32 1.0, %v2793
    %v2795 = vtanh.pop %v2784
    %v2796 = vmul.f32 %v2794, %v2461
    %2798 = vrot.lane.b32.xlu0 %v2795, 32
    %v2799 = vpop.permute.xlu0 %2798
    %v2801 = vmul.f32 %v2794, %v2799
    %2803 = vrot.lane.b32.xlu0 %v2801, 32
    %v2804 = vpop.permute.xlu0 %2803
    %v2806 = vadd.f32 %v2796, %v2804
    %v2807 = vtanh.pop %v2806
    %2809 = vrot.lane.b32.xlu0 %v2807, 32
    %v2810 = vpop.permute.xlu0 %2809
    %v2812 = vmul.f32 %v2794, %v2810
    %v2813 = vpack.c.bf16 %v2812, %v2812
    %2815 = vrot.lane.b32.xlu0 %v2813, 64
    %v2816 = vpop.permute.xlu0 %2815
    %2817 = vrot.lane.b32.xlu0 %v2543, 96
    %v2818 = vpop.permute.xlu0 %2817
    %v2821 = vsel %vm290, %v2816, %v2818
    %v2822 = vsel %vm339, %v2821, 0
    %2824 = vmatprep.subr.bf16.mxu0 0
    %2825 = vmatpush1.bf16.msra.mxu0 %v103
    %2826 = vmatprep.subr.bf16.mxu0 0
    %2827 = vmatpush1.bf16.msra.mxu0 %v104
    %2828 = vmatprep.subr.bf16.mxu0 0
    %2829 = vmatpush1.bf16.msra.mxu0 %v105
    %2830 = vmatprep.subr.bf16.mxu0 0
    %2831 = vmatpush1.bf16.msra.mxu0 %v106
    %2832 = vmatprep.subr.bf16.mxu0 0
    %2833 = vmatpush1.bf16.msra.mxu0 0
    %2834 = vmatprep.subr.bf16.mxu0 0
    %2835 = vmatpush1.bf16.msra.mxu0 0
    %2836 = vmatprep.subr.bf16.mxu0 0
    %2837 = vmatpush1.bf16.msra.mxu0 0
    %2838 = vmatprep.subr.bf16.mxu0 0
    %2839 = vmatpush1.bf16.msra.mxu0 0
    %2840 = vmatprep.subr.bf16.mxu0 0
    %2841 = vmatpush1.bf16.msra.mxu0 0
    %2842 = vmatprep.subr.bf16.mxu0 0
    %2843 = vmatpush1.bf16.msra.mxu0 0
    %2844 = vmatprep.subr.bf16.mxu0 0
    %2845 = vmatpush1.bf16.msra.mxu0 0
    %2846 = vmatprep.subr.bf16.mxu0 0
    %2847 = vmatpush1.bf16.msra.mxu0 0
    %2848 = vmatprep.subr.bf16.mxu0 0
    %2849 = vmatpush1.bf16.msra.mxu0 0
    %2850 = vmatprep.subr.bf16.mxu0 0
    %2851 = vmatpush1.bf16.msra.mxu0 0
    %2852 = vmatprep.subr.bf16.mxu0 0
    %2853 = vmatpush1.bf16.msra.mxu0 0
    %2854 = vmatprep.subr.bf16.mxu0 0
    %2855 = vmatpush1.bf16.msra.mxu0 0
    %2856 = vmatprep.mubr.bf16.mxu0 0
    %2857 = vmatmul.mubr.bf16.gmra.mrb[0].mxu0 %v2822
    %v2858 = vpop.f32.mrb[0].mxu0
    %v2859 = vadd.f32 %v146, %v2858
    %v2860 = vpop.f32.mrb[0].mxu0
    %v2861 = vpop.f32.mrb[0].mxu0
    %v2862 = vpop.f32.mrb[0].mxu0
    %2863 = vdwg.mxu0
    %v2864 = vxor.u32 %v2859, 2147483648
    %v2865 = vmul.f32 %v2864, 1.442695
    %v2866 = vpow.pop %v2865
    %v2867 = vadd.f32 %v2866, 1.0
    %v2868 = vrcp.pop %v2867
    %v2869 = vmul.f32 1.0, %v2868
    %v2870 = vtanh.pop %v2859
    %v2871 = vmul.f32 %v2869, %v2536
    %2873 = vrot.lane.b32.xlu0 %v2870, 32
    %v2874 = vpop.permute.xlu0 %2873
    %v2876 = vmul.f32 %v2869, %v2874
    %2878 = vrot.lane.b32.xlu0 %v2876, 32
    %v2879 = vpop.permute.xlu0 %2878
    %v2881 = vadd.f32 %v2871, %v2879
    %v2882 = vtanh.pop %v2881
    %2884 = vrot.lane.b32.xlu0 %v2882, 32
    %v2885 = vpop.permute.xlu0 %2884
    %v2887 = vmul.f32 %v2869, %v2885
    %v2888 = vpack.c.bf16 %v2887, %v2887
    %2890 = vrot.lane.b32.xlu0 %v2888, 64
    %v2891 = vpop.permute.xlu0 %2890
    %v2893 = vsel %vm290, %v2891, 0
    %2895 = vmatprep.subr.bf16.mxu0 0
    %2896 = vmatpush1.bf16.msra.mxu0 %v69
    %2897 = vmatprep.subr.bf16.mxu0 0
    %2898 = vmatpush1.bf16.msra.mxu0 %v70
    %2899 = vmatprep.subr.bf16.mxu0 0
    %2900 = vmatpush1.bf16.msra.mxu0 0
    %2901 = vmatprep.subr.bf16.mxu0 0
    %2902 = vmatpush1.bf16.msra.mxu0 0
    %2903 = vmatprep.subr.bf16.mxu0 0
    %2904 = vmatpush1.bf16.msra.mxu0 0
    %2905 = vmatprep.subr.bf16.mxu0 0
    %2906 = vmatpush1.bf16.msra.mxu0 0
    %2907 = vmatprep.subr.bf16.mxu0 0
    %2908 = vmatpush1.bf16.msra.mxu0 0
    %2909 = vmatprep.subr.bf16.mxu0 0
    %2910 = vmatpush1.bf16.msra.mxu0 0
    %2911 = vmatprep.subr.bf16.mxu0 0
    %2912 = vmatpush1.bf16.msra.mxu0 0
    %2913 = vmatprep.subr.bf16.mxu0 0
    %2914 = vmatpush1.bf16.msra.mxu0 0
    %2915 = vmatprep.subr.bf16.mxu0 0
    %2916 = vmatpush1.bf16.msra.mxu0 0
    %2917 = vmatprep.subr.bf16.mxu0 0
    %2918 = vmatpush1.bf16.msra.mxu0 0
    %2919 = vmatprep.subr.bf16.mxu0 0
    %2920 = vmatpush1.bf16.msra.mxu0 0
    %2921 = vmatprep.subr.bf16.mxu0 0
    %2922 = vmatpush1.bf16.msra.mxu0 0
    %2923 = vmatprep.subr.bf16.mxu0 0
    %2924 = vmatpush1.bf16.msra.mxu0 0
    %2925 = vmatprep.subr.bf16.mxu0 0
    %2926 = vmatpush1.bf16.msra.mxu0 0
    %2927 = vmatprep.mubr.bf16.mxu0 0
    %2928 = vmatmul.mubr.bf16.gmra.mrb[0].mxu0 %v2893
    %v2929 = vpop.f32.mrb[0].mxu0
    %v2930 = vadd.f32 %v121, %v2929
    %v2931 = vpop.f32.mrb[0].mxu0
    %v2932 = vpop.f32.mrb[0].mxu0
    %v2933 = vpop.f32.mrb[0].mxu0
    %2934 = vdwg.mxu0
    %v2935 = vmax.f32 %v2930, 0.0
    %v2936 = vpack.c.bf16 %v2935, %v2935
    %v2938 = vsel %vm290, %v2936, 0
    %2940 = vmatprep.subr.bf16.mxu0 0
    %2941 = vmatpush1.bf16.msra.mxu0 %v75
    %2942 = vmatprep.subr.bf16.mxu0 0
    %2943 = vmatpush1.bf16.msra.mxu0 %v76
    %2944 = vmatprep.subr.bf16.mxu0 0
    %2945 = vmatpush1.bf16.msra.mxu0 0
    %2946 = vmatprep.subr.bf16.mxu0 0
    %2947 = vmatpush1.bf16.msra.mxu0 0
    %2948 = vmatprep.subr.bf16.mxu0 0
    %2949 = vmatpush1.bf16.msra.mxu0 0
    %2950 = vmatprep.subr.bf16.mxu0 0
    %2951 = vmatpush1.bf16.msra.mxu0 0
    %2952 = vmatprep.subr.bf16.mxu0 0
    %2953 = vmatpush1.bf16.msra.mxu0 0
    %2954 = vmatprep.subr.bf16.mxu0 0
    %2955 = vmatpush1.bf16.msra.mxu0 0
    %2956 = vmatprep.subr.bf16.mxu0 0
    %2957 = vmatpush1.bf16.msra.mxu0 0
    %2958 = vmatprep.subr.bf16.mxu0 0
    %2959 = vmatpush1.bf16.msra.mxu0 0
    %2960 = vmatprep.subr.bf16.mxu0 0
    %2961 = vmatpush1.bf16.msra.mxu0 0
    %2962 = vmatprep.subr.bf16.mxu0 0
    %2963 = vmatpush1.bf16.msra.mxu0 0
    %2964 = vmatprep.subr.bf16.mxu0 0
    %2965 = vmatpush1.bf16.msra.mxu0 0
    %2966 = vmatprep.subr.bf16.mxu0 0
    %2967 = vmatpush1.bf16.msra.mxu0 0
    %2968 = vmatprep.subr.bf16.mxu0 0
    %2969 = vmatpush1.bf16.msra.mxu0 0
    %2970 = vmatprep.subr.bf16.mxu0 0
    %2971 = vmatpush1.bf16.msra.mxu0 0
    %2972 = vmatprep.mubr.bf16.mxu0 0
    %2973 = vmatmul.mubr.bf16.gmra.mrb[0].mxu0 %v2938
    %v2974 = vpop.f32.mrb[0].mxu0
    %v2975 = vadd.f32 %v126, %v2974
    %v2976 = vpop.f32.mrb[0].mxu0
    %v2977 = vpop.f32.mrb[0].mxu0
    %v2978 = vpop.f32.mrb[0].mxu0
    %2979 = vdwg.mxu0
    %v2980 = vmax.f32 %v2975, 0.0
    %v2981 = vpack.c.bf16 %v2980, %v2980
    %v2983 = vsel %vm290, %v2981, 0
    %2985 = vmatprep.subr.bf16.mxu0 0
    %2986 = vmatpush1.bf16.msra.mxu0 %v81
    %2987 = vmatprep.subr.bf16.mxu0 0
    %2988 = vmatpush1.bf16.msra.mxu0 %v82
    %2989 = vmatprep.subr.bf16.mxu0 0
    %2990 = vmatpush1.bf16.msra.mxu0 0
    %2991 = vmatprep.subr.bf16.mxu0 0
    %2992 = vmatpush1.bf16.msra.mxu0 0
    %2993 = vmatprep.subr.bf16.mxu0 0
    %2994 = vmatpush1.bf16.msra.mxu0 0
    %2995 = vmatprep.subr.bf16.mxu0 0
    %2996 = vmatpush1.bf16.msra.mxu0 0
    %2997 = vmatprep.subr.bf16.mxu0 0
    %2998 = vmatpush1.bf16.msra.mxu0 0
    %2999 = vmatprep.subr.bf16.mxu0 0
    %3000 = vmatpush1.bf16.msra.mxu0 0
    %3001 = vmatprep.subr.bf16.mxu0 0
    %3002 = vmatpush1.bf16.msra.mxu0 0
    %3003 = vmatprep.subr.bf16.mxu0 0
    %3004 = vmatpush1.bf16.msra.mxu0 0
    %3005 = vmatprep.subr.bf16.mxu0 0
    %3006 = vmatpush1.bf16.msra.mxu0 0
    %3007 = vmatprep.subr.bf16.mxu0 0
    %3008 = vmatpush1.bf16.msra.mxu0 0
    %3009 = vmatprep.subr.bf16.mxu0 0
    %3010 = vmatpush1.bf16.msra.mxu0 0
    %3011 = vmatprep.subr.bf16.mxu0 0
    %3012 = vmatpush1.bf16.msra.mxu0 0
    %3013 = vmatprep.subr.bf16.mxu0 0
    %3014 = vmatpush1.bf16.msra.mxu0 0
    %3015 = vmatprep.subr.bf16.mxu0 0
    %3016 = vmatpush1.bf16.msra.mxu0 0
    %3017 = vmatprep.mubr.bf16.mxu0 0
    %3018 = vmatmul.mubr.bf16.gmra.mrb[0].mxu0 %v2983
    %v3019 = vpop.f32.mrb[0].mxu0
    %v3020 = vadd.f32 0.0, %v3019
    %v3021 = vpop.f32.mrb[0].mxu0
    %v3022 = vpop.f32.mrb[0].mxu0
    %v3023 = vpop.f32.mrb[0].mxu0
    %3024 = vdwg.mxu0
    %v3025 = vadd.f32 %v2681, %v3020
    %v3026 = vadd.f32 %v3025, %v131
    %3028 = vrot.lane.b32.xlu0 %v3026, 112
    %v3029 = vpop.permute.xlu0 %3028
    %vm3031 = vcmask 1048448
    %3032 = vst.msk [vmem:[%s3] sm:$0xff] %vm3031, %v3029
    // Predicated region
    $region26: #{seqnn_forward.1} parent=1 // pred_check
      _
    $region27: #{seqnn_forward.1} parent=1 // pred_check_branch
      %3034 = sbr.rel (0) target = $region29
    $region28: #{seqnn_forward.1} parent=1 // pred_region
      _
    $region29: #{seqnn_forward.1} parent=1 // pred_fallthru
      _
    // Predicated region
    $region30: #{seqnn_forward.1} parent=1 // pred_check
      _
    $region31: #{seqnn_forward.1} parent=1 // pred_check_branch
      %3036 = sbr.rel (0) target = $region33
    $region32: #{seqnn_forward.1} parent=1 // pred_region
      _
    $region33: #{seqnn_forward.1} parent=1 // pred_fallthru
      _
    %3037 = vsyncpa [#allocation3], 1
    %3038 = vsyncpa [#allocation5], 1

</llo_original>
